<compile_context>
chip_gen: v5e
topology: v5e:2x2
jax: 0.10.0
libtpu: 0.0.40
codegen_flags: <defaults>
</compile_context>

<pallas_src>
import jax
import jax.numpy as jnp
from jax import lax
from jax.experimental import pallas as pl
from jax.experimental.pallas import tpu as pltpu

# ----------------------------- config (small) ------------------------------
N_MELS = 8            # n_mels
ENC_DIM = 32          # encoder_embedding_dim
DEC_RNN_DIM = 32      # decoder_rnn_dim
PRENET_DIM = 16       # prenet_dim
ATT_RNN_DIM = 32      # attention_rnn_dim
ATT_DIM = 16          # attention_dim
ATT_N_FILTERS = 4     # attention_location_n_filters
ATT_KERNEL = 3        # attention_location_kernel_size (odd)

B = 2
T_ENC = 8
T_OUT = 6

OUT_LANES = 128       # packed per-step output width
ALIGN_LANE_OFF = 16   # lanes [16, 16+Tenc) carry the attention weights


def _pack_slab(named_arrays):
    """Pad each 2-D array to 128 lanes and an 8-aligned row count, then stack
    along rows into one f32 slab.  Returns (slab, {name: (row_off, r, c)})."""
    layout = {}
    chunks = []
    off = 0
    for name, a in named_arrays:
        a = jnp.asarray(a, jnp.float32)
        r, c = a.shape
        rp = (-r) % 8
        chunks.append(jnp.pad(a, ((0, rp), (0, 128 - c))))
        layout[name] = (off, r, c)
        off += r + rp
    return jnp.concatenate(chunks, axis=0), layout


def make_decoder_kernel(w_layout, d_layout, Bsz, R, D, T_steps):
    f32 = jnp.float32

    def kernel(data_ref, wslab_ref, out_ref, gA_scr):
        # Ref-slice helpers: evaluated at use sites INSIDE the loop so the
        # loads are scheduled where needed (no hoisting -> no vreg spills).
        def W(name, full=False):
            off, r, c = w_layout[name]
            if full:
                return wslab_ref[pl.ds(off, r), :]
            return wslab_ref[pl.ds(off, r), pl.ds(0, c)]

        def Dat(name):
            off, r, c = d_layout[name]
            return data_ref[pl.ds(off, r), pl.ds(0, c)]

        # -------------------- batched, pre-loop work --------------------
        # Prenet over all T_out*B consumed frames (dropout p=0.5, training).
        x = Dat('dec_in')                                             # (T*B, M)
        h1 = jnp.maximum(jnp.dot(x, W('w1'), preferred_element_type=f32), 0.0)
        h1 = h1 * Dat('dm1')
        h2 = jnp.maximum(jnp.dot(h1, W('w2'), preferred_element_type=f32), 0.0)
        h2 = h2 * Dat('dm2')
        # Hoisted prenet-side contribution to attention-LSTM gates (+ bias),
        # distributed once into a tile-aligned (T, B, 4R) scratch.
        gA2d = jnp.dot(h2, W('wih_a_pre'), preferred_element_type=f32) + W('b_a')
        for t in range(T_steps):
            gA_scr[t] = gA2d[t * Bsz:(t + 1) * Bsz, :]

        def lstm(gates, c, H):
            sg = jax.nn.sigmoid(gates)      # one full-width sigmoid
            th = jnp.tanh(gates)            # one full-width tanh
            i = sg[:, 0:H]
            f = sg[:, H:2 * H]
            o = sg[:, 3 * H:4 * H]
            g = th[:, 2 * H:3 * H]
            c_new = f * c + i * g
            return o * jnp.tanh(c_new), c_new

        def step(t, carry):
            att_h, att_c, dec_h, dec_c, att_w, att_w_cum, att_ctx = carry

            # ---- attention LSTM (split weights, no lane concat) ----
            gates_a = (gA_scr[t]
                       + jnp.dot(att_ctx, W('wih_a_ctx'), preferred_element_type=f32)
                       + jnp.dot(att_h, W('whh_a'), preferred_element_type=f32))
            att_h, att_c = lstm(gates_a, att_c, R)
            # p_attention_dropout == 0.0 -> identity

            # ---- location-sensitive attention (all matmuls, stays 2-D) ----
            e_flat = jnp.tanh(
                jnp.dot(att_h, W('wq_tiled'), preferred_element_type=f32)
                + jnp.dot(att_w, W('band_w'), preferred_element_type=f32)
                + jnp.dot(att_w_cum, W('band_cum'), preferred_element_type=f32)
                + Dat('pm_flat'))                                     # (B, Tenc*A)
            energies = jnp.dot(e_flat, W('v_exp'), preferred_element_type=f32)
            energies = energies + Dat('neg_mask')       # additive masked_fill

            mmax = jnp.max(energies, axis=1, keepdims=True)
            pexp = jnp.exp(energies - mmax)
            denom = jnp.sum(pexp, axis=1, keepdims=True)
            att_w_new = pexp * pl.reciprocal(denom, approx=True)      # softmax

            # attention context: lane-duplicate + block mask + ONE matmul
            aw_bd = jnp.concatenate([att_w_new] * Bsz, axis=1) * W('blockmask')
            ctx = jnp.dot(aw_bd, Dat('mem2d'), preferred_element_type=f32)
            att_w_cum_new = att_w_cum + att_w_new

            # ---- decoder LSTM (split weights) ----
            gates_d = (jnp.dot(att_h, W('wih_d_h'), preferred_element_type=f32)
                       + jnp.dot(ctx, W('wih_d_ctx'), preferred_element_type=f32)
                       + jnp.dot(dec_h, W('whh_d'), preferred_element_type=f32)
                       + W('b_d'))
            dec_h, dec_c = lstm(gates_d, dec_c, D)
            # p_decoder_dropout == 0.0 -> identity

            # ---- fused projection + gate, packed with alignments, 1 store --
            out128 = (jnp.dot(dec_h, W('wpg_h', full=True), preferred_element_type=f32)
                      + jnp.dot(ctx, W('wpg_c', full=True), preferred_element_type=f32)
                      + W('b_pg', full=True))                          # (B, 128)
            packed = out128 + jnp.dot(att_w_new, W('place_att', full=True),
                                      preferred_element_type=f32)
            out_ref[t] = packed
            return (att_h, att_c, dec_h, dec_c, att_w_new, att_w_cum_new, ctx)

        Tenc = d_layout['neg_mask'][2]
        E = d_layout['mem2d'][2]
        init = (jnp.zeros((Bsz, R), f32), jnp.zeros((Bsz, R), f32),
                jnp.zeros((Bsz, D), f32), jnp.zeros((Bsz, D), f32),
                jnp.zeros((Bsz, Tenc), f32), jnp.zeros((Bsz, Tenc), f32),
                jnp.zeros((Bsz, E), f32))
        lax.fori_loop(0, T_steps, step, init, unroll=True)

    return kernel


def init_params(key):
    P, M, E = PRENET_DIM, N_MELS, ENC_DIM
    R, D, A = ATT_RNN_DIM, DEC_RNN_DIM, ATT_DIM
    Fn, K = ATT_N_FILTERS, ATT_KERNEL
    ks = jax.random.split(key, 16)

    def nrm(k, shape, scale=0.1):
        return jax.random.normal(k, shape, jnp.float32) * scale

    params = {}
    # Prenet (bias=False), stored transposed so kernel does x @ W
    params['w1T'] = nrm(ks[0], (M, P))
    params['w2T'] = nrm(ks[1], (P, P))
    # attention_rnn LSTMCell (gate order i,f,g,o); biases b_ih + b_hh folded
    params['wih_aT'] = nrm(ks[2], (P + E, 4 * R))
    params['whh_aT'] = nrm(ks[3], (R, 4 * R))
    params['b_a'] = nrm(ks[4], (1, 4 * R))
    # Attention
    params['wqT'] = nrm(ks[5], (R, A))
    params['wmT'] = nrm(ks[6], (E, A))
    params['v'] = nrm(ks[7], (1, A))
    params['wconv'] = nrm(ks[8], (Fn, 2, K))     # Conv1d weight (out, in=2, K)
    params['wldT'] = nrm(ks[9], (Fn, A))
    # decoder_rnn LSTMCell
    params['wih_dT'] = nrm(ks[10], (R + E, 4 * D))
    params['whh_dT'] = nrm(ks[11], (D, 4 * D))
    params['b_d'] = nrm(ks[12], (1, 4 * D))
    # linear_projection and gate_layer
    params['wprojT'] = nrm(ks[13], (D + E, M))
    params['b_proj'] = nrm(ks[14], (1, M))
    params['wgateT'] = nrm(ks[15], (D + E, 1))
    params['b_gate'] = jnp.zeros((1, 1), jnp.float32)
    return params


def run_decoder(memory, decoder_inputs, memory_lengths, params, dropout_key):
    Bsz, Tenc, E = memory.shape
    M = decoder_inputs.shape[1]
    T_out = decoder_inputs.shape[2]
    P = params['w1T'].shape[1]
    R = params['whh_aT'].shape[0]
    D = params['whh_dT'].shape[0]
    A = params['wqT'].shape[1]
    Fn, _, K = params['wconv'].shape
    pad = (K - 1) // 2
    assert M + 1 <= ALIGN_LANE_OFF and ALIGN_LANE_OFF + Tenc <= OUT_LANES

    # parse_decoder_inputs + prepend zero "go" frame.  The teacher-forced loop
    # only consumes frames 0..T_out-1, so the last mel frame is dropped.
    dec_in = jnp.transpose(decoder_inputs, (2, 0, 1))            # (T_out, B, M)
    dec_in = jnp.concatenate(
        [jnp.zeros((1, Bsz, M), dec_in.dtype), dec_in[:T_out - 1]], axis=0)
    dec_in_flat = dec_in.reshape(T_out * Bsz, M)

    # Prenet dropout masks (p=0.5, training=True always), scaled by 1/(1-p)
    k1, k2 = jax.random.split(dropout_key)
    dm1 = jax.random.bernoulli(
        k1, 0.5, (T_out * Bsz, P)).astype(jnp.float32) * 2.0
    dm2 = jax.random.bernoulli(
        k2, 0.5, (T_out * Bsz, P)).astype(jnp.float32) * 2.0

    # get_mask_from_lengths -> additive -1e30 bias (energies are tanh-bounded)
    ids = jnp.arange(Tenc, dtype=memory_lengths.dtype)
    neg_mask = jnp.where(ids[None, :] >= memory_lengths[:, None],
                         -1e30, 0.0).astype(jnp.float32)

    mem2d = memory.reshape(Bsz * Tenc, E)                        # (B*Tenc, E)
    # processed memory (memory_layer) computed once outside the kernel
    pm_flat = jnp.einsum('bte,ea->bta', memory,
                         params['wmT']).reshape(Bsz, Tenc * A)   # (B, Tenc*A)

    # ---------------- derived, layout-friendly weights ----------------
    wih_a_pre = params['wih_aT'][:P]             # prenet part of attn-LSTM W_ih
    wih_a_ctx = params['wih_aT'][P:]             # context part
    wih_d_h = params['wih_dT'][:R]               # att_h part of dec-LSTM W_ih
    wih_d_ctx = params['wih_dT'][R:]             # context part
    # query projection pre-tiled to (R, Tenc*A): col t*A+a == wqT[:, a]
    wq_tiled = jnp.tile(params['wqT'], (1, Tenc))
    # v expanded so energy reduction is a matmul: (Tenc*A, Tenc)
    v_exp = jnp.kron(jnp.eye(Tenc, dtype=jnp.float32),
                     params['v'].reshape(A, 1))
    # location conv (channels [att_w, att_w_cum]) folded with location_dense
    ker = jnp.einsum('fck,fa->cka', params['wconv'], params['wldT'])   # (2,K,A)
    ti = jnp.arange(Tenc)[:, None]     # input time
    to = jnp.arange(Tenc)[None, :]     # output time
    kk = ti - to + pad
    valid = (kk >= 0) & (kk < K)
    kk_c = jnp.clip(kk, 0, K - 1)
    band = jnp.where(valid[None, :, :, None], ker[:, kk_c, :], 0.0)    # (2,T,T,A)
    band_w = band[0].reshape(Tenc, Tenc * A)
    band_cum = band[1].reshape(Tenc, Tenc * A)
    # block-diagonal 0/1 mask used to build the context matmul LHS
    blockmask = jnp.kron(jnp.eye(Bsz, dtype=jnp.float32),
                         jnp.ones((1, Tenc), jnp.float32))             # (B, B*Tenc)
    # fused projection + gate head (kept 128-lane padded in the slab)
    wpg = jnp.concatenate([params['wprojT'], params['wgateT']], axis=1)   # (D+E, M+1)
    b_pg = jnp.concatenate([params['b_proj'], params['b_gate']], axis=1)  # (1, M+1)
    # placement matrix: puts attention weights at lanes [16, 16+Tenc)
    place_att = jnp.zeros((Tenc, OUT_LANES), jnp.float32)
    place_att = place_att.at[jnp.arange(Tenc),
                             ALIGN_LANE_OFF + jnp.arange(Tenc)].set(1.0)

    wslab, w_layout = _pack_slab([
        ('w1', params['w1T']), ('w2', params['w2T']),
        ('wih_a_pre', wih_a_pre), ('wih_a_ctx', wih_a_ctx),
        ('whh_a', params['whh_aT']), ('b_a', params['b_a']),
        ('wq_tiled', wq_tiled), ('band_w', band_w), ('band_cum', band_cum),
        ('v_exp', v_exp), ('blockmask', blockmask),
        ('wih_d_h', wih_d_h), ('wih_d_ctx', wih_d_ctx),
        ('whh_d', params['whh_dT']), ('b_d', params['b_d']),
        ('wpg_h', wpg[:D]), ('wpg_c', wpg[D:]), ('b_pg', b_pg),
        ('place_att', place_att),
    ])
    dslab, d_layout = _pack_slab([
        ('dec_in', dec_in_flat), ('dm1', dm1), ('dm2', dm2),
        ('neg_mask', neg_mask), ('pm_flat', pm_flat), ('mem2d', mem2d),
    ])

    kernel = make_decoder_kernel(w_layout, d_layout, Bsz, R, D, T_out)

    vmem = pl.BlockSpec(memory_space=pltpu.MemorySpace.VMEM)
    packed = pl.pallas_call(
        kernel,
        out_shape=jax.ShapeDtypeStruct((T_out, Bsz, OUT_LANES), jnp.float32),
        in_specs=[vmem, vmem],
        out_specs=vmem,
        scratch_shapes=[pltpu.VMEM((T_out, Bsz, 4 * R), jnp.float32)],
    )(dslab, wslab)

    # parse_decoder_outputs (split the packed lane-dense output)
    mel_outputs = jnp.transpose(packed[:, :, :M], (1, 2, 0))       # (B, n_mels, T_out)
    gate_outputs = jnp.transpose(packed[:, :, M], (1, 0))          # (B, T_out)
    alignments = jnp.transpose(
        packed[:, :, ALIGN_LANE_OFF:ALIGN_LANE_OFF + Tenc], (1, 0, 2))  # (B, T_out, Tenc)
    return mel_outputs, gate_outputs, alignments


if __name__ == "__main__":
    key = jax.random.PRNGKey(0)
    kp, km, kd, kdrop = jax.random.split(key, 4)
    params = init_params(kp)

    memory = jax.random.normal(km, (B, T_ENC, ENC_DIM), jnp.float32)
    decoder_inputs = jax.random.normal(kd, (B, N_MELS, T_OUT), jnp.float32)
    memory_lengths = jnp.array([T_ENC, T_ENC - 3], dtype=jnp.int32)

    run = jax.jit(run_decoder)
    mel, gate, align = run(memory, decoder_inputs, memory_lengths, params, kdrop)
    jax.block_until_ready((mel, gate, align))

    assert mel.shape == (B, N_MELS, T_OUT)
    assert gate.shape == (B, T_OUT)
    assert align.shape == (B, T_OUT, T_ENC)
    # attention weights are a softmax over encoder time -> must sum to ~1
    # (tolerance loosened slightly for the approx-reciprocal normalization)
    assert bool(jnp.all(jnp.abs(jnp.sum(align, axis=-1) - 1.0) < 5e-3))
    # padded encoder positions must receive ~zero attention
    assert bool(jnp.all(align[1, :, T_ENC - 3:] < 1e-6))
    # TODO(synk): Decoder.inference() (data-dependent early stop on gate
    # threshold) is not implemented; only the teacher-forced forward() is.
    print("KERNEL_OK")
</pallas_src>

<mosaic_0001>
module attributes {stable_mosaic.version = 11 : i64} {
  func.func @kernel(%arg0: memref<80x128xf32, #tpu.memory_space<vmem>>, %arg1: memref<480x128xf32, #tpu.memory_space<vmem>>, %arg2: memref<6x2x128xf32, #tpu.memory_space<vmem>>, %arg3: memref<6x2x128xf32, #tpu.memory_space<vmem>>) attributes {dimension_semantics = [], scalar_prefetch = 0 : i64, scratch_operands = 1 : i64, tpu.core_type = #tpu.core_type<tc>} {
    %c0 = arith.constant 0 : index
    %c0_0 = arith.constant 0 : index
    %0 = vector.load %arg0[%c0, %c0_0] : memref<80x128xf32, #tpu.memory_space<vmem>>, vector<12x8xf32>
    %c0_1 = arith.constant 0 : index
    %c0_2 = arith.constant 0 : index
    %1 = vector.load %arg1[%c0_1, %c0_2] : memref<480x128xf32, #tpu.memory_space<vmem>>, vector<8x16xf32>
    %cst = arith.constant dense<0.000000e+00> : vector<12x16xf32>
    %2 = tpu.matmul %0, %1, %cst {dimension_numbers = #tpu.dot_dimension_numbers<[1], [0], [0], [1], [0, 0, 1, 1], [], []>} : vector<12x8xf32>, vector<8x16xf32>, vector<12x16xf32> -> vector<12x16xf32>
    %cst_3 = arith.constant 0.000000e+00 : f32
    %3 = vector.broadcast %cst_3 : f32 to vector<12x16xf32>
    %4 = arith.maximumf %2, %3 : vector<12x16xf32>
    %c16 = arith.constant 16 : index
    %c0_4 = arith.constant 0 : index
    %5 = vector.load %arg0[%c16, %c0_4] : memref<80x128xf32, #tpu.memory_space<vmem>>, vector<12x16xf32>
    %6 = arith.mulf %4, %5 : vector<12x16xf32>
    %c8 = arith.constant 8 : index
    %c0_5 = arith.constant 0 : index
    %7 = vector.load %arg1[%c8, %c0_5] : memref<480x128xf32, #tpu.memory_space<vmem>>, vector<16x16xf32>
    %cst_6 = arith.constant dense<0.000000e+00> : vector<12x16xf32>
    %8 = tpu.matmul %6, %7, %cst_6 {dimension_numbers = #tpu.dot_dimension_numbers<[1], [0], [0], [1], [0, 0, 1, 1], [], []>} : vector<12x16xf32>, vector<16x16xf32>, vector<12x16xf32> -> vector<12x16xf32>
    %cst_7 = arith.constant 0.000000e+00 : f32
    %9 = vector.broadcast %cst_7 : f32 to vector<12x16xf32>
    %10 = arith.maximumf %8, %9 : vector<12x16xf32>
    %c32 = arith.constant 32 : index
    %c0_8 = arith.constant 0 : index
    %11 = vector.load %arg0[%c32, %c0_8] : memref<80x128xf32, #tpu.memory_space<vmem>>, vector<12x16xf32>
    %12 = arith.mulf %10, %11 : vector<12x16xf32>
    %c24 = arith.constant 24 : index
    %c0_9 = arith.constant 0 : index
    %13 = vector.load %arg1[%c24, %c0_9] : memref<480x128xf32, #tpu.memory_space<vmem>>, vector<16x128xf32>
    %cst_10 = arith.constant dense<0.000000e+00> : vector<12x128xf32>
    %14 = tpu.matmul %12, %13, %cst_10 {dimension_numbers = #tpu.dot_dimension_numbers<[1], [0], [0], [1], [0, 0, 1, 1], [], []>} : vector<12x16xf32>, vector<16x128xf32>, vector<12x128xf32> -> vector<12x128xf32>
    %c104 = arith.constant 104 : index
    %c0_11 = arith.constant 0 : index
    %15 = vector.load %arg1[%c104, %c0_11] : memref<480x128xf32, #tpu.memory_space<vmem>>, vector<1x128xf32>
    %16 = vector.broadcast %15 : vector<1x128xf32> to vector<12x128xf32>
    %17 = arith.addf %14, %16 : vector<12x128xf32>
    %18 = vector.extract_strided_slice %17 {offsets = [0, 0], sizes = [2, 128], strides = [1, 1]} : vector<12x128xf32> to vector<2x128xf32>
    %c0_12 = arith.constant 0 : index
    %c0_13 = arith.constant 0 : index
    %c0_14 = arith.constant 0 : index
    %19 = vector.load %arg3[%c0_12, %c0_13, %c0_14] : memref<6x2x128xf32, #tpu.memory_space<vmem>>, vector<1x2x128xf32>
    %20 = vector.shape_cast %19 : vector<1x2x128xf32> to vector<2x128xf32>
    %21 = vector.shape_cast %18 : vector<2x128xf32> to vector<1x2x128xf32>
    tpu.vector_store %arg3[%c0_12, %c0_13, %c0_14], %21 {strides = array<i32>} : memref<6x2x128xf32, #tpu.memory_space<vmem>>, vector<1x2x128xf32>,
    %22 = vector.extract_strided_slice %17 {offsets = [2, 0], sizes = [2, 128], strides = [1, 1]} : vector<12x128xf32> to vector<2x128xf32>
    %c1 = arith.constant 1 : index
    %c0_15 = arith.constant 0 : index
    %c0_16 = arith.constant 0 : index
    %23 = vector.load %arg3[%c1, %c0_15, %c0_16] : memref<6x2x128xf32, #tpu.memory_space<vmem>>, vector<1x2x128xf32>
    %24 = vector.shape_cast %23 : vector<1x2x128xf32> to vector<2x128xf32>
    %25 = vector.shape_cast %22 : vector<2x128xf32> to vector<1x2x128xf32>
    tpu.vector_store %arg3[%c1, %c0_15, %c0_16], %25 {strides = array<i32>} : memref<6x2x128xf32, #tpu.memory_space<vmem>>, vector<1x2x128xf32>,
    %26 = vector.extract_strided_slice %17 {offsets = [4, 0], sizes = [2, 128], strides = [1, 1]} : vector<12x128xf32> to vector<2x128xf32>
    %c2 = arith.constant 2 : index
    %c0_17 = arith.constant 0 : index
    %c0_18 = arith.constant 0 : index
    %27 = vector.load %arg3[%c2, %c0_17, %c0_18] : memref<6x2x128xf32, #tpu.memory_space<vmem>>, vector<1x2x128xf32>
    %28 = vector.shape_cast %27 : vector<1x2x128xf32> to vector<2x128xf32>
    %29 = vector.shape_cast %26 : vector<2x128xf32> to vector<1x2x128xf32>
    tpu.vector_store %arg3[%c2, %c0_17, %c0_18], %29 {strides = array<i32>} : memref<6x2x128xf32, #tpu.memory_space<vmem>>, vector<1x2x128xf32>,
    %30 = vector.extract_strided_slice %17 {offsets = [6, 0], sizes = [2, 128], strides = [1, 1]} : vector<12x128xf32> to vector<2x128xf32>
    %c3 = arith.constant 3 : index
    %c0_19 = arith.constant 0 : index
    %c0_20 = arith.constant 0 : index
    %31 = vector.load %arg3[%c3, %c0_19, %c0_20] : memref<6x2x128xf32, #tpu.memory_space<vmem>>, vector<1x2x128xf32>
    %32 = vector.shape_cast %31 : vector<1x2x128xf32> to vector<2x128xf32>
    %33 = vector.shape_cast %30 : vector<2x128xf32> to vector<1x2x128xf32>
    tpu.vector_store %arg3[%c3, %c0_19, %c0_20], %33 {strides = array<i32>} : memref<6x2x128xf32, #tpu.memory_space<vmem>>, vector<1x2x128xf32>,
    %34 = vector.extract_strided_slice %17 {offsets = [8, 0], sizes = [2, 128], strides = [1, 1]} : vector<12x128xf32> to vector<2x128xf32>
    %c4 = arith.constant 4 : index
    %c0_21 = arith.constant 0 : index
    %c0_22 = arith.constant 0 : index
    %35 = vector.load %arg3[%c4, %c0_21, %c0_22] : memref<6x2x128xf32, #tpu.memory_space<vmem>>, vector<1x2x128xf32>
    %36 = vector.shape_cast %35 : vector<1x2x128xf32> to vector<2x128xf32>
    %37 = vector.shape_cast %34 : vector<2x128xf32> to vector<1x2x128xf32>
    tpu.vector_store %arg3[%c4, %c0_21, %c0_22], %37 {strides = array<i32>} : memref<6x2x128xf32, #tpu.memory_space<vmem>>, vector<1x2x128xf32>,
    %38 = vector.extract_strided_slice %17 {offsets = [10, 0], sizes = [2, 128], strides = [1, 1]} : vector<12x128xf32> to vector<2x128xf32>
    %c5 = arith.constant 5 : index
    %c0_23 = arith.constant 0 : index
    %c0_24 = arith.constant 0 : index
    %39 = vector.load %arg3[%c5, %c0_23, %c0_24] : memref<6x2x128xf32, #tpu.memory_space<vmem>>, vector<1x2x128xf32>
    %40 = vector.shape_cast %39 : vector<1x2x128xf32> to vector<2x128xf32>
    %41 = vector.shape_cast %38 : vector<2x128xf32> to vector<1x2x128xf32>
    tpu.vector_store %arg3[%c5, %c0_23, %c0_24], %41 {strides = array<i32>} : memref<6x2x128xf32, #tpu.memory_space<vmem>>, vector<1x2x128xf32>,
    %cst_25 = arith.constant 0.000000e+00 : f32
    %42 = vector.broadcast %cst_25 : f32 to vector<2x32xf32>
    %cst_26 = arith.constant 0.000000e+00 : f32
    %43 = vector.broadcast %cst_26 : f32 to vector<2x32xf32>
    %cst_27 = arith.constant 0.000000e+00 : f32
    %44 = vector.broadcast %cst_27 : f32 to vector<2x32xf32>
    %cst_28 = arith.constant 0.000000e+00 : f32
    %45 = vector.broadcast %cst_28 : f32 to vector<2x32xf32>
    %cst_29 = arith.constant 0.000000e+00 : f32
    %46 = vector.broadcast %cst_29 : f32 to vector<2x8xf32>
    %cst_30 = arith.constant 0.000000e+00 : f32
    %47 = vector.broadcast %cst_30 : f32 to vector<2x8xf32>
    %cst_31 = arith.constant 0.000000e+00 : f32
    %48 = vector.broadcast %cst_31 : f32 to vector<2x32xf32>
    %c0_i32 = arith.constant 0 : i32
    %49 = arith.index_cast %c0_i32 : i32 to index
    %c0_32 = arith.constant 0 : index
    %c0_33 = arith.constant 0 : index
    %50 = vector.load %arg3[%49, %c0_32, %c0_33] : memref<6x2x128xf32, #tpu.memory_space<vmem>>, vector<1x2x128xf32>
    %51 = vector.shape_cast %50 : vector<1x2x128xf32> to vector<2x128xf32>
    %c40 = arith.constant 40 : index
    %c0_34 = arith.constant 0 : index
    %52 = vector.load %arg1[%c40, %c0_34] : memref<480x128xf32, #tpu.memory_space<vmem>>, vector<32x128xf32>
    %cst_35 = arith.constant dense<0.000000e+00> : vector<2x128xf32>
    %53 = tpu.matmul %48, %52, %cst_35 {dimension_numbers = #tpu.dot_dimension_numbers<[1], [0], [0], [1], [0, 0, 1, 1], [], []>} : vector<2x32xf32>, vector<32x128xf32>, vector<2x128xf32> -> vector<2x128xf32>
    %54 = arith.addf %51, %53 : vector<2x128xf32>
    %c72 = arith.constant 72 : index
    %c0_36 = arith.constant 0 : index
    %55 = vector.load %arg1[%c72, %c0_36] : memref<480x128xf32, #tpu.memory_space<vmem>>, vector<32x128xf32>
    %cst_37 = arith.constant dense<0.000000e+00> : vector<2x128xf32>
    %56 = tpu.matmul %42, %55, %cst_37 {dimension_numbers = #tpu.dot_dimension_numbers<[1], [0], [0], [1], [0, 0, 1, 1], [], []>} : vector<2x32xf32>, vector<32x128xf32>, vector<2x128xf32> -> vector<2x128xf32>
    %57 = arith.addf %54, %56 : vector<2x128xf32>
    %58 = arith.negf %57 : vector<2x128xf32>
    %59 = math.exp %58 : vector<2x128xf32>
    %cst_38 = arith.constant 1.000000e+00 : f32
    %60 = vector.broadcast %cst_38 : f32 to vector<2x128xf32>
    %61 = arith.addf %60, %59 : vector<2x128xf32>
    %62 = arith.divf %60, %61 : vector<2x128xf32>
    %63 = math.tanh %57 : vector<2x128xf32>
    %64 = vector.extract_strided_slice %62 {offsets = [0, 0], sizes = [2, 32], strides = [1, 1]} : vector<2x128xf32> to vector<2x32xf32>
    %65 = vector.extract_strided_slice %62 {offsets = [0, 32], sizes = [2, 32], strides = [1, 1]} : vector<2x128xf32> to vector<2x32xf32>
    %66 = vector.extract_strided_slice %62 {offsets = [0, 96], sizes = [2, 32], strides = [1, 1]} : vector<2x128xf32> to vector<2x32xf32>
    %67 = vector.extract_strided_slice %63 {offsets = [0, 64], sizes = [2, 32], strides = [1, 1]} : vector<2x128xf32> to vector<2x32xf32>
    %68 = arith.mulf %65, %43 : vector<2x32xf32>
    %69 = arith.mulf %64, %67 : vector<2x32xf32>
    %70 = arith.addf %68, %69 : vector<2x32xf32>
    %71 = math.tanh %70 : vector<2x32xf32>
    %72 = arith.mulf %66, %71 : vector<2x32xf32>
    %c112 = arith.constant 112 : index
    %c0_39 = arith.constant 0 : index
    %73 = vector.load %arg1[%c112, %c0_39] : memref<480x128xf32, #tpu.memory_space<vmem>>, vector<32x128xf32>
    %cst_40 = arith.constant dense<0.000000e+00> : vector<2x128xf32>
    %74 = tpu.matmul %72, %73, %cst_40 {dimension_numbers = #tpu.dot_dimension_numbers<[1], [0], [0], [1], [0, 0, 1, 1], [], []>} : vector<2x32xf32>, vector<32x128xf32>, vector<2x128xf32> -> vector<2x128xf32>
    %c144 = arith.constant 144 : index
    %c0_41 = arith.constant 0 : index
    %75 = vector.load %arg1[%c144, %c0_41] : memref<480x128xf32, #tpu.memory_space<vmem>>, vector<8x128xf32>
    %cst_42 = arith.constant dense<0.000000e+00> : vector<2x128xf32>
    %76 = tpu.matmul %46, %75, %cst_42 {dimension_numbers = #tpu.dot_dimension_numbers<[1], [0], [0], [1], [0, 0, 1, 1], [], []>} : vector<2x8xf32>, vector<8x128xf32>, vector<2x128xf32> -> vector<2x128xf32>
    %77 = arith.addf %74, %76 : vector<2x128xf32>
    %c152 = arith.constant 152 : index
    %c0_43 = arith.constant 0 : index
    %78 = vector.load %arg1[%c152, %c0_43] : memref<480x128xf32, #tpu.memory_space<vmem>>, vector<8x128xf32>
    %cst_44 = arith.constant dense<0.000000e+00> : vector<2x128xf32>
    %79 = tpu.matmul %47, %78, %cst_44 {dimension_numbers = #tpu.dot_dimension_numbers<[1], [0], [0], [1], [0, 0, 1, 1], [], []>} : vector<2x8xf32>, vector<8x128xf32>, vector<2x128xf32> -> vector<2x128xf32>
    %80 = arith.addf %77, %79 : vector<2x128xf32>
    %c56 = arith.constant 56 : index
    %c0_45 = arith.constant 0 : index
    %81 = vector.load %arg0[%c56, %c0_45] : memref<80x128xf32, #tpu.memory_space<vmem>>, vector<2x128xf32>
    %82 = arith.addf %80, %81 : vector<2x128xf32>
    %83 = math.tanh %82 : vector<2x128xf32>
    %c160 = arith.constant 160 : index
    %c0_46 = arith.constant 0 : index
    %84 = vector.load %arg1[%c160, %c0_46] : memref<480x128xf32, #tpu.memory_space<vmem>>, vector<128x8xf32>
    %cst_47 = arith.constant dense<0.000000e+00> : vector<2x8xf32>
    %85 = tpu.matmul %83, %84, %cst_47 {dimension_numbers = #tpu.dot_dimension_numbers<[1], [0], [0], [1], [0, 0, 1, 1], [], []>} : vector<2x128xf32>, vector<128x8xf32>, vector<2x8xf32> -> vector<2x8xf32>
    %c48 = arith.constant 48 : index
    %c0_48 = arith.constant 0 : index
    %86 = vector.load %arg0[%c48, %c0_48] : memref<80x128xf32, #tpu.memory_space<vmem>>, vector<2x8xf32>
    %87 = arith.addf %85, %86 : vector<2x8xf32>
    %cst_49 = arith.constant dense<0xFF800000> : vector<2xf32>
    %88 = vector.multi_reduction <maximumf>, %87, %cst_49 [1] : vector<2x8xf32> to vector<2xf32>
    %89 = vector.shape_cast %88 : vector<2xf32> to vector<2x1xf32>
    %90 = vector.broadcast %89 : vector<2x1xf32> to vector<2x8xf32>
    %91 = arith.subf %87, %90 : vector<2x8xf32>
    %92 = math.exp %91 : vector<2x8xf32>
    %cst_50 = arith.constant dense<0.000000e+00> : vector<2xf32>
    %93 = vector.multi_reduction <add>, %92, %cst_50 [1] : vector<2x8xf32> to vector<2xf32>
    %94 = vector.shape_cast %93 : vector<2xf32> to vector<2x1xf32>
    %95 = tpu.reciprocal %94 {approx = true} : vector<2x1xf32> -> vector<2x1xf32>
    %96 = vector.broadcast %95 : vector<2x1xf32> to vector<2x8xf32>
    %97 = arith.mulf %92, %96 : vector<2x8xf32>
    %98 = tpu.concatenate %97, %97 in 1 : vector<2x8xf32>, vector<2x8xf32> -> vector<2x16xf32>
    %c288 = arith.constant 288 : index
    %c0_51 = arith.constant 0 : index
    %99 = vector.load %arg1[%c288, %c0_51] : memref<480x128xf32, #tpu.memory_space<vmem>>, vector<2x16xf32>
    %100 = arith.mulf %98, %99 : vector<2x16xf32>
    %c64 = arith.constant 64 : index
    %c0_52 = arith.constant 0 : index
    %101 = vector.load %arg0[%c64, %c0_52] : memref<80x128xf32, #tpu.memory_space<vmem>>, vector<16x32xf32>
    %cst_53 = arith.constant dense<0.000000e+00> : vector<2x32xf32>
    %102 = tpu.matmul %100, %101, %cst_53 {dimension_numbers = #tpu.dot_dimension_numbers<[1], [0], [0], [1], [0, 0, 1, 1], [], []>} : vector<2x16xf32>, vector<16x32xf32>, vector<2x32xf32> -> vector<2x32xf32>
    %103 = arith.addf %47, %97 : vector<2x8xf32>
    %c296 = arith.constant 296 : index
    %c0_54 = arith.constant 0 : index
    %104 = vector.load %arg1[%c296, %c0_54] : memref<480x128xf32, #tpu.memory_space<vmem>>, vector<32x128xf32>
    %cst_55 = arith.constant dense<0.000000e+00> : vector<2x128xf32>
    %105 = tpu.matmul %72, %104, %cst_55 {dimension_numbers = #tpu.dot_dimension_numbers<[1], [0], [0], [1], [0, 0, 1, 1], [], []>} : vector<2x32xf32>, vector<32x128xf32>, vector<2x128xf32> -> vector<2x128xf32>
    %c328 = arith.constant 328 : index
    %c0_56 = arith.constant 0 : index
    %106 = vector.load %arg1[%c328, %c0_56] : memref<480x128xf32, #tpu.memory_space<vmem>>, vector<32x128xf32>
    %cst_57 = arith.constant dense<0.000000e+00> : vector<2x128xf32>
    %107 = tpu.matmul %102, %106, %cst_57 {dimension_numbers = #tpu.dot_dimension_numbers<[1], [0], [0], [1], [0, 0, 1, 1], [], []>} : vector<2x32xf32>, vector<32x128xf32>, vector<2x128xf32> -> vector<2x128xf32>
    %108 = arith.addf %105, %107 : vector<2x128xf32>
    %c360 = arith.constant 360 : index
    %c0_58 = arith.constant 0 : index
    %109 = vector.load %arg1[%c360, %c0_58] : memref<480x128xf32, #tpu.memory_space<vmem>>, vector<32x128xf32>
    %cst_59 = arith.constant dense<0.000000e+00> : vector<2x128xf32>
    %110 = tpu.matmul %44, %109, %cst_59 {dimension_numbers = #tpu.dot_dimension_numbers<[1], [0], [0], [1], [0, 0, 1, 1], [], []>} : vector<2x32xf32>, vector<32x128xf32>, vector<2x128xf32> -> vector<2x128xf32>
    %111 = arith.addf %108, %110 : vector<2x128xf32>
    %c392 = arith.constant 392 : index
    %c0_60 = arith.constant 0 : index
    %112 = vector.load %arg1[%c392, %c0_60] : memref<480x128xf32, #tpu.memory_space<vmem>>, vector<1x128xf32>
    %113 = vector.broadcast %112 : vector<1x128xf32> to vector<2x128xf32>
    %114 = arith.addf %111, %113 : vector<2x128xf32>
    %115 = arith.negf %114 : vector<2x128xf32>
    %116 = math.exp %115 : vector<2x128xf32>
    %cst_61 = arith.constant 1.000000e+00 : f32
    %117 = vector.broadcast %cst_61 : f32 to vector<2x128xf32>
    %118 = arith.addf %117, %116 : vector<2x128xf32>
    %119 = arith.divf %117, %118 : vector<2x128xf32>
    %120 = math.tanh %114 : vector<2x128xf32>
    %121 = vector.extract_strided_slice %119 {offsets = [0, 0], sizes = [2, 32], strides = [1, 1]} : vector<2x128xf32> to vector<2x32xf32>
    %122 = vector.extract_strided_slice %119 {offsets = [0, 32], sizes = [2, 32], strides = [1, 1]} : vector<2x128xf32> to vector<2x32xf32>
    %123 = vector.extract_strided_slice %119 {offsets = [0, 96], sizes = [2, 32], strides = [1, 1]} : vector<2x128xf32> to vector<2x32xf32>
    %124 = vector.extract_strided_slice %120 {offsets = [0, 64], sizes = [2, 32], strides = [1, 1]} : vector<2x128xf32> to vector<2x32xf32>
    %125 = arith.mulf %122, %45 : vector<2x32xf32>
    %126 = arith.mulf %121, %124 : vector<2x32xf32>
    %127 = arith.addf %125, %126 : vector<2x32xf32>
    %128 = math.tanh %127 : vector<2x32xf32>
    %129 = arith.mulf %123, %128 : vector<2x32xf32>
    %c400 = arith.constant 400 : index
    %c0_62 = arith.constant 0 : index
    %130 = vector.load %arg1[%c400, %c0_62] : memref<480x128xf32, #tpu.memory_space<vmem>>, vector<32x128xf32>
    %cst_63 = arith.constant dense<0.000000e+00> : vector<2x128xf32>
    %131 = tpu.matmul %129, %130, %cst_63 {dimension_numbers = #tpu.dot_dimension_numbers<[1], [0], [0], [1], [0, 0, 1, 1], [], []>} : vector<2x32xf32>, vector<32x128xf32>, vector<2x128xf32> -> vector<2x128xf32>
    %c432 = arith.constant 432 : index
    %c0_64 = arith.constant 0 : index
    %132 = vector.load %arg1[%c432, %c0_64] : memref<480x128xf32, #tpu.memory_space<vmem>>, vector<32x128xf32>
    %cst_65 = arith.constant dense<0.000000e+00> : vector<2x128xf32>
    %133 = tpu.matmul %102, %132, %cst_65 {dimension_numbers = #tpu.dot_dimension_numbers<[1], [0], [0], [1], [0, 0, 1, 1], [], []>} : vector<2x32xf32>, vector<32x128xf32>, vector<2x128xf32> -> vector<2x128xf32>
    %134 = arith.addf %131, %133 : vector<2x128xf32>
    %c464 = arith.constant 464 : index
    %c0_66 = arith.constant 0 : index
    %135 = vector.load %arg1[%c464, %c0_66] : memref<480x128xf32, #tpu.memory_space<vmem>>, vector<1x128xf32>
    %136 = vector.broadcast %135 : vector<1x128xf32> to vector<2x128xf32>
    %137 = arith.addf %134, %136 : vector<2x128xf32>
    %c472 = arith.constant 472 : index
    %c0_67 = arith.constant 0 : index
    %138 = vector.load %arg1[%c472, %c0_67] : memref<480x128xf32, #tpu.memory_space<vmem>>, vector<8x128xf32>
    %cst_68 = arith.constant dense<0.000000e+00> : vector<2x128xf32>
    %139 = tpu.matmul %97, %138, %cst_68 {dimension_numbers = #tpu.dot_dimension_numbers<[1], [0], [0], [1], [0, 0, 1, 1], [], []>} : vector<2x8xf32>, vector<8x128xf32>, vector<2x128xf32> -> vector<2x128xf32>
    %140 = arith.addf %137, %139 : vector<2x128xf32>
    %141 = arith.index_cast %c0_i32 : i32 to index
    %c0_69 = arith.constant 0 : index
    %c0_70 = arith.constant 0 : index
    %142 = vector.load %arg2[%141, %c0_69, %c0_70] : memref<6x2x128xf32, #tpu.memory_space<vmem>>, vector<1x2x128xf32>
    %143 = vector.shape_cast %142 : vector<1x2x128xf32> to vector<2x128xf32>
    %144 = vector.shape_cast %140 : vector<2x128xf32> to vector<1x2x128xf32>
    tpu.vector_store %arg2[%141, %c0_69, %c0_70], %144 {strides = array<i32>} : memref<6x2x128xf32, #tpu.memory_space<vmem>>, vector<1x2x128xf32>,
    %c1_i32 = arith.constant 1 : i32
    %145 = arith.index_cast %c1_i32 : i32 to index
    %c0_71 = arith.constant 0 : index
    %c0_72 = arith.constant 0 : index
    %146 = vector.load %arg3[%145, %c0_71, %c0_72] : memref<6x2x128xf32, #tpu.memory_space<vmem>>, vector<1x2x128xf32>
    %147 = vector.shape_cast %146 : vector<1x2x128xf32> to vector<2x128xf32>
    %c40_73 = arith.constant 40 : index
    %c0_74 = arith.constant 0 : index
    %148 = vector.load %arg1[%c40_73, %c0_74] : memref<480x128xf32, #tpu.memory_space<vmem>>, vector<32x128xf32>
    %cst_75 = arith.constant dense<0.000000e+00> : vector<2x128xf32>
    %149 = tpu.matmul %102, %148, %cst_75 {dimension_numbers = #tpu.dot_dimension_numbers<[1], [0], [0], [1], [0, 0, 1, 1], [], []>} : vector<2x32xf32>, vector<32x128xf32>, vector<2x128xf32> -> vector<2x128xf32>
    %150 = arith.addf %147, %149 : vector<2x128xf32>
    %c72_76 = arith.constant 72 : index
    %c0_77 = arith.constant 0 : index
    %151 = vector.load %arg1[%c72_76, %c0_77] : memref<480x128xf32, #tpu.memory_space<vmem>>, vector<32x128xf32>
    %cst_78 = arith.constant dense<0.000000e+00> : vector<2x128xf32>
    %152 = tpu.matmul %72, %151, %cst_78 {dimension_numbers = #tpu.dot_dimension_numbers<[1], [0], [0], [1], [0, 0, 1, 1], [], []>} : vector<2x32xf32>, vector<32x128xf32>, vector<2x128xf32> -> vector<2x128xf32>
    %153 = arith.addf %150, %152 : vector<2x128xf32>
    %154 = arith.negf %153 : vector<2x128xf32>
    %155 = math.exp %154 : vector<2x128xf32>
    %cst_79 = arith.constant 1.000000e+00 : f32
    %156 = vector.broadcast %cst_79 : f32 to vector<2x128xf32>
    %157 = arith.addf %156, %155 : vector<2x128xf32>
    %158 = arith.divf %156, %157 : vector<2x128xf32>
    %159 = math.tanh %153 : vector<2x128xf32>
    %160 = vector.extract_strided_slice %158 {offsets = [0, 0], sizes = [2, 32], strides = [1, 1]} : vector<2x128xf32> to vector<2x32xf32>
    %161 = vector.extract_strided_slice %158 {offsets = [0, 32], sizes = [2, 32], strides = [1, 1]} : vector<2x128xf32> to vector<2x32xf32>
    %162 = vector.extract_strided_slice %158 {offsets = [0, 96], sizes = [2, 32], strides = [1, 1]} : vector<2x128xf32> to vector<2x32xf32>
    %163 = vector.extract_strided_slice %159 {offsets = [0, 64], sizes = [2, 32], strides = [1, 1]} : vector<2x128xf32> to vector<2x32xf32>
    %164 = arith.mulf %161, %70 : vector<2x32xf32>
    %165 = arith.mulf %160, %163 : vector<2x32xf32>
    %166 = arith.addf %164, %165 : vector<2x32xf32>
    %167 = math.tanh %166 : vector<2x32xf32>
    %168 = arith.mulf %162, %167 : vector<2x32xf32>
    %c112_80 = arith.constant 112 : index
    %c0_81 = arith.constant 0 : index
    %169 = vector.load %arg1[%c112_80, %c0_81] : memref<480x128xf32, #tpu.memory_space<vmem>>, vector<32x128xf32>
    %cst_82 = arith.constant dense<0.000000e+00> : vector<2x128xf32>
    %170 = tpu.matmul %168, %169, %cst_82 {dimension_numbers = #tpu.dot_dimension_numbers<[1], [0], [0], [1], [0, 0, 1, 1], [], []>} : vector<2x32xf32>, vector<32x128xf32>, vector<2x128xf32> -> vector<2x128xf32>
    %c144_83 = arith.constant 144 : index
    %c0_84 = arith.constant 0 : index
    %171 = vector.load %arg1[%c144_83, %c0_84] : memref<480x128xf32, #tpu.memory_space<vmem>>, vector<8x128xf32>
    %cst_85 = arith.constant dense<0.000000e+00> : vector<2x128xf32>
    %172 = tpu.matmul %97, %171, %cst_85 {dimension_numbers = #tpu.dot_dimension_numbers<[1], [0], [0], [1], [0, 0, 1, 1], [], []>} : vector<2x8xf32>, vector<8x128xf32>, vector<2x128xf32> -> vector<2x128xf32>
    %173 = arith.addf %170, %172 : vector<2x128xf32>
    %c152_86 = arith.constant 152 : index
    %c0_87 = arith.constant 0 : index
    %174 = vector.load %arg1[%c152_86, %c0_87] : memref<480x128xf32, #tpu.memory_space<vmem>>, vector<8x128xf32>
    %cst_88 = arith.constant dense<0.000000e+00> : vector<2x128xf32>
    %175 = tpu.matmul %103, %174, %cst_88 {dimension_numbers = #tpu.dot_dimension_numbers<[1], [0], [0], [1], [0, 0, 1, 1], [], []>} : vector<2x8xf32>, vector<8x128xf32>, vector<2x128xf32> -> vector<2x128xf32>
    %176 = arith.addf %173, %175 : vector<2x128xf32>
    %c56_89 = arith.constant 56 : index
    %c0_90 = arith.constant 0 : index
    %177 = vector.load %arg0[%c56_89, %c0_90] : memref<80x128xf32, #tpu.memory_space<vmem>>, vector<2x128xf32>
    %178 = arith.addf %176, %177 : vector<2x128xf32>
    %179 = math.tanh %178 : vector<2x128xf32>
    %c160_91 = arith.constant 160 : index
    %c0_92 = arith.constant 0 : index
    %180 = vector.load %arg1[%c160_91, %c0_92] : memref<480x128xf32, #tpu.memory_space<vmem>>, vector<128x8xf32>
    %cst_93 = arith.constant dense<0.000000e+00> : vector<2x8xf32>
    %181 = tpu.matmul %179, %180, %cst_93 {dimension_numbers = #tpu.dot_dimension_numbers<[1], [0], [0], [1], [0, 0, 1, 1], [], []>} : vector<2x128xf32>, vector<128x8xf32>, vector<2x8xf32> -> vector<2x8xf32>
    %c48_94 = arith.constant 48 : index
    %c0_95 = arith.constant 0 : index
    %182 = vector.load %arg0[%c48_94, %c0_95] : memref<80x128xf32, #tpu.memory_space<vmem>>, vector<2x8xf32>
    %183 = arith.addf %181, %182 : vector<2x8xf32>
    %cst_96 = arith.constant dense<0xFF800000> : vector<2xf32>
    %184 = vector.multi_reduction <maximumf>, %183, %cst_96 [1] : vector<2x8xf32> to vector<2xf32>
    %185 = vector.shape_cast %184 : vector<2xf32> to vector<2x1xf32>
    %186 = vector.broadcast %185 : vector<2x1xf32> to vector<2x8xf32>
    %187 = arith.subf %183, %186 : vector<2x8xf32>
    %188 = math.exp %187 : vector<2x8xf32>
    %cst_97 = arith.constant dense<0.000000e+00> : vector<2xf32>
    %189 = vector.multi_reduction <add>, %188, %cst_97 [1] : vector<2x8xf32> to vector<2xf32>
    %190 = vector.shape_cast %189 : vector<2xf32> to vector<2x1xf32>
    %191 = tpu.reciprocal %190 {approx = true} : vector<2x1xf32> -> vector<2x1xf32>
    %192 = vector.broadcast %191 : vector<2x1xf32> to vector<2x8xf32>
    %193 = arith.mulf %188, %192 : vector<2x8xf32>
    %194 = tpu.concatenate %193, %193 in 1 : vector<2x8xf32>, vector<2x8xf32> -> vector<2x16xf32>
    %c288_98 = arith.constant 288 : index
    %c0_99 = arith.constant 0 : index
    %195 = vector.load %arg1[%c288_98, %c0_99] : memref<480x128xf32, #tpu.memory_space<vmem>>, vector<2x16xf32>
    %196 = arith.mulf %194, %195 : vector<2x16xf32>
    %c64_100 = arith.constant 64 : index
    %c0_101 = arith.constant 0 : index
    %197 = vector.load %arg0[%c64_100, %c0_101] : memref<80x128xf32, #tpu.memory_space<vmem>>, vector<16x32xf32>
    %cst_102 = arith.constant dense<0.000000e+00> : vector<2x32xf32>
    %198 = tpu.matmul %196, %197, %cst_102 {dimension_numbers = #tpu.dot_dimension_numbers<[1], [0], [0], [1], [0, 0, 1, 1], [], []>} : vector<2x16xf32>, vector<16x32xf32>, vector<2x32xf32> -> vector<2x32xf32>
    %199 = arith.addf %103, %193 : vector<2x8xf32>
    %c296_103 = arith.constant 296 : index
    %c0_104 = arith.constant 0 : index
    %200 = vector.load %arg1[%c296_103, %c0_104] : memref<480x128xf32, #tpu.memory_space<vmem>>, vector<32x128xf32>
    %cst_105 = arith.constant dense<0.000000e+00> : vector<2x128xf32>
    %201 = tpu.matmul %168, %200, %cst_105 {dimension_numbers = #tpu.dot_dimension_numbers<[1], [0], [0], [1], [0, 0, 1, 1], [], []>} : vector<2x32xf32>, vector<32x128xf32>, vector<2x128xf32> -> vector<2x128xf32>
    %c328_106 = arith.constant 328 : index
    %c0_107 = arith.constant 0 : index
    %202 = vector.load %arg1[%c328_106, %c0_107] : memref<480x128xf32, #tpu.memory_space<vmem>>, vector<32x128xf32>
    %cst_108 = arith.constant dense<0.000000e+00> : vector<2x128xf32>
    %203 = tpu.matmul %198, %202, %cst_108 {dimension_numbers = #tpu.dot_dimension_numbers<[1], [0], [0], [1], [0, 0, 1, 1], [], []>} : vector<2x32xf32>, vector<32x128xf32>, vector<2x128xf32> -> vector<2x128xf32>
    %204 = arith.addf %201, %203 : vector<2x128xf32>
    %c360_109 = arith.constant 360 : index
    %c0_110 = arith.constant 0 : index
    %205 = vector.load %arg1[%c360_109, %c0_110] : memref<480x128xf32, #tpu.memory_space<vmem>>, vector<32x128xf32>
    %cst_111 = arith.constant dense<0.000000e+00> : vector<2x128xf32>
    %206 = tpu.matmul %129, %205, %cst_111 {dimension_numbers = #tpu.dot_dimension_numbers<[1], [0], [0], [1], [0, 0, 1, 1], [], []>} : vector<2x32xf32>, vector<32x128xf32>, vector<2x128xf32> -> vector<2x128xf32>
    %207 = arith.addf %204, %206 : vector<2x128xf32>
    %c392_112 = arith.constant 392 : index
    %c0_113 = arith.constant 0 : index
    %208 = vector.load %arg1[%c392_112, %c0_113] : memref<480x128xf32, #tpu.memory_space<vmem>>, vector<1x128xf32>
    %209 = vector.broadcast %208 : vector<1x128xf32> to vector<2x128xf32>
    %210 = arith.addf %207, %209 : vector<2x128xf32>
    %211 = arith.negf %210 : vector<2x128xf32>
    %212 = math.exp %211 : vector<2x128xf32>
    %cst_114 = arith.constant 1.000000e+00 : f32
    %213 = vector.broadcast %cst_114 : f32 to vector<2x128xf32>
    %214 = arith.addf %213, %212 : vector<2x128xf32>
    %215 = arith.divf %213, %214 : vector<2x128xf32>
    %216 = math.tanh %210 : vector<2x128xf32>
    %217 = vector.extract_strided_slice %215 {offsets = [0, 0], sizes = [2, 32], strides = [1, 1]} : vector<2x128xf32> to vector<2x32xf32>
    %218 = vector.extract_strided_slice %215 {offsets = [0, 32], sizes = [2, 32], strides = [1, 1]} : vector<2x128xf32> to vector<2x32xf32>
    %219 = vector.extract_strided_slice %215 {offsets = [0, 96], sizes = [2, 32], strides = [1, 1]} : vector<2x128xf32> to vector<2x32xf32>
    %220 = vector.extract_strided_slice %216 {offsets = [0, 64], sizes = [2, 32], strides = [1, 1]} : vector<2x128xf32> to vector<2x32xf32>
    %221 = arith.mulf %218, %127 : vector<2x32xf32>
    %222 = arith.mulf %217, %220 : vector<2x32xf32>
    %223 = arith.addf %221, %222 : vector<2x32xf32>
    %224 = math.tanh %223 : vector<2x32xf32>
    %225 = arith.mulf %219, %224 : vector<2x32xf32>
    %c400_115 = arith.constant 400 : index
    %c0_116 = arith.constant 0 : index
    %226 = vector.load %arg1[%c400_115, %c0_116] : memref<480x128xf32, #tpu.memory_space<vmem>>, vector<32x128xf32>
    %cst_117 = arith.constant dense<0.000000e+00> : vector<2x128xf32>
    %227 = tpu.matmul %225, %226, %cst_117 {dimension_numbers = #tpu.dot_dimension_numbers<[1], [0], [0], [1], [0, 0, 1, 1], [], []>} : vector<2x32xf32>, vector<32x128xf32>, vector<2x128xf32> -> vector<2x128xf32>
    %c432_118 = arith.constant 432 : index
    %c0_119 = arith.constant 0 : index
    %228 = vector.load %arg1[%c432_118, %c0_119] : memref<480x128xf32, #tpu.memory_space<vmem>>, vector<32x128xf32>
    %cst_120 = arith.constant dense<0.000000e+00> : vector<2x128xf32>
    %229 = tpu.matmul %198, %228, %cst_120 {dimension_numbers = #tpu.dot_dimension_numbers<[1], [0], [0], [1], [0, 0, 1, 1], [], []>} : vector<2x32xf32>, vector<32x128xf32>, vector<2x128xf32> -> vector<2x128xf32>
    %230 = arith.addf %227, %229 : vector<2x128xf32>
    %c464_121 = arith.constant 464 : index
    %c0_122 = arith.constant 0 : index
    %231 = vector.load %arg1[%c464_121, %c0_122] : memref<480x128xf32, #tpu.memory_space<vmem>>, vector<1x128xf32>
    %232 = vector.broadcast %231 : vector<1x128xf32> to vector<2x128xf32>
    %233 = arith.addf %230, %232 : vector<2x128xf32>
    %c472_123 = arith.constant 472 : index
    %c0_124 = arith.constant 0 : index
    %234 = vector.load %arg1[%c472_123, %c0_124] : memref<480x128xf32, #tpu.memory_space<vmem>>, vector<8x128xf32>
    %cst_125 = arith.constant dense<0.000000e+00> : vector<2x128xf32>
    %235 = tpu.matmul %193, %234, %cst_125 {dimension_numbers = #tpu.dot_dimension_numbers<[1], [0], [0], [1], [0, 0, 1, 1], [], []>} : vector<2x8xf32>, vector<8x128xf32>, vector<2x128xf32> -> vector<2x128xf32>
    %236 = arith.addf %233, %235 : vector<2x128xf32>
    %237 = arith.index_cast %c1_i32 : i32 to index
    %c0_126 = arith.constant 0 : index
    %c0_127 = arith.constant 0 : index
    %238 = vector.load %arg2[%237, %c0_126, %c0_127] : memref<6x2x128xf32, #tpu.memory_space<vmem>>, vector<1x2x128xf32>
    %239 = vector.shape_cast %238 : vector<1x2x128xf32> to vector<2x128xf32>
    %240 = vector.shape_cast %236 : vector<2x128xf32> to vector<1x2x128xf32>
    tpu.vector_store %arg2[%237, %c0_126, %c0_127], %240 {strides = array<i32>} : memref<6x2x128xf32, #tpu.memory_space<vmem>>, vector<1x2x128xf32>,
    %c2_i32 = arith.constant 2 : i32
    %241 = arith.index_cast %c2_i32 : i32 to index
    %c0_128 = arith.constant 0 : index
    %c0_129 = arith.constant 0 : index
    %242 = vector.load %arg3[%241, %c0_128, %c0_129] : memref<6x2x128xf32, #tpu.memory_space<vmem>>, vector<1x2x128xf32>
    %243 = vector.shape_cast %242 : vector<1x2x128xf32> to vector<2x128xf32>
    %c40_130 = arith.constant 40 : index
    %c0_131 = arith.constant 0 : index
    %244 = vector.load %arg1[%c40_130, %c0_131] : memref<480x128xf32, #tpu.memory_space<vmem>>, vector<32x128xf32>
    %cst_132 = arith.constant dense<0.000000e+00> : vector<2x128xf32>
    %245 = tpu.matmul %198, %244, %cst_132 {dimension_numbers = #tpu.dot_dimension_numbers<[1], [0], [0], [1], [0, 0, 1, 1], [], []>} : vector<2x32xf32>, vector<32x128xf32>, vector<2x128xf32> -> vector<2x128xf32>
    %246 = arith.addf %243, %245 : vector<2x128xf32>
    %c72_133 = arith.constant 72 : index
    %c0_134 = arith.constant 0 : index
    %247 = vector.load %arg1[%c72_133, %c0_134] : memref<480x128xf32, #tpu.memory_space<vmem>>, vector<32x128xf32>
    %cst_135 = arith.constant dense<0.000000e+00> : vector<2x128xf32>
    %248 = tpu.matmul %168, %247, %cst_135 {dimension_numbers = #tpu.dot_dimension_numbers<[1], [0], [0], [1], [0, 0, 1, 1], [], []>} : vector<2x32xf32>, vector<32x128xf32>, vector<2x128xf32> -> vector<2x128xf32>
    %249 = arith.addf %246, %248 : vector<2x128xf32>
    %250 = arith.negf %249 : vector<2x128xf32>
    %251 = math.exp %250 : vector<2x128xf32>
    %cst_136 = arith.constant 1.000000e+00 : f32
    %252 = vector.broadcast %cst_136 : f32 to vector<2x128xf32>
    %253 = arith.addf %252, %251 : vector<2x128xf32>
    %254 = arith.divf %252, %253 : vector<2x128xf32>
    %255 = math.tanh %249 : vector<2x128xf32>
    %256 = vector.extract_strided_slice %254 {offsets = [0, 0], sizes = [2, 32], strides = [1, 1]} : vector<2x128xf32> to vector<2x32xf32>
    %257 = vector.extract_strided_slice %254 {offsets = [0, 32], sizes = [2, 32], strides = [1, 1]} : vector<2x128xf32> to vector<2x32xf32>
    %258 = vector.extract_strided_slice %254 {offsets = [0, 96], sizes = [2, 32], strides = [1, 1]} : vector<2x128xf32> to vector<2x32xf32>
    %259 = vector.extract_strided_slice %255 {offsets = [0, 64], sizes = [2, 32], strides = [1, 1]} : vector<2x128xf32> to vector<2x32xf32>
    %260 = arith.mulf %257, %166 : vector<2x32xf32>
    %261 = arith.mulf %256, %259 : vector<2x32xf32>
    %262 = arith.addf %260, %261 : vector<2x32xf32>
    %263 = math.tanh %262 : vector<2x32xf32>
    %264 = arith.mulf %258, %263 : vector<2x32xf32>
    %c112_137 = arith.constant 112 : index
    %c0_138 = arith.constant 0 : index
    %265 = vector.load %arg1[%c112_137, %c0_138] : memref<480x128xf32, #tpu.memory_space<vmem>>, vector<32x128xf32>
    %cst_139 = arith.constant dense<0.000000e+00> : vector<2x128xf32>
    %266 = tpu.matmul %264, %265, %cst_139 {dimension_numbers = #tpu.dot_dimension_numbers<[1], [0], [0], [1], [0, 0, 1, 1], [], []>} : vector<2x32xf32>, vector<32x128xf32>, vector<2x128xf32> -> vector<2x128xf32>
    %c144_140 = arith.constant 144 : index
    %c0_141 = arith.constant 0 : index
    %267 = vector.load %arg1[%c144_140, %c0_141] : memref<480x128xf32, #tpu.memory_space<vmem>>, vector<8x128xf32>
    %cst_142 = arith.constant dense<0.000000e+00> : vector<2x128xf32>
    %268 = tpu.matmul %193, %267, %cst_142 {dimension_numbers = #tpu.dot_dimension_numbers<[1], [0], [0], [1], [0, 0, 1, 1], [], []>} : vector<2x8xf32>, vector<8x128xf32>, vector<2x128xf32> -> vector<2x128xf32>
    %269 = arith.addf %266, %268 : vector<2x128xf32>
    %c152_143 = arith.constant 152 : index
    %c0_144 = arith.constant 0 : index
    %270 = vector.load %arg1[%c152_143, %c0_144] : memref<480x128xf32, #tpu.memory_space<vmem>>, vector<8x128xf32>
    %cst_145 = arith.constant dense<0.000000e+00> : vector<2x128xf32>
    %271 = tpu.matmul %199, %270, %cst_145 {dimension_numbers = #tpu.dot_dimension_numbers<[1], [0], [0], [1], [0, 0, 1, 1], [], []>} : vector<2x8xf32>, vector<8x128xf32>, vector<2x128xf32> -> vector<2x128xf32>
    %272 = arith.addf %269, %271 : vector<2x128xf32>
    %c56_146 = arith.constant 56 : index
    %c0_147 = arith.constant 0 : index
    %273 = vector.load %arg0[%c56_146, %c0_147] : memref<80x128xf32, #tpu.memory_space<vmem>>, vector<2x128xf32>
    %274 = arith.addf %272, %273 : vector<2x128xf32>
    %275 = math.tanh %274 : vector<2x128xf32>
    %c160_148 = arith.constant 160 : index
    %c0_149 = arith.constant 0 : index
    %276 = vector.load %arg1[%c160_148, %c0_149] : memref<480x128xf32, #tpu.memory_space<vmem>>, vector<128x8xf32>
    %cst_150 = arith.constant dense<0.000000e+00> : vector<2x8xf32>
    %277 = tpu.matmul %275, %276, %cst_150 {dimension_numbers = #tpu.dot_dimension_numbers<[1], [0], [0], [1], [0, 0, 1, 1], [], []>} : vector<2x128xf32>, vector<128x8xf32>, vector<2x8xf32> -> vector<2x8xf32>
    %c48_151 = arith.constant 48 : index
    %c0_152 = arith.constant 0 : index
    %278 = vector.load %arg0[%c48_151, %c0_152] : memref<80x128xf32, #tpu.memory_space<vmem>>, vector<2x8xf32>
    %279 = arith.addf %277, %278 : vector<2x8xf32>
    %cst_153 = arith.constant dense<0xFF800000> : vector<2xf32>
    %280 = vector.multi_reduction <maximumf>, %279, %cst_153 [1] : vector<2x8xf32> to vector<2xf32>
    %281 = vector.shape_cast %280 : vector<2xf32> to vector<2x1xf32>
    %282 = vector.broadcast %281 : vector<2x1xf32> to vector<2x8xf32>
    %283 = arith.subf %279, %282 : vector<2x8xf32>
    %284 = math.exp %283 : vector<2x8xf32>
    %cst_154 = arith.constant dense<0.000000e+00> : vector<2xf32>
    %285 = vector.multi_reduction <add>, %284, %cst_154 [1] : vector<2x8xf32> to vector<2xf32>
    %286 = vector.shape_cast %285 : vector<2xf32> to vector<2x1xf32>
    %287 = tpu.reciprocal %286 {approx = true} : vector<2x1xf32> -> vector<2x1xf32>
    %288 = vector.broadcast %287 : vector<2x1xf32> to vector<2x8xf32>
    %289 = arith.mulf %284, %288 : vector<2x8xf32>
    %290 = tpu.concatenate %289, %289 in 1 : vector<2x8xf32>, vector<2x8xf32> -> vector<2x16xf32>
    %c288_155 = arith.constant 288 : index
    %c0_156 = arith.constant 0 : index
    %291 = vector.load %arg1[%c288_155, %c0_156] : memref<480x128xf32, #tpu.memory_space<vmem>>, vector<2x16xf32>
    %292 = arith.mulf %290, %291 : vector<2x16xf32>
    %c64_157 = arith.constant 64 : index
    %c0_158 = arith.constant 0 : index
    %293 = vector.load %arg0[%c64_157, %c0_158] : memref<80x128xf32, #tpu.memory_space<vmem>>, vector<16x32xf32>
    %cst_159 = arith.constant dense<0.000000e+00> : vector<2x32xf32>
    %294 = tpu.matmul %292, %293, %cst_159 {dimension_numbers = #tpu.dot_dimension_numbers<[1], [0], [0], [1], [0, 0, 1, 1], [], []>} : vector<2x16xf32>, vector<16x32xf32>, vector<2x32xf32> -> vector<2x32xf32>
    %295 = arith.addf %199, %289 : vector<2x8xf32>
    %c296_160 = arith.constant 296 : index
    %c0_161 = arith.constant 0 : index
    %296 = vector.load %arg1[%c296_160, %c0_161] : memref<480x128xf32, #tpu.memory_space<vmem>>, vector<32x128xf32>
    %cst_162 = arith.constant dense<0.000000e+00> : vector<2x128xf32>
    %297 = tpu.matmul %264, %296, %cst_162 {dimension_numbers = #tpu.dot_dimension_numbers<[1], [0], [0], [1], [0, 0, 1, 1], [], []>} : vector<2x32xf32>, vector<32x128xf32>, vector<2x128xf32> -> vector<2x128xf32>
    %c328_163 = arith.constant 328 : index
    %c0_164 = arith.constant 0 : index
    %298 = vector.load %arg1[%c328_163, %c0_164] : memref<480x128xf32, #tpu.memory_space<vmem>>, vector<32x128xf32>
    %cst_165 = arith.constant dense<0.000000e+00> : vector<2x128xf32>
    %299 = tpu.matmul %294, %298, %cst_165 {dimension_numbers = #tpu.dot_dimension_numbers<[1], [0], [0], [1], [0, 0, 1, 1], [], []>} : vector<2x32xf32>, vector<32x128xf32>, vector<2x128xf32> -> vector<2x128xf32>
    %300 = arith.addf %297, %299 : vector<2x128xf32>
    %c360_166 = arith.constant 360 : index
    %c0_167 = arith.constant 0 : index
    %301 = vector.load %arg1[%c360_166, %c0_167] : memref<480x128xf32, #tpu.memory_space<vmem>>, vector<32x128xf32>
    %cst_168 = arith.constant dense<0.000000e+00> : vector<2x128xf32>
    %302 = tpu.matmul %225, %301, %cst_168 {dimension_numbers = #tpu.dot_dimension_numbers<[1], [0], [0], [1], [0, 0, 1, 1], [], []>} : vector<2x32xf32>, vector<32x128xf32>, vector<2x128xf32> -> vector<2x128xf32>
    %303 = arith.addf %300, %302 : vector<2x128xf32>
    %c392_169 = arith.constant 392 : index
    %c0_170 = arith.constant 0 : index
    %304 = vector.load %arg1[%c392_169, %c0_170] : memref<480x128xf32, #tpu.memory_space<vmem>>, vector<1x128xf32>
    %305 = vector.broadcast %304 : vector<1x128xf32> to vector<2x128xf32>
    %306 = arith.addf %303, %305 : vector<2x128xf32>
    %307 = arith.negf %306 : vector<2x128xf32>
    %308 = math.exp %307 : vector<2x128xf32>
    %cst_171 = arith.constant 1.000000e+00 : f32
    %309 = vector.broadcast %cst_171 : f32 to vector<2x128xf32>
    %310 = arith.addf %309, %308 : vector<2x128xf32>
    %311 = arith.divf %309, %310 : vector<2x128xf32>
    %312 = math.tanh %306 : vector<2x128xf32>
    %313 = vector.extract_strided_slice %311 {offsets = [0, 0], sizes = [2, 32], strides = [1, 1]} : vector<2x128xf32> to vector<2x32xf32>
    %314 = vector.extract_strided_slice %311 {offsets = [0, 32], sizes = [2, 32], strides = [1, 1]} : vector<2x128xf32> to vector<2x32xf32>
    %315 = vector.extract_strided_slice %311 {offsets = [0, 96], sizes = [2, 32], strides = [1, 1]} : vector<2x128xf32> to vector<2x32xf32>
    %316 = vector.extract_strided_slice %312 {offsets = [0, 64], sizes = [2, 32], strides = [1, 1]} : vector<2x128xf32> to vector<2x32xf32>
    %317 = arith.mulf %314, %223 : vector<2x32xf32>
    %318 = arith.mulf %313, %316 : vector<2x32xf32>
    %319 = arith.addf %317, %318 : vector<2x32xf32>
    %320 = math.tanh %319 : vector<2x32xf32>
    %321 = arith.mulf %315, %320 : vector<2x32xf32>
    %c400_172 = arith.constant 400 : index
    %c0_173 = arith.constant 0 : index
    %322 = vector.load %arg1[%c400_172, %c0_173] : memref<480x128xf32, #tpu.memory_space<vmem>>, vector<32x128xf32>
    %cst_174 = arith.constant dense<0.000000e+00> : vector<2x128xf32>
    %323 = tpu.matmul %321, %322, %cst_174 {dimension_numbers = #tpu.dot_dimension_numbers<[1], [0], [0], [1], [0, 0, 1, 1], [], []>} : vector<2x32xf32>, vector<32x128xf32>, vector<2x128xf32> -> vector<2x128xf32>
    %c432_175 = arith.constant 432 : index
    %c0_176 = arith.constant 0 : index
    %324 = vector.load %arg1[%c432_175, %c0_176] : memref<480x128xf32, #tpu.memory_space<vmem>>, vector<32x128xf32>
    %cst_177 = arith.constant dense<0.000000e+00> : vector<2x128xf32>
    %325 = tpu.matmul %294, %324, %cst_177 {dimension_numbers = #tpu.dot_dimension_numbers<[1], [0], [0], [1], [0, 0, 1, 1], [], []>} : vector<2x32xf32>, vector<32x128xf32>, vector<2x128xf32> -> vector<2x128xf32>
    %326 = arith.addf %323, %325 : vector<2x128xf32>
    %c464_178 = arith.constant 464 : index
    %c0_179 = arith.constant 0 : index
    %327 = vector.load %arg1[%c464_178, %c0_179] : memref<480x128xf32, #tpu.memory_space<vmem>>, vector<1x128xf32>
    %328 = vector.broadcast %327 : vector<1x128xf32> to vector<2x128xf32>
    %329 = arith.addf %326, %328 : vector<2x128xf32>
    %c472_180 = arith.constant 472 : index
    %c0_181 = arith.constant 0 : index
    %330 = vector.load %arg1[%c472_180, %c0_181] : memref<480x128xf32, #tpu.memory_space<vmem>>, vector<8x128xf32>
    %cst_182 = arith.constant dense<0.000000e+00> : vector<2x128xf32>
    %331 = tpu.matmul %289, %330, %cst_182 {dimension_numbers = #tpu.dot_dimension_numbers<[1], [0], [0], [1], [0, 0, 1, 1], [], []>} : vector<2x8xf32>, vector<8x128xf32>, vector<2x128xf32> -> vector<2x128xf32>
    %332 = arith.addf %329, %331 : vector<2x128xf32>
    %333 = arith.index_cast %c2_i32 : i32 to index
    %c0_183 = arith.constant 0 : index
    %c0_184 = arith.constant 0 : index
    %334 = vector.load %arg2[%333, %c0_183, %c0_184] : memref<6x2x128xf32, #tpu.memory_space<vmem>>, vector<1x2x128xf32>
    %335 = vector.shape_cast %334 : vector<1x2x128xf32> to vector<2x128xf32>
    %336 = vector.shape_cast %332 : vector<2x128xf32> to vector<1x2x128xf32>
    tpu.vector_store %arg2[%333, %c0_183, %c0_184], %336 {strides = array<i32>} : memref<6x2x128xf32, #tpu.memory_space<vmem>>, vector<1x2x128xf32>,
    %c3_i32 = arith.constant 3 : i32
    %337 = arith.index_cast %c3_i32 : i32 to index
    %c0_185 = arith.constant 0 : index
    %c0_186 = arith.constant 0 : index
    %338 = vector.load %arg3[%337, %c0_185, %c0_186] : memref<6x2x128xf32, #tpu.memory_space<vmem>>, vector<1x2x128xf32>
    %339 = vector.shape_cast %338 : vector<1x2x128xf32> to vector<2x128xf32>
    %c40_187 = arith.constant 40 : index
    %c0_188 = arith.constant 0 : index
    %340 = vector.load %arg1[%c40_187, %c0_188] : memref<480x128xf32, #tpu.memory_space<vmem>>, vector<32x128xf32>
    %cst_189 = arith.constant dense<0.000000e+00> : vector<2x128xf32>
    %341 = tpu.matmul %294, %340, %cst_189 {dimension_numbers = #tpu.dot_dimension_numbers<[1], [0], [0], [1], [0, 0, 1, 1], [], []>} : vector<2x32xf32>, vector<32x128xf32>, vector<2x128xf32> -> vector<2x128xf32>
    %342 = arith.addf %339, %341 : vector<2x128xf32>
    %c72_190 = arith.constant 72 : index
    %c0_191 = arith.constant 0 : index
    %343 = vector.load %arg1[%c72_190, %c0_191] : memref<480x128xf32, #tpu.memory_space<vmem>>, vector<32x128xf32>
    %cst_192 = arith.constant dense<0.000000e+00> : vector<2x128xf32>
    %344 = tpu.matmul %264, %343, %cst_192 {dimension_numbers = #tpu.dot_dimension_numbers<[1], [0], [0], [1], [0, 0, 1, 1], [], []>} : vector<2x32xf32>, vector<32x128xf32>, vector<2x128xf32> -> vector<2x128xf32>
    %345 = arith.addf %342, %344 : vector<2x128xf32>
    %346 = arith.negf %345 : vector<2x128xf32>
    %347 = math.exp %346 : vector<2x128xf32>
    %cst_193 = arith.constant 1.000000e+00 : f32
    %348 = vector.broadcast %cst_193 : f32 to vector<2x128xf32>
    %349 = arith.addf %348, %347 : vector<2x128xf32>
    %350 = arith.divf %348, %349 : vector<2x128xf32>
    %351 = math.tanh %345 : vector<2x128xf32>
    %352 = vector.extract_strided_slice %350 {offsets = [0, 0], sizes = [2, 32], strides = [1, 1]} : vector<2x128xf32> to vector<2x32xf32>
    %353 = vector.extract_strided_slice %350 {offsets = [0, 32], sizes = [2, 32], strides = [1, 1]} : vector<2x128xf32> to vector<2x32xf32>
    %354 = vector.extract_strided_slice %350 {offsets = [0, 96], sizes = [2, 32], strides = [1, 1]} : vector<2x128xf32> to vector<2x32xf32>
    %355 = vector.extract_strided_slice %351 {offsets = [0, 64], sizes = [2, 32], strides = [1, 1]} : vector<2x128xf32> to vector<2x32xf32>
    %356 = arith.mulf %353, %262 : vector<2x32xf32>
    %357 = arith.mulf %352, %355 : vector<2x32xf32>
    %358 = arith.addf %356, %357 : vector<2x32xf32>
    %359 = math.tanh %358 : vector<2x32xf32>
    %360 = arith.mulf %354, %359 : vector<2x32xf32>
    %c112_194 = arith.constant 112 : index
    %c0_195 = arith.constant 0 : index
    %361 = vector.load %arg1[%c112_194, %c0_195] : memref<480x128xf32, #tpu.memory_space<vmem>>, vector<32x128xf32>
    %cst_196 = arith.constant dense<0.000000e+00> : vector<2x128xf32>
    %362 = tpu.matmul %360, %361, %cst_196 {dimension_numbers = #tpu.dot_dimension_numbers<[1], [0], [0], [1], [0, 0, 1, 1], [], []>} : vector<2x32xf32>, vector<32x128xf32>, vector<2x128xf32> -> vector<2x128xf32>
    %c144_197 = arith.constant 144 : index
    %c0_198 = arith.constant 0 : index
    %363 = vector.load %arg1[%c144_197, %c0_198] : memref<480x128xf32, #tpu.memory_space<vmem>>, vector<8x128xf32>
    %cst_199 = arith.constant dense<0.000000e+00> : vector<2x128xf32>
    %364 = tpu.matmul %289, %363, %cst_199 {dimension_numbers = #tpu.dot_dimension_numbers<[1], [0], [0], [1], [0, 0, 1, 1], [], []>} : vector<2x8xf32>, vector<8x128xf32>, vector<2x128xf32> -> vector<2x128xf32>
    %365 = arith.addf %362, %364 : vector<2x128xf32>
    %c152_200 = arith.constant 152 : index
    %c0_201 = arith.constant 0 : index
    %366 = vector.load %arg1[%c152_200, %c0_201] : memref<480x128xf32, #tpu.memory_space<vmem>>, vector<8x128xf32>
    %cst_202 = arith.constant dense<0.000000e+00> : vector<2x128xf32>
    %367 = tpu.matmul %295, %366, %cst_202 {dimension_numbers = #tpu.dot_dimension_numbers<[1], [0], [0], [1], [0, 0, 1, 1], [], []>} : vector<2x8xf32>, vector<8x128xf32>, vector<2x128xf32> -> vector<2x128xf32>
    %368 = arith.addf %365, %367 : vector<2x128xf32>
    %c56_203 = arith.constant 56 : index
    %c0_204 = arith.constant 0 : index
    %369 = vector.load %arg0[%c56_203, %c0_204] : memref<80x128xf32, #tpu.memory_space<vmem>>, vector<2x128xf32>
    %370 = arith.addf %368, %369 : vector<2x128xf32>
    %371 = math.tanh %370 : vector<2x128xf32>
    %c160_205 = arith.constant 160 : index
    %c0_206 = arith.constant 0 : index
    %372 = vector.load %arg1[%c160_205, %c0_206] : memref<480x128xf32, #tpu.memory_space<vmem>>, vector<128x8xf32>
    %cst_207 = arith.constant dense<0.000000e+00> : vector<2x8xf32>
    %373 = tpu.matmul %371, %372, %cst_207 {dimension_numbers = #tpu.dot_dimension_numbers<[1], [0], [0], [1], [0, 0, 1, 1], [], []>} : vector<2x128xf32>, vector<128x8xf32>, vector<2x8xf32> -> vector<2x8xf32>
    %c48_208 = arith.constant 48 : index
    %c0_209 = arith.constant 0 : index
    %374 = vector.load %arg0[%c48_208, %c0_209] : memref<80x128xf32, #tpu.memory_space<vmem>>, vector<2x8xf32>
    %375 = arith.addf %373, %374 : vector<2x8xf32>
    %cst_210 = arith.constant dense<0xFF800000> : vector<2xf32>
    %376 = vector.multi_reduction <maximumf>, %375, %cst_210 [1] : vector<2x8xf32> to vector<2xf32>
    %377 = vector.shape_cast %376 : vector<2xf32> to vector<2x1xf32>
    %378 = vector.broadcast %377 : vector<2x1xf32> to vector<2x8xf32>
    %379 = arith.subf %375, %378 : vector<2x8xf32>
    %380 = math.exp %379 : vector<2x8xf32>
    %cst_211 = arith.constant dense<0.000000e+00> : vector<2xf32>
    %381 = vector.multi_reduction <add>, %380, %cst_211 [1] : vector<2x8xf32> to vector<2xf32>
    %382 = vector.shape_cast %381 : vector<2xf32> to vector<2x1xf32>
    %383 = tpu.reciprocal %382 {approx = true} : vector<2x1xf32> -> vector<2x1xf32>
    %384 = vector.broadcast %383 : vector<2x1xf32> to vector<2x8xf32>
    %385 = arith.mulf %380, %384 : vector<2x8xf32>
    %386 = tpu.concatenate %385, %385 in 1 : vector<2x8xf32>, vector<2x8xf32> -> vector<2x16xf32>
    %c288_212 = arith.constant 288 : index
    %c0_213 = arith.constant 0 : index
    %387 = vector.load %arg1[%c288_212, %c0_213] : memref<480x128xf32, #tpu.memory_space<vmem>>, vector<2x16xf32>
    %388 = arith.mulf %386, %387 : vector<2x16xf32>
    %c64_214 = arith.constant 64 : index
    %c0_215 = arith.constant 0 : index
    %389 = vector.load %arg0[%c64_214, %c0_215] : memref<80x128xf32, #tpu.memory_space<vmem>>, vector<16x32xf32>
    %cst_216 = arith.constant dense<0.000000e+00> : vector<2x32xf32>
    %390 = tpu.matmul %388, %389, %cst_216 {dimension_numbers = #tpu.dot_dimension_numbers<[1], [0], [0], [1], [0, 0, 1, 1], [], []>} : vector<2x16xf32>, vector<16x32xf32>, vector<2x32xf32> -> vector<2x32xf32>
    %391 = arith.addf %295, %385 : vector<2x8xf32>
    %c296_217 = arith.constant 296 : index
    %c0_218 = arith.constant 0 : index
    %392 = vector.load %arg1[%c296_217, %c0_218] : memref<480x128xf32, #tpu.memory_space<vmem>>, vector<32x128xf32>
    %cst_219 = arith.constant dense<0.000000e+00> : vector<2x128xf32>
    %393 = tpu.matmul %360, %392, %cst_219 {dimension_numbers = #tpu.dot_dimension_numbers<[1], [0], [0], [1], [0, 0, 1, 1], [], []>} : vector<2x32xf32>, vector<32x128xf32>, vector<2x128xf32> -> vector<2x128xf32>
    %c328_220 = arith.constant 328 : index
    %c0_221 = arith.constant 0 : index
    %394 = vector.load %arg1[%c328_220, %c0_221] : memref<480x128xf32, #tpu.memory_space<vmem>>, vector<32x128xf32>
    %cst_222 = arith.constant dense<0.000000e+00> : vector<2x128xf32>
    %395 = tpu.matmul %390, %394, %cst_222 {dimension_numbers = #tpu.dot_dimension_numbers<[1], [0], [0], [1], [0, 0, 1, 1], [], []>} : vector<2x32xf32>, vector<32x128xf32>, vector<2x128xf32> -> vector<2x128xf32>
    %396 = arith.addf %393, %395 : vector<2x128xf32>
    %c360_223 = arith.constant 360 : index
    %c0_224 = arith.constant 0 : index
    %397 = vector.load %arg1[%c360_223, %c0_224] : memref<480x128xf32, #tpu.memory_space<vmem>>, vector<32x128xf32>
    %cst_225 = arith.constant dense<0.000000e+00> : vector<2x128xf32>
    %398 = tpu.matmul %321, %397, %cst_225 {dimension_numbers = #tpu.dot_dimension_numbers<[1], [0], [0], [1], [0, 0, 1, 1], [], []>} : vector<2x32xf32>, vector<32x128xf32>, vector<2x128xf32> -> vector<2x128xf32>
    %399 = arith.addf %396, %398 : vector<2x128xf32>
    %c392_226 = arith.constant 392 : index
    %c0_227 = arith.constant 0 : index
    %400 = vector.load %arg1[%c392_226, %c0_227] : memref<480x128xf32, #tpu.memory_space<vmem>>, vector<1x128xf32>
    %401 = vector.broadcast %400 : vector<1x128xf32> to vector<2x128xf32>
    %402 = arith.addf %399, %401 : vector<2x128xf32>
    %403 = arith.negf %402 : vector<2x128xf32>
    %404 = math.exp %403 : vector<2x128xf32>
    %cst_228 = arith.constant 1.000000e+00 : f32
    %405 = vector.broadcast %cst_228 : f32 to vector<2x128xf32>
    %406 = arith.addf %405, %404 : vector<2x128xf32>
    %407 = arith.divf %405, %406 : vector<2x128xf32>
    %408 = math.tanh %402 : vector<2x128xf32>
    %409 = vector.extract_strided_slice %407 {offsets = [0, 0], sizes = [2, 32], strides = [1, 1]} : vector<2x128xf32> to vector<2x32xf32>
    %410 = vector.extract_strided_slice %407 {offsets = [0, 32], sizes = [2, 32], strides = [1, 1]} : vector<2x128xf32> to vector<2x32xf32>
    %411 = vector.extract_strided_slice %407 {offsets = [0, 96], sizes = [2, 32], strides = [1, 1]} : vector<2x128xf32> to vector<2x32xf32>
    %412 = vector.extract_strided_slice %408 {offsets = [0, 64], sizes = [2, 32], strides = [1, 1]} : vector<2x128xf32> to vector<2x32xf32>
    %413 = arith.mulf %410, %319 : vector<2x32xf32>
    %414 = arith.mulf %409, %412 : vector<2x32xf32>
    %415 = arith.addf %413, %414 : vector<2x32xf32>
    %416 = math.tanh %415 : vector<2x32xf32>
    %417 = arith.mulf %411, %416 : vector<2x32xf32>
    %c400_229 = arith.constant 400 : index
    %c0_230 = arith.constant 0 : index
    %418 = vector.load %arg1[%c400_229, %c0_230] : memref<480x128xf32, #tpu.memory_space<vmem>>, vector<32x128xf32>
    %cst_231 = arith.constant dense<0.000000e+00> : vector<2x128xf32>
    %419 = tpu.matmul %417, %418, %cst_231 {dimension_numbers = #tpu.dot_dimension_numbers<[1], [0], [0], [1], [0, 0, 1, 1], [], []>} : vector<2x32xf32>, vector<32x128xf32>, vector<2x128xf32> -> vector<2x128xf32>
    %c432_232 = arith.constant 432 : index
    %c0_233 = arith.constant 0 : index
    %420 = vector.load %arg1[%c432_232, %c0_233] : memref<480x128xf32, #tpu.memory_space<vmem>>, vector<32x128xf32>
    %cst_234 = arith.constant dense<0.000000e+00> : vector<2x128xf32>
    %421 = tpu.matmul %390, %420, %cst_234 {dimension_numbers = #tpu.dot_dimension_numbers<[1], [0], [0], [1], [0, 0, 1, 1], [], []>} : vector<2x32xf32>, vector<32x128xf32>, vector<2x128xf32> -> vector<2x128xf32>
    %422 = arith.addf %419, %421 : vector<2x128xf32>
    %c464_235 = arith.constant 464 : index
    %c0_236 = arith.constant 0 : index
    %423 = vector.load %arg1[%c464_235, %c0_236] : memref<480x128xf32, #tpu.memory_space<vmem>>, vector<1x128xf32>
    %424 = vector.broadcast %423 : vector<1x128xf32> to vector<2x128xf32>
    %425 = arith.addf %422, %424 : vector<2x128xf32>
    %c472_237 = arith.constant 472 : index
    %c0_238 = arith.constant 0 : index
    %426 = vector.load %arg1[%c472_237, %c0_238] : memref<480x128xf32, #tpu.memory_space<vmem>>, vector<8x128xf32>
    %cst_239 = arith.constant dense<0.000000e+00> : vector<2x128xf32>
    %427 = tpu.matmul %385, %426, %cst_239 {dimension_numbers = #tpu.dot_dimension_numbers<[1], [0], [0], [1], [0, 0, 1, 1], [], []>} : vector<2x8xf32>, vector<8x128xf32>, vector<2x128xf32> -> vector<2x128xf32>
    %428 = arith.addf %425, %427 : vector<2x128xf32>
    %429 = arith.index_cast %c3_i32 : i32 to index
    %c0_240 = arith.constant 0 : index
    %c0_241 = arith.constant 0 : index
    %430 = vector.load %arg2[%429, %c0_240, %c0_241] : memref<6x2x128xf32, #tpu.memory_space<vmem>>, vector<1x2x128xf32>
    %431 = vector.shape_cast %430 : vector<1x2x128xf32> to vector<2x128xf32>
    %432 = vector.shape_cast %428 : vector<2x128xf32> to vector<1x2x128xf32>
    tpu.vector_store %arg2[%429, %c0_240, %c0_241], %432 {strides = array<i32>} : memref<6x2x128xf32, #tpu.memory_space<vmem>>, vector<1x2x128xf32>,
    %c4_i32 = arith.constant 4 : i32
    %433 = arith.index_cast %c4_i32 : i32 to index
    %c0_242 = arith.constant 0 : index
    %c0_243 = arith.constant 0 : index
    %434 = vector.load %arg3[%433, %c0_242, %c0_243] : memref<6x2x128xf32, #tpu.memory_space<vmem>>, vector<1x2x128xf32>
    %435 = vector.shape_cast %434 : vector<1x2x128xf32> to vector<2x128xf32>
    %c40_244 = arith.constant 40 : index
    %c0_245 = arith.constant 0 : index
    %436 = vector.load %arg1[%c40_244, %c0_245] : memref<480x128xf32, #tpu.memory_space<vmem>>, vector<32x128xf32>
    %cst_246 = arith.constant dense<0.000000e+00> : vector<2x128xf32>
    %437 = tpu.matmul %390, %436, %cst_246 {dimension_numbers = #tpu.dot_dimension_numbers<[1], [0], [0], [1], [0, 0, 1, 1], [], []>} : vector<2x32xf32>, vector<32x128xf32>, vector<2x128xf32> -> vector<2x128xf32>
    %438 = arith.addf %435, %437 : vector<2x128xf32>
    %c72_247 = arith.constant 72 : index
    %c0_248 = arith.constant 0 : index
    %439 = vector.load %arg1[%c72_247, %c0_248] : memref<480x128xf32, #tpu.memory_space<vmem>>, vector<32x128xf32>
    %cst_249 = arith.constant dense<0.000000e+00> : vector<2x128xf32>
    %440 = tpu.matmul %360, %439, %cst_249 {dimension_numbers = #tpu.dot_dimension_numbers<[1], [0], [0], [1], [0, 0, 1, 1], [], []>} : vector<2x32xf32>, vector<32x128xf32>, vector<2x128xf32> -> vector<2x128xf32>
    %441 = arith.addf %438, %440 : vector<2x128xf32>
    %442 = arith.negf %441 : vector<2x128xf32>
    %443 = math.exp %442 : vector<2x128xf32>
    %cst_250 = arith.constant 1.000000e+00 : f32
    %444 = vector.broadcast %cst_250 : f32 to vector<2x128xf32>
    %445 = arith.addf %444, %443 : vector<2x128xf32>
    %446 = arith.divf %444, %445 : vector<2x128xf32>
    %447 = math.tanh %441 : vector<2x128xf32>
    %448 = vector.extract_strided_slice %446 {offsets = [0, 0], sizes = [2, 32], strides = [1, 1]} : vector<2x128xf32> to vector<2x32xf32>
    %449 = vector.extract_strided_slice %446 {offsets = [0, 32], sizes = [2, 32], strides = [1, 1]} : vector<2x128xf32> to vector<2x32xf32>
    %450 = vector.extract_strided_slice %446 {offsets = [0, 96], sizes = [2, 32], strides = [1, 1]} : vector<2x128xf32> to vector<2x32xf32>
    %451 = vector.extract_strided_slice %447 {offsets = [0, 64], sizes = [2, 32], strides = [1, 1]} : vector<2x128xf32> to vector<2x32xf32>
    %452 = arith.mulf %449, %358 : vector<2x32xf32>
    %453 = arith.mulf %448, %451 : vector<2x32xf32>
    %454 = arith.addf %452, %453 : vector<2x32xf32>
    %455 = math.tanh %454 : vector<2x32xf32>
    %456 = arith.mulf %450, %455 : vector<2x32xf32>
    %c112_251 = arith.constant 112 : index
    %c0_252 = arith.constant 0 : index
    %457 = vector.load %arg1[%c112_251, %c0_252] : memref<480x128xf32, #tpu.memory_space<vmem>>, vector<32x128xf32>
    %cst_253 = arith.constant dense<0.000000e+00> : vector<2x128xf32>
    %458 = tpu.matmul %456, %457, %cst_253 {dimension_numbers = #tpu.dot_dimension_numbers<[1], [0], [0], [1], [0, 0, 1, 1], [], []>} : vector<2x32xf32>, vector<32x128xf32>, vector<2x128xf32> -> vector<2x128xf32>
    %c144_254 = arith.constant 144 : index
    %c0_255 = arith.constant 0 : index
    %459 = vector.load %arg1[%c144_254, %c0_255] : memref<480x128xf32, #tpu.memory_space<vmem>>, vector<8x128xf32>
    %cst_256 = arith.constant dense<0.000000e+00> : vector<2x128xf32>
    %460 = tpu.matmul %385, %459, %cst_256 {dimension_numbers = #tpu.dot_dimension_numbers<[1], [0], [0], [1], [0, 0, 1, 1], [], []>} : vector<2x8xf32>, vector<8x128xf32>, vector<2x128xf32> -> vector<2x128xf32>
    %461 = arith.addf %458, %460 : vector<2x128xf32>
    %c152_257 = arith.constant 152 : index
    %c0_258 = arith.constant 0 : index
    %462 = vector.load %arg1[%c152_257, %c0_258] : memref<480x128xf32, #tpu.memory_space<vmem>>, vector<8x128xf32>
    %cst_259 = arith.constant dense<0.000000e+00> : vector<2x128xf32>
    %463 = tpu.matmul %391, %462, %cst_259 {dimension_numbers = #tpu.dot_dimension_numbers<[1], [0], [0], [1], [0, 0, 1, 1], [], []>} : vector<2x8xf32>, vector<8x128xf32>, vector<2x128xf32> -> vector<2x128xf32>
    %464 = arith.addf %461, %463 : vector<2x128xf32>
    %c56_260 = arith.constant 56 : index
    %c0_261 = arith.constant 0 : index
    %465 = vector.load %arg0[%c56_260, %c0_261] : memref<80x128xf32, #tpu.memory_space<vmem>>, vector<2x128xf32>
    %466 = arith.addf %464, %465 : vector<2x128xf32>
    %467 = math.tanh %466 : vector<2x128xf32>
    %c160_262 = arith.constant 160 : index
    %c0_263 = arith.constant 0 : index
    %468 = vector.load %arg1[%c160_262, %c0_263] : memref<480x128xf32, #tpu.memory_space<vmem>>, vector<128x8xf32>
    %cst_264 = arith.constant dense<0.000000e+00> : vector<2x8xf32>
    %469 = tpu.matmul %467, %468, %cst_264 {dimension_numbers = #tpu.dot_dimension_numbers<[1], [0], [0], [1], [0, 0, 1, 1], [], []>} : vector<2x128xf32>, vector<128x8xf32>, vector<2x8xf32> -> vector<2x8xf32>
    %c48_265 = arith.constant 48 : index
    %c0_266 = arith.constant 0 : index
    %470 = vector.load %arg0[%c48_265, %c0_266] : memref<80x128xf32, #tpu.memory_space<vmem>>, vector<2x8xf32>
    %471 = arith.addf %469, %470 : vector<2x8xf32>
    %cst_267 = arith.constant dense<0xFF800000> : vector<2xf32>
    %472 = vector.multi_reduction <maximumf>, %471, %cst_267 [1] : vector<2x8xf32> to vector<2xf32>
    %473 = vector.shape_cast %472 : vector<2xf32> to vector<2x1xf32>
    %474 = vector.broadcast %473 : vector<2x1xf32> to vector<2x8xf32>
    %475 = arith.subf %471, %474 : vector<2x8xf32>
    %476 = math.exp %475 : vector<2x8xf32>
    %cst_268 = arith.constant dense<0.000000e+00> : vector<2xf32>
    %477 = vector.multi_reduction <add>, %476, %cst_268 [1] : vector<2x8xf32> to vector<2xf32>
    %478 = vector.shape_cast %477 : vector<2xf32> to vector<2x1xf32>
    %479 = tpu.reciprocal %478 {approx = true} : vector<2x1xf32> -> vector<2x1xf32>
    %480 = vector.broadcast %479 : vector<2x1xf32> to vector<2x8xf32>
    %481 = arith.mulf %476, %480 : vector<2x8xf32>
    %482 = tpu.concatenate %481, %481 in 1 : vector<2x8xf32>, vector<2x8xf32> -> vector<2x16xf32>
    %c288_269 = arith.constant 288 : index
    %c0_270 = arith.constant 0 : index
    %483 = vector.load %arg1[%c288_269, %c0_270] : memref<480x128xf32, #tpu.memory_space<vmem>>, vector<2x16xf32>
    %484 = arith.mulf %482, %483 : vector<2x16xf32>
    %c64_271 = arith.constant 64 : index
    %c0_272 = arith.constant 0 : index
    %485 = vector.load %arg0[%c64_271, %c0_272] : memref<80x128xf32, #tpu.memory_space<vmem>>, vector<16x32xf32>
    %cst_273 = arith.constant dense<0.000000e+00> : vector<2x32xf32>
    %486 = tpu.matmul %484, %485, %cst_273 {dimension_numbers = #tpu.dot_dimension_numbers<[1], [0], [0], [1], [0, 0, 1, 1], [], []>} : vector<2x16xf32>, vector<16x32xf32>, vector<2x32xf32> -> vector<2x32xf32>
    %487 = arith.addf %391, %481 : vector<2x8xf32>
    %c296_274 = arith.constant 296 : index
    %c0_275 = arith.constant 0 : index
    %488 = vector.load %arg1[%c296_274, %c0_275] : memref<480x128xf32, #tpu.memory_space<vmem>>, vector<32x128xf32>
    %cst_276 = arith.constant dense<0.000000e+00> : vector<2x128xf32>
    %489 = tpu.matmul %456, %488, %cst_276 {dimension_numbers = #tpu.dot_dimension_numbers<[1], [0], [0], [1], [0, 0, 1, 1], [], []>} : vector<2x32xf32>, vector<32x128xf32>, vector<2x128xf32> -> vector<2x128xf32>
    %c328_277 = arith.constant 328 : index
    %c0_278 = arith.constant 0 : index
    %490 = vector.load %arg1[%c328_277, %c0_278] : memref<480x128xf32, #tpu.memory_space<vmem>>, vector<32x128xf32>
    %cst_279 = arith.constant dense<0.000000e+00> : vector<2x128xf32>
    %491 = tpu.matmul %486, %490, %cst_279 {dimension_numbers = #tpu.dot_dimension_numbers<[1], [0], [0], [1], [0, 0, 1, 1], [], []>} : vector<2x32xf32>, vector<32x128xf32>, vector<2x128xf32> -> vector<2x128xf32>
    %492 = arith.addf %489, %491 : vector<2x128xf32>
    %c360_280 = arith.constant 360 : index
    %c0_281 = arith.constant 0 : index
    %493 = vector.load %arg1[%c360_280, %c0_281] : memref<480x128xf32, #tpu.memory_space<vmem>>, vector<32x128xf32>
    %cst_282 = arith.constant dense<0.000000e+00> : vector<2x128xf32>
    %494 = tpu.matmul %417, %493, %cst_282 {dimension_numbers = #tpu.dot_dimension_numbers<[1], [0], [0], [1], [0, 0, 1, 1], [], []>} : vector<2x32xf32>, vector<32x128xf32>, vector<2x128xf32> -> vector<2x128xf32>
    %495 = arith.addf %492, %494 : vector<2x128xf32>
    %c392_283 = arith.constant 392 : index
    %c0_284 = arith.constant 0 : index
    %496 = vector.load %arg1[%c392_283, %c0_284] : memref<480x128xf32, #tpu.memory_space<vmem>>, vector<1x128xf32>
    %497 = vector.broadcast %496 : vector<1x128xf32> to vector<2x128xf32>
    %498 = arith.addf %495, %497 : vector<2x128xf32>
    %499 = arith.negf %498 : vector<2x128xf32>
    %500 = math.exp %499 : vector<2x128xf32>
    %cst_285 = arith.constant 1.000000e+00 : f32
    %501 = vector.broadcast %cst_285 : f32 to vector<2x128xf32>
    %502 = arith.addf %501, %500 : vector<2x128xf32>
    %503 = arith.divf %501, %502 : vector<2x128xf32>
    %504 = math.tanh %498 : vector<2x128xf32>
    %505 = vector.extract_strided_slice %503 {offsets = [0, 0], sizes = [2, 32], strides = [1, 1]} : vector<2x128xf32> to vector<2x32xf32>
    %506 = vector.extract_strided_slice %503 {offsets = [0, 32], sizes = [2, 32], strides = [1, 1]} : vector<2x128xf32> to vector<2x32xf32>
    %507 = vector.extract_strided_slice %503 {offsets = [0, 96], sizes = [2, 32], strides = [1, 1]} : vector<2x128xf32> to vector<2x32xf32>
    %508 = vector.extract_strided_slice %504 {offsets = [0, 64], sizes = [2, 32], strides = [1, 1]} : vector<2x128xf32> to vector<2x32xf32>
    %509 = arith.mulf %506, %415 : vector<2x32xf32>
    %510 = arith.mulf %505, %508 : vector<2x32xf32>
    %511 = arith.addf %509, %510 : vector<2x32xf32>
    %512 = math.tanh %511 : vector<2x32xf32>
    %513 = arith.mulf %507, %512 : vector<2x32xf32>
    %c400_286 = arith.constant 400 : index
    %c0_287 = arith.constant 0 : index
    %514 = vector.load %arg1[%c400_286, %c0_287] : memref<480x128xf32, #tpu.memory_space<vmem>>, vector<32x128xf32>
    %cst_288 = arith.constant dense<0.000000e+00> : vector<2x128xf32>
    %515 = tpu.matmul %513, %514, %cst_288 {dimension_numbers = #tpu.dot_dimension_numbers<[1], [0], [0], [1], [0, 0, 1, 1], [], []>} : vector<2x32xf32>, vector<32x128xf32>, vector<2x128xf32> -> vector<2x128xf32>
    %c432_289 = arith.constant 432 : index
    %c0_290 = arith.constant 0 : index
    %516 = vector.load %arg1[%c432_289, %c0_290] : memref<480x128xf32, #tpu.memory_space<vmem>>, vector<32x128xf32>
    %cst_291 = arith.constant dense<0.000000e+00> : vector<2x128xf32>
    %517 = tpu.matmul %486, %516, %cst_291 {dimension_numbers = #tpu.dot_dimension_numbers<[1], [0], [0], [1], [0, 0, 1, 1], [], []>} : vector<2x32xf32>, vector<32x128xf32>, vector<2x128xf32> -> vector<2x128xf32>
    %518 = arith.addf %515, %517 : vector<2x128xf32>
    %c464_292 = arith.constant 464 : index
    %c0_293 = arith.constant 0 : index
    %519 = vector.load %arg1[%c464_292, %c0_293] : memref<480x128xf32, #tpu.memory_space<vmem>>, vector<1x128xf32>
    %520 = vector.broadcast %519 : vector<1x128xf32> to vector<2x128xf32>
    %521 = arith.addf %518, %520 : vector<2x128xf32>
    %c472_294 = arith.constant 472 : index
    %c0_295 = arith.constant 0 : index
    %522 = vector.load %arg1[%c472_294, %c0_295] : memref<480x128xf32, #tpu.memory_space<vmem>>, vector<8x128xf32>
    %cst_296 = arith.constant dense<0.000000e+00> : vector<2x128xf32>
    %523 = tpu.matmul %481, %522, %cst_296 {dimension_numbers = #tpu.dot_dimension_numbers<[1], [0], [0], [1], [0, 0, 1, 1], [], []>} : vector<2x8xf32>, vector<8x128xf32>, vector<2x128xf32> -> vector<2x128xf32>
    %524 = arith.addf %521, %523 : vector<2x128xf32>
    %525 = arith.index_cast %c4_i32 : i32 to index
    %c0_297 = arith.constant 0 : index
    %c0_298 = arith.constant 0 : index
    %526 = vector.load %arg2[%525, %c0_297, %c0_298] : memref<6x2x128xf32, #tpu.memory_space<vmem>>, vector<1x2x128xf32>
    %527 = vector.shape_cast %526 : vector<1x2x128xf32> to vector<2x128xf32>
    %528 = vector.shape_cast %524 : vector<2x128xf32> to vector<1x2x128xf32>
    tpu.vector_store %arg2[%525, %c0_297, %c0_298], %528 {strides = array<i32>} : memref<6x2x128xf32, #tpu.memory_space<vmem>>, vector<1x2x128xf32>,
    %c5_i32 = arith.constant 5 : i32
    %529 = arith.index_cast %c5_i32 : i32 to index
    %c0_299 = arith.constant 0 : index
    %c0_300 = arith.constant 0 : index
    %530 = vector.load %arg3[%529, %c0_299, %c0_300] : memref<6x2x128xf32, #tpu.memory_space<vmem>>, vector<1x2x128xf32>
    %531 = vector.shape_cast %530 : vector<1x2x128xf32> to vector<2x128xf32>
    %c40_301 = arith.constant 40 : index
    %c0_302 = arith.constant 0 : index
    %532 = vector.load %arg1[%c40_301, %c0_302] : memref<480x128xf32, #tpu.memory_space<vmem>>, vector<32x128xf32>
    %cst_303 = arith.constant dense<0.000000e+00> : vector<2x128xf32>
    %533 = tpu.matmul %486, %532, %cst_303 {dimension_numbers = #tpu.dot_dimension_numbers<[1], [0], [0], [1], [0, 0, 1, 1], [], []>} : vector<2x32xf32>, vector<32x128xf32>, vector<2x128xf32> -> vector<2x128xf32>
    %534 = arith.addf %531, %533 : vector<2x128xf32>
    %c72_304 = arith.constant 72 : index
    %c0_305 = arith.constant 0 : index
    %535 = vector.load %arg1[%c72_304, %c0_305] : memref<480x128xf32, #tpu.memory_space<vmem>>, vector<32x128xf32>
    %cst_306 = arith.constant dense<0.000000e+00> : vector<2x128xf32>
    %536 = tpu.matmul %456, %535, %cst_306 {dimension_numbers = #tpu.dot_dimension_numbers<[1], [0], [0], [1], [0, 0, 1, 1], [], []>} : vector<2x32xf32>, vector<32x128xf32>, vector<2x128xf32> -> vector<2x128xf32>
    %537 = arith.addf %534, %536 : vector<2x128xf32>
    %538 = arith.negf %537 : vector<2x128xf32>
    %539 = math.exp %538 : vector<2x128xf32>
    %cst_307 = arith.constant 1.000000e+00 : f32
    %540 = vector.broadcast %cst_307 : f32 to vector<2x128xf32>
    %541 = arith.addf %540, %539 : vector<2x128xf32>
    %542 = arith.divf %540, %541 : vector<2x128xf32>
    %543 = math.tanh %537 : vector<2x128xf32>
    %544 = vector.extract_strided_slice %542 {offsets = [0, 0], sizes = [2, 32], strides = [1, 1]} : vector<2x128xf32> to vector<2x32xf32>
    %545 = vector.extract_strided_slice %542 {offsets = [0, 32], sizes = [2, 32], strides = [1, 1]} : vector<2x128xf32> to vector<2x32xf32>
    %546 = vector.extract_strided_slice %542 {offsets = [0, 96], sizes = [2, 32], strides = [1, 1]} : vector<2x128xf32> to vector<2x32xf32>
    %547 = vector.extract_strided_slice %543 {offsets = [0, 64], sizes = [2, 32], strides = [1, 1]} : vector<2x128xf32> to vector<2x32xf32>
    %548 = arith.mulf %545, %454 : vector<2x32xf32>
    %549 = arith.mulf %544, %547 : vector<2x32xf32>
    %550 = arith.addf %548, %549 : vector<2x32xf32>
    %551 = math.tanh %550 : vector<2x32xf32>
    %552 = arith.mulf %546, %551 : vector<2x32xf32>
    %c112_308 = arith.constant 112 : index
    %c0_309 = arith.constant 0 : index
    %553 = vector.load %arg1[%c112_308, %c0_309] : memref<480x128xf32, #tpu.memory_space<vmem>>, vector<32x128xf32>
    %cst_310 = arith.constant dense<0.000000e+00> : vector<2x128xf32>
    %554 = tpu.matmul %552, %553, %cst_310 {dimension_numbers = #tpu.dot_dimension_numbers<[1], [0], [0], [1], [0, 0, 1, 1], [], []>} : vector<2x32xf32>, vector<32x128xf32>, vector<2x128xf32> -> vector<2x128xf32>
    %c144_311 = arith.constant 144 : index
    %c0_312 = arith.constant 0 : index
    %555 = vector.load %arg1[%c144_311, %c0_312] : memref<480x128xf32, #tpu.memory_space<vmem>>, vector<8x128xf32>
    %cst_313 = arith.constant dense<0.000000e+00> : vector<2x128xf32>
    %556 = tpu.matmul %481, %555, %cst_313 {dimension_numbers = #tpu.dot_dimension_numbers<[1], [0], [0], [1], [0, 0, 1, 1], [], []>} : vector<2x8xf32>, vector<8x128xf32>, vector<2x128xf32> -> vector<2x128xf32>
    %557 = arith.addf %554, %556 : vector<2x128xf32>
    %c152_314 = arith.constant 152 : index
    %c0_315 = arith.constant 0 : index
    %558 = vector.load %arg1[%c152_314, %c0_315] : memref<480x128xf32, #tpu.memory_space<vmem>>, vector<8x128xf32>
    %cst_316 = arith.constant dense<0.000000e+00> : vector<2x128xf32>
    %559 = tpu.matmul %487, %558, %cst_316 {dimension_numbers = #tpu.dot_dimension_numbers<[1], [0], [0], [1], [0, 0, 1, 1], [], []>} : vector<2x8xf32>, vector<8x128xf32>, vector<2x128xf32> -> vector<2x128xf32>
    %560 = arith.addf %557, %559 : vector<2x128xf32>
    %c56_317 = arith.constant 56 : index
    %c0_318 = arith.constant 0 : index
    %561 = vector.load %arg0[%c56_317, %c0_318] : memref<80x128xf32, #tpu.memory_space<vmem>>, vector<2x128xf32>
    %562 = arith.addf %560, %561 : vector<2x128xf32>
    %563 = math.tanh %562 : vector<2x128xf32>
    %c160_319 = arith.constant 160 : index
    %c0_320 = arith.constant 0 : index
    %564 = vector.load %arg1[%c160_319, %c0_320] : memref<480x128xf32, #tpu.memory_space<vmem>>, vector<128x8xf32>
    %cst_321 = arith.constant dense<0.000000e+00> : vector<2x8xf32>
    %565 = tpu.matmul %563, %564, %cst_321 {dimension_numbers = #tpu.dot_dimension_numbers<[1], [0], [0], [1], [0, 0, 1, 1], [], []>} : vector<2x128xf32>, vector<128x8xf32>, vector<2x8xf32> -> vector<2x8xf32>
    %c48_322 = arith.constant 48 : index
    %c0_323 = arith.constant 0 : index
    %566 = vector.load %arg0[%c48_322, %c0_323] : memref<80x128xf32, #tpu.memory_space<vmem>>, vector<2x8xf32>
    %567 = arith.addf %565, %566 : vector<2x8xf32>
    %cst_324 = arith.constant dense<0xFF800000> : vector<2xf32>
    %568 = vector.multi_reduction <maximumf>, %567, %cst_324 [1] : vector<2x8xf32> to vector<2xf32>
    %569 = vector.shape_cast %568 : vector<2xf32> to vector<2x1xf32>
    %570 = vector.broadcast %569 : vector<2x1xf32> to vector<2x8xf32>
    %571 = arith.subf %567, %570 : vector<2x8xf32>
    %572 = math.exp %571 : vector<2x8xf32>
    %cst_325 = arith.constant dense<0.000000e+00> : vector<2xf32>
    %573 = vector.multi_reduction <add>, %572, %cst_325 [1] : vector<2x8xf32> to vector<2xf32>
    %574 = vector.shape_cast %573 : vector<2xf32> to vector<2x1xf32>
    %575 = tpu.reciprocal %574 {approx = true} : vector<2x1xf32> -> vector<2x1xf32>
    %576 = vector.broadcast %575 : vector<2x1xf32> to vector<2x8xf32>
    %577 = arith.mulf %572, %576 : vector<2x8xf32>
    %578 = tpu.concatenate %577, %577 in 1 : vector<2x8xf32>, vector<2x8xf32> -> vector<2x16xf32>
    %c288_326 = arith.constant 288 : index
    %c0_327 = arith.constant 0 : index
    %579 = vector.load %arg1[%c288_326, %c0_327] : memref<480x128xf32, #tpu.memory_space<vmem>>, vector<2x16xf32>
    %580 = arith.mulf %578, %579 : vector<2x16xf32>
    %c64_328 = arith.constant 64 : index
    %c0_329 = arith.constant 0 : index
    %581 = vector.load %arg0[%c64_328, %c0_329] : memref<80x128xf32, #tpu.memory_space<vmem>>, vector<16x32xf32>
    %cst_330 = arith.constant dense<0.000000e+00> : vector<2x32xf32>
    %582 = tpu.matmul %580, %581, %cst_330 {dimension_numbers = #tpu.dot_dimension_numbers<[1], [0], [0], [1], [0, 0, 1, 1], [], []>} : vector<2x16xf32>, vector<16x32xf32>, vector<2x32xf32> -> vector<2x32xf32>
    %583 = arith.addf %487, %577 : vector<2x8xf32>
    %c296_331 = arith.constant 296 : index
    %c0_332 = arith.constant 0 : index
    %584 = vector.load %arg1[%c296_331, %c0_332] : memref<480x128xf32, #tpu.memory_space<vmem>>, vector<32x128xf32>
    %cst_333 = arith.constant dense<0.000000e+00> : vector<2x128xf32>
    %585 = tpu.matmul %552, %584, %cst_333 {dimension_numbers = #tpu.dot_dimension_numbers<[1], [0], [0], [1], [0, 0, 1, 1], [], []>} : vector<2x32xf32>, vector<32x128xf32>, vector<2x128xf32> -> vector<2x128xf32>
    %c328_334 = arith.constant 328 : index
    %c0_335 = arith.constant 0 : index
    %586 = vector.load %arg1[%c328_334, %c0_335] : memref<480x128xf32, #tpu.memory_space<vmem>>, vector<32x128xf32>
    %cst_336 = arith.constant dense<0.000000e+00> : vector<2x128xf32>
    %587 = tpu.matmul %582, %586, %cst_336 {dimension_numbers = #tpu.dot_dimension_numbers<[1], [0], [0], [1], [0, 0, 1, 1], [], []>} : vector<2x32xf32>, vector<32x128xf32>, vector<2x128xf32> -> vector<2x128xf32>
    %588 = arith.addf %585, %587 : vector<2x128xf32>
    %c360_337 = arith.constant 360 : index
    %c0_338 = arith.constant 0 : index
    %589 = vector.load %arg1[%c360_337, %c0_338] : memref<480x128xf32, #tpu.memory_space<vmem>>, vector<32x128xf32>
    %cst_339 = arith.constant dense<0.000000e+00> : vector<2x128xf32>
    %590 = tpu.matmul %513, %589, %cst_339 {dimension_numbers = #tpu.dot_dimension_numbers<[1], [0], [0], [1], [0, 0, 1, 1], [], []>} : vector<2x32xf32>, vector<32x128xf32>, vector<2x128xf32> -> vector<2x128xf32>
    %591 = arith.addf %588, %590 : vector<2x128xf32>
    %c392_340 = arith.constant 392 : index
    %c0_341 = arith.constant 0 : index
    %592 = vector.load %arg1[%c392_340, %c0_341] : memref<480x128xf32, #tpu.memory_space<vmem>>, vector<1x128xf32>
    %593 = vector.broadcast %592 : vector<1x128xf32> to vector<2x128xf32>
    %594 = arith.addf %591, %593 : vector<2x128xf32>
    %595 = arith.negf %594 : vector<2x128xf32>
    %596 = math.exp %595 : vector<2x128xf32>
    %cst_342 = arith.constant 1.000000e+00 : f32
    %597 = vector.broadcast %cst_342 : f32 to vector<2x128xf32>
    %598 = arith.addf %597, %596 : vector<2x128xf32>
    %599 = arith.divf %597, %598 : vector<2x128xf32>
    %600 = math.tanh %594 : vector<2x128xf32>
    %601 = vector.extract_strided_slice %599 {offsets = [0, 0], sizes = [2, 32], strides = [1, 1]} : vector<2x128xf32> to vector<2x32xf32>
    %602 = vector.extract_strided_slice %599 {offsets = [0, 32], sizes = [2, 32], strides = [1, 1]} : vector<2x128xf32> to vector<2x32xf32>
    %603 = vector.extract_strided_slice %599 {offsets = [0, 96], sizes = [2, 32], strides = [1, 1]} : vector<2x128xf32> to vector<2x32xf32>
    %604 = vector.extract_strided_slice %600 {offsets = [0, 64], sizes = [2, 32], strides = [1, 1]} : vector<2x128xf32> to vector<2x32xf32>
    %605 = arith.mulf %602, %511 : vector<2x32xf32>
    %606 = arith.mulf %601, %604 : vector<2x32xf32>
    %607 = arith.addf %605, %606 : vector<2x32xf32>
    %608 = math.tanh %607 : vector<2x32xf32>
    %609 = arith.mulf %603, %608 : vector<2x32xf32>
    %c400_343 = arith.constant 400 : index
    %c0_344 = arith.constant 0 : index
    %610 = vector.load %arg1[%c400_343, %c0_344] : memref<480x128xf32, #tpu.memory_space<vmem>>, vector<32x128xf32>
    %cst_345 = arith.constant dense<0.000000e+00> : vector<2x128xf32>
    %611 = tpu.matmul %609, %610, %cst_345 {dimension_numbers = #tpu.dot_dimension_numbers<[1], [0], [0], [1], [0, 0, 1, 1], [], []>} : vector<2x32xf32>, vector<32x128xf32>, vector<2x128xf32> -> vector<2x128xf32>
    %c432_346 = arith.constant 432 : index
    %c0_347 = arith.constant 0 : index
    %612 = vector.load %arg1[%c432_346, %c0_347] : memref<480x128xf32, #tpu.memory_space<vmem>>, vector<32x128xf32>
    %cst_348 = arith.constant dense<0.000000e+00> : vector<2x128xf32>
    %613 = tpu.matmul %582, %612, %cst_348 {dimension_numbers = #tpu.dot_dimension_numbers<[1], [0], [0], [1], [0, 0, 1, 1], [], []>} : vector<2x32xf32>, vector<32x128xf32>, vector<2x128xf32> -> vector<2x128xf32>
    %614 = arith.addf %611, %613 : vector<2x128xf32>
    %c464_349 = arith.constant 464 : index
    %c0_350 = arith.constant 0 : index
    %615 = vector.load %arg1[%c464_349, %c0_350] : memref<480x128xf32, #tpu.memory_space<vmem>>, vector<1x128xf32>
    %616 = vector.broadcast %615 : vector<1x128xf32> to vector<2x128xf32>
    %617 = arith.addf %614, %616 : vector<2x128xf32>
    %c472_351 = arith.constant 472 : index
    %c0_352 = arith.constant 0 : index
    %618 = vector.load %arg1[%c472_351, %c0_352] : memref<480x128xf32, #tpu.memory_space<vmem>>, vector<8x128xf32>
    %cst_353 = arith.constant dense<0.000000e+00> : vector<2x128xf32>
    %619 = tpu.matmul %577, %618, %cst_353 {dimension_numbers = #tpu.dot_dimension_numbers<[1], [0], [0], [1], [0, 0, 1, 1], [], []>} : vector<2x8xf32>, vector<8x128xf32>, vector<2x128xf32> -> vector<2x128xf32>
    %620 = arith.addf %617, %619 : vector<2x128xf32>
    %621 = arith.index_cast %c5_i32 : i32 to index
    %c0_354 = arith.constant 0 : index
    %c0_355 = arith.constant 0 : index
    %622 = vector.load %arg2[%621, %c0_354, %c0_355] : memref<6x2x128xf32, #tpu.memory_space<vmem>>, vector<1x2x128xf32>
    %623 = vector.shape_cast %622 : vector<1x2x128xf32> to vector<2x128xf32>
    %624 = vector.shape_cast %620 : vector<2x128xf32> to vector<1x2x128xf32>
    tpu.vector_store %arg2[%621, %c0_354, %c0_355], %624 {strides = array<i32>} : memref<6x2x128xf32, #tpu.memory_space<vmem>>, vector<1x2x128xf32>,
    %c6_i32 = arith.constant 6 : i32
    return
  }
}

</mosaic_0001>

<llo_original>
// kernel: squeeze.15
$region0: #{squeeze.15}
  %s0 = inlined_call_operand.vmem [shape: f32[1,8,8,16], index: 0, kind: input, shape index: {}]
  %s1 = inlined_call_operand.vmem [shape: f32[8,128], index: 1, kind: output, shape index: {}]
  %v2 = vld [vmem:[%s0] ss:$8 sm:$0xf]
  %v3 = vld [vmem:[%s0] ss:$8 sm:$0xf0]
  %vm4 = vcmask 1047556
  %v5 = vsel %vm4, %v3, %v2
  %vm6 = vcmask 130048
  %7 = vst.msk [vmem:[%s1] sm:$0xff] %vm6, %v5
  %s8 = scalar_lea.vmem %s0, 7
  %v9 = vld [vmem:[%s8] ss:$8 sm:$0xf]
  %s10 = scalar_lea.vmem %s0, 7
  %v11 = vld [vmem:[%s10] ss:$8 sm:$0xf0]
  %vm12 = vcmask 1047556
  %v13 = vsel %vm12, %v11, %v9
  %14 = vrot.lane.b32.xlu0 %v13, 112
  %v15 = vpop.permute.xlu0 %14
  %vm16 = vcmask 1048448
  %17 = vst.msk [vmem:[%s1] sm:$0xff] %vm16, %v15
  %s18 = scalar_lea.vmem %s0, 6
  %v19 = vld [vmem:[%s18] ss:$8 sm:$0xf]
  %s20 = scalar_lea.vmem %s0, 6
  %v21 = vld [vmem:[%s20] ss:$8 sm:$0xf0]
  %vm22 = vcmask 1047556
  %v23 = vsel %vm22, %v21, %v19
  %24 = vrot.lane.b32.xlu0 %v23, 96
  %v25 = vpop.permute.xlu0 %24
  %vm26 = vcmask 917248
  %27 = vst.msk [vmem:[%s1] sm:$0xff] %vm26, %v25
  %s28 = scalar_lea.vmem %s0, 5
  %v29 = vld [vmem:[%s28] ss:$8 sm:$0xf]
  %s30 = scalar_lea.vmem %s0, 5
  %v31 = vld [vmem:[%s30] ss:$8 sm:$0xf0]
  %vm32 = vcmask 1047556
  %v33 = vsel %vm32, %v31, %v29
  %34 = vrot.lane.b32.xlu0 %v33, 80
  %v35 = vpop.permute.xlu0 %34
  %vm36 = vcmask 786048
  %37 = vst.msk [vmem:[%s1] sm:$0xff] %vm36, %v35
  %s38 = scalar_lea.vmem %s0, 4
  %v39 = vld [vmem:[%s38] ss:$8 sm:$0xf]
  %s40 = scalar_lea.vmem %s0, 4
  %v41 = vld [vmem:[%s40] ss:$8 sm:$0xf0]
  %vm42 = vcmask 1047556
  %v43 = vsel %vm42, %v41, %v39
  %44 = vrot.lane.b32.xlu0 %v43, 64
  %v45 = vpop.permute.xlu0 %44
  %vm46 = vcmask 654848
  %47 = vst.msk [vmem:[%s1] sm:$0xff] %vm46, %v45
  %s48 = scalar_lea.vmem %s0, 3
  %v49 = vld [vmem:[%s48] ss:$8 sm:$0xf]
  %s50 = scalar_lea.vmem %s0, 3
  %v51 = vld [vmem:[%s50] ss:$8 sm:$0xf0]
  %vm52 = vcmask 1047556
  %v53 = vsel %vm52, %v51, %v49
  %54 = vrot.lane.b32.xlu0 %v53, 48
  %v55 = vpop.permute.xlu0 %54
  %vm56 = vcmask 523648
  %57 = vst.msk [vmem:[%s1] sm:$0xff] %vm56, %v55
  %s58 = scalar_lea.vmem %s0, 2
  %v59 = vld [vmem:[%s58] ss:$8 sm:$0xf]
  %s60 = scalar_lea.vmem %s0, 2
  %v61 = vld [vmem:[%s60] ss:$8 sm:$0xf0]
  %vm62 = vcmask 1047556
  %v63 = vsel %vm62, %v61, %v59
  %64 = vrot.lane.b32.xlu0 %v63, 32
  %v65 = vpop.permute.xlu0 %64
  %vm66 = vcmask 392448
  %67 = vst.msk [vmem:[%s1] sm:$0xff] %vm66, %v65
  %s68 = scalar_lea.vmem %s0, 1
  %v69 = vld [vmem:[%s68] ss:$8 sm:$0xf]
  %s70 = scalar_lea.vmem %s0, 1
  %v71 = vld [vmem:[%s70] ss:$8 sm:$0xf0]
  %vm72 = vcmask 1047556
  %v73 = vsel %vm72, %v71, %v69
  %74 = vrot.lane.b32.xlu0 %v73, 16
  %v75 = vpop.permute.xlu0 %74
  %vm76 = vcmask 261248
  %77 = vst.msk [vmem:[%s1] sm:$0xff] %vm76, %v75

// kernel: run_decoder.3
$region0: #{run_decoder.3}
  #allocation0 [shape = 'u32[]', space=smem, size = 0x4, offset = 0x4, fixed_abs, tag = 'smem constant byte address 0x4 - core index']
  #allocation1 [shape = 'u32[72,128]{1,0:T(1,128)}', space=vmem, size = 0x9000, scoped, tag = 'internal scratch']
  #allocation2 [shape = 'f32[6,2,128]{2,1,0:T(2,128)}', space=vmem, size = 0x1800, scoped, tag = 'scratch operand']
  %s0 = inlined_call_operand.vmem [shape: f32[80,128], index: 0, kind: input, shape index: {}]
  %s1 = inlined_call_operand.vmem [shape: f32[480,128], index: 1, kind: input, shape index: {}]
  %s2 = inlined_call_operand.vmem [shape: f32[6,2,128], index: 2, kind: output, shape index: {}]
  %s3 = sld [smem:[#allocation0]]
  $region18: #{run_decoder.3} parent=0
    _
  %s5 = ssub.s32 1, %s3
  %s6 = scalar_select 0, %s5, %s3
  // Predicated region
  $region2: #{run_decoder.3} parent=0 // pred_check
    _
  $region3: #{run_decoder.3} parent=0 // pred_check_branch
    %8 = sbr.rel (0) target = $region5
  $region4: #{run_decoder.3} parent=0 // pred_region
    _
  $region5: #{run_decoder.3} parent=0 // pred_fallthru
    _
  // Predicated region
  $region6: #{run_decoder.3} parent=0 // pred_check
    _
  $region7: #{run_decoder.3} parent=0 // pred_check_branch
    %10 = sbr.rel (0) target = $region9
  $region8: #{run_decoder.3} parent=0 // pred_region
    _
  $region9: #{run_decoder.3} parent=0 // pred_fallthru
    _
  %v11 = vld [vmem:[%s0] sm:$0xff]
  %v12 = vld [vmem:[%s0 + $0x8] sm:$0xf]
  %v13 = vld [vmem:[%s1] sm:$0xff]
  %vm14 = vcmask 64512
  %v16 = vsel %vm14, %v11, 0
  %v19 = vsel %vm14, %v12, 0
  %21 = vmatpush.msra.mxu0 0.0
  %22 = vmatpush.msra.mxu0 0.0
  %23 = vmatpush.msra.mxu0 0.0
  %24 = vmatpush.msra.mxu0 0.0
  %25 = vmatpush.msra.mxu0 0.0
  %26 = vmatpush.msra.mxu0 0.0
  %27 = vmatpush.msra.mxu0 0.0
  %28 = vmatpush.msra.mxu0 0.0
  %29 = vmatpush.msra.mxu0 0.0
  %30 = vmatpush.msra.mxu0 0.0
  %31 = vmatpush.msra.mxu0 0.0
  %32 = vmatpush.msra.mxu0 0.0
  %33 = vmatpush.msra.mxu0 0.0
  %34 = vmatpush.msra.mxu0 0.0
  %35 = vmatpush.msra.mxu0 0.0
  %36 = vmatpush.msra.mxu0 %v13
  %37 = vmatmul.f32.gmra.mxu0 %v16
  %v38 = vpop.f32.mrf.mxu0
  %v39 = vadd.f32 0.0, %v38
  %40 = vmatmul.f32.gmra.mxu0 %v19
  %v41 = vpop.f32.mrf.mxu0
  %v42 = vadd.f32 0.0, %v41
  %43 = vdwg.mxu0
  %v44 = vmax.f32 %v39, 0.0
  %v45 = vmax.f32 %v42, 0.0
  %v46 = vld [vmem:[%s0 + $0x10] sm:$0xff]
  %v47 = vld [vmem:[%s0 + $0x18] sm:$0xf]
  %v48 = vmul.f32 %v44, %v46
  %v49 = vmul.f32 %v45, %v47
  %v50 = vld [vmem:[%s1 + $0x8] sm:$0xff]
  %v51 = vld [vmem:[%s1 + $0x10] sm:$0xff]
  %vm52 = vcmask 130048
  %v54 = vsel %vm52, %v48, 0
  %v57 = vsel %vm52, %v49, 0
  %59 = vmatpush.msra.mxu0 0.0
  %60 = vmatpush.msra.mxu0 0.0
  %61 = vmatpush.msra.mxu0 0.0
  %62 = vmatpush.msra.mxu0 0.0
  %63 = vmatpush.msra.mxu0 0.0
  %64 = vmatpush.msra.mxu0 0.0
  %65 = vmatpush.msra.mxu0 0.0
  %66 = vmatpush.msra.mxu0 0.0
  %67 = vmatpush.msra.mxu0 0.0
  %68 = vmatpush.msra.mxu0 0.0
  %69 = vmatpush.msra.mxu0 0.0
  %70 = vmatpush.msra.mxu0 0.0
  %71 = vmatpush.msra.mxu0 0.0
  %72 = vmatpush.msra.mxu0 0.0
  %73 = vmatpush.msra.mxu0 %v51
  %74 = vmatpush.msra.mxu0 %v50
  %75 = vmatmul.f32.gmra.mxu0 %v54
  %v76 = vpop.f32.mrf.mxu0
  %v77 = vadd.f32 0.0, %v76
  %78 = vmatmul.f32.gmra.mxu0 %v57
  %v79 = vpop.f32.mrf.mxu0
  %v80 = vadd.f32 0.0, %v79
  %81 = vdwg.mxu0
  %v82 = vmax.f32 %v77, 0.0
  %v83 = vmax.f32 %v80, 0.0
  %v84 = vld [vmem:[%s0 + $0x20] sm:$0xff]
  %v85 = vld [vmem:[%s0 + $0x28] sm:$0xf]
  %v86 = vmul.f32 %v82, %v84
  %v87 = vmul.f32 %v83, %v85
  %v88 = vld [vmem:[%s1 + $0x18] sm:$0xff]
  %v89 = vld [vmem:[%s1 + $0x20] sm:$0xff]
  %v90 = vld [vmem:[%s1 + $0x68] sm:$0x1]
  %v91 = vperm.slane %v90, 0
  %v93 = vsel %vm52, %v86, 0
  %v96 = vsel %vm52, %v87, 0
  %98 = vmatpush.msra.mxu0 0.0
  %99 = vmatpush.msra.mxu0 0.0
  %100 = vmatpush.msra.mxu0 0.0
  %101 = vmatpush.msra.mxu0 0.0
  %102 = vmatpush.msra.mxu0 0.0
  %103 = vmatpush.msra.mxu0 0.0
  %104 = vmatpush.msra.mxu0 0.0
  %105 = vmatpush.msra.mxu0 0.0
  %106 = vmatpush.msra.mxu0 0.0
  %107 = vmatpush.msra.mxu0 0.0
  %108 = vmatpush.msra.mxu0 0.0
  %109 = vmatpush.msra.mxu0 0.0
  %110 = vmatpush.msra.mxu0 0.0
  %111 = vmatpush.msra.mxu0 0.0
  %112 = vmatpush.msra.mxu0 %v89
  %113 = vmatpush.msra.mxu0 %v88
  %114 = vmatmul.f32.gmra.mxu0 %v93
  %v115 = vpop.f32.mrf.mxu0
  %v116 = vadd.f32 %v91, %v115
  %117 = vmatmul.f32.gmra.mxu0 %v96
  %v118 = vpop.f32.mrf.mxu0
  %v119 = vadd.f32 %v91, %v118
  %120 = vdwg.mxu0
  %121 = vst [vmem:[#allocation2] sm:$0x3] %v116
  %s122 = scalar_lea.vmem [#allocation2], 2
  %123 = vst [vmem:[%s122 - $0x2] sm:$0xc] %v116
  %s124 = scalar_lea.vmem [#allocation2], 4
  %125 = vst [vmem:[%s124 - $0x4] sm:$0x30] %v116
  %s126 = scalar_lea.vmem [#allocation2], 6
  %127 = vst [vmem:[%s126 - $0x6] sm:$0xc0] %v116
  %s128 = scalar_lea.vmem [#allocation2], 8
  %129 = vst [vmem:[%s128] sm:$0x3] %v119
  %s130 = scalar_lea.vmem [#allocation2], 10
  %131 = vst [vmem:[%s130 - $0x2] sm:$0xc] %v119
  %v132 = vld [vmem:[#allocation2] sm:$0x3]
  %v133 = vld [vmem:[%s1 + $0x28] sm:$0xff]
  %v134 = vld [vmem:[%s1 + $0x30] sm:$0xff]
  %v135 = vld [vmem:[%s1 + $0x38] sm:$0xff]
  %v136 = vld [vmem:[%s1 + $0x40] sm:$0xff]
  %vm137 = vcmask 261120
  %v139 = vsel %vm137, 0.0, 0
  %141 = vmatpush.msra.mxu0 0.0
  %142 = vmatpush.msra.mxu0 0.0
  %143 = vmatpush.msra.mxu0 0.0
  %144 = vmatpush.msra.mxu0 0.0
  %145 = vmatpush.msra.mxu0 0.0
  %146 = vmatpush.msra.mxu0 0.0
  %147 = vmatpush.msra.mxu0 0.0
  %148 = vmatpush.msra.mxu0 0.0
  %149 = vmatpush.msra.mxu0 0.0
  %150 = vmatpush.msra.mxu0 0.0
  %151 = vmatpush.msra.mxu0 0.0
  %152 = vmatpush.msra.mxu0 0.0
  %153 = vmatpush.msra.mxu0 %v136
  %154 = vmatpush.msra.mxu0 %v135
  %155 = vmatpush.msra.mxu0 %v134
  %156 = vmatpush.msra.mxu0 %v133
  %157 = vmatmul.f32.gmra.mxu0 %v139
  %v158 = vpop.f32.mrf.mxu0
  %v159 = vadd.f32 0.0, %v158
  %160 = vdwg.mxu0
  %v161 = vadd.f32 %v132, %v159
  %v162 = vld [vmem:[%s1 + $0x48] sm:$0xff]
  %v163 = vld [vmem:[%s1 + $0x50] sm:$0xff]
  %v164 = vld [vmem:[%s1 + $0x58] sm:$0xff]
  %v165 = vld [vmem:[%s1 + $0x60] sm:$0xff]
  %166 = vmatpush.msra.mxu0 0.0
  %167 = vmatpush.msra.mxu0 0.0
  %168 = vmatpush.msra.mxu0 0.0
  %169 = vmatpush.msra.mxu0 0.0
  %170 = vmatpush.msra.mxu0 0.0
  %171 = vmatpush.msra.mxu0 0.0
  %172 = vmatpush.msra.mxu0 0.0
  %173 = vmatpush.msra.mxu0 0.0
  %174 = vmatpush.msra.mxu0 0.0
  %175 = vmatpush.msra.mxu0 0.0
  %176 = vmatpush.msra.mxu0 0.0
  %177 = vmatpush.msra.mxu0 0.0
  %178 = vmatpush.msra.mxu0 %v165
  %179 = vmatpush.msra.mxu0 %v164
  %180 = vmatpush.msra.mxu0 %v163
  %181 = vmatpush.msra.mxu0 %v162
  %182 = vmatmul.f32.gmra.mxu0 %v139
  %v183 = vpop.f32.mrf.mxu0
  %v184 = vadd.f32 0.0, %v183
  %185 = vdwg.mxu0
  %v186 = vadd.f32 %v161, %v184
  %v187 = vxor.u32 %v186, 2147483648
  %v188 = vmul.f32 %v187, 1.442695
  %v189 = vpow.pop %v188
  %v190 = vadd.f32 %v189, 1.0
  %v191 = vrcp.pop %v190
  %v192 = vmul.f32 %v190, %v191
  %v193 = vsub.f32 1.0, %v192
  %v194 = vmul.f32 %v191, %v193
  %v195 = vadd.f32 %v191, %v194
  %vm196 = vweird.f32 %v190
  %vm197 = vweird.f32 %v191
  %vm198 = vmor %vm196, %vm197
  %v199 = vsel %vm198, %v191, %v195
  %v200 = vand.u32 2147483647, %v190
  %vm201 = vcmp.eq.f32.partialorder %v200, 8.507059e+37
  %v202 = vand.u32 %v190, 2147483648
  %v203 = vor.u32 1.1754944e-38, %v202
  %v204 = vsel %vm201, %v203, %v199
  %v205 = vmul.f32 1.0, %v204
  %v206 = vtanh.pop %v186
  %v207 = vmul.f32 %v205, 0.0
  %209 = vrot.lane.b32.xlu0 %v206, 64
  %v210 = vpop.permute.xlu0 %209
  %v212 = vmul.f32 %v205, %v210
  %214 = vrot.lane.b32.xlu0 %v212, 32
  %v215 = vpop.permute.xlu0 %214
  %v217 = vadd.f32 %v207, %v215
  %v218 = vtanh.pop %v217
  %220 = vrot.lane.b32.xlu0 %v218, 64
  %v221 = vpop.permute.xlu0 %220
  %v223 = vmul.f32 %v205, %v221
  %v224 = vld [vmem:[%s1 + $0x70] sm:$0xff]
  %v225 = vld [vmem:[%s1 + $0x78] sm:$0xff]
  %v226 = vld [vmem:[%s1 + $0x80] sm:$0xff]
  %v227 = vld [vmem:[%s1 + $0x88] sm:$0xff]
  %v228 = vld [vmem:[%s1 + $0x90] sm:$0xff]
  %v229 = vsel %vm14, 0.0, 0
  %231 = vmatpush.msra.mxu0 0.0
  %232 = vmatpush.msra.mxu0 0.0
  %233 = vmatpush.msra.mxu0 0.0
  %234 = vmatpush.msra.mxu0 0.0
  %235 = vmatpush.msra.mxu0 0.0
  %236 = vmatpush.msra.mxu0 0.0
  %237 = vmatpush.msra.mxu0 0.0
  %238 = vmatpush.msra.mxu0 0.0
  %239 = vmatpush.msra.mxu0 0.0
  %240 = vmatpush.msra.mxu0 0.0
  %241 = vmatpush.msra.mxu0 0.0
  %242 = vmatpush.msra.mxu0 0.0
  %243 = vmatpush.msra.mxu0 0.0
  %244 = vmatpush.msra.mxu0 0.0
  %245 = vmatpush.msra.mxu0 0.0
  %246 = vmatpush.msra.mxu0 %v228
  %247 = vmatmul.f32.gmra.mxu0 %v229
  %v248 = vpop.f32.mrf.mxu0
  %v249 = vadd.f32 0.0, %v248
  %250 = vdwg.mxu0
  %252 = vrot.lane.b32.xlu0 %v223, 32
  %v253 = vpop.permute.xlu0 %252
  %v254 = vsel %vm137, %v253, 0
  %256 = vmatpush.msra.mxu0 0.0
  %257 = vmatpush.msra.mxu0 0.0
  %258 = vmatpush.msra.mxu0 0.0
  %259 = vmatpush.msra.mxu0 0.0
  %260 = vmatpush.msra.mxu0 0.0
  %261 = vmatpush.msra.mxu0 0.0
  %262 = vmatpush.msra.mxu0 0.0
  %263 = vmatpush.msra.mxu0 0.0
  %264 = vmatpush.msra.mxu0 0.0
  %265 = vmatpush.msra.mxu0 0.0
  %266 = vmatpush.msra.mxu0 0.0
  %267 = vmatpush.msra.mxu0 0.0
  %268 = vmatpush.msra.mxu0 %v227
  %269 = vmatpush.msra.mxu0 %v226
  %270 = vmatpush.msra.mxu0 %v225
  %271 = vmatpush.msra.mxu0 %v224
  %272 = vmatmul.f32.gmra.mxu0 %v254
  %v273 = vpop.f32.mrf.mxu0
  %v274 = vadd.f32 %v249, %v273
  %275 = vdwg.mxu0
  %v276 = vld [vmem:[%s1 + $0x98] sm:$0xff]
  %277 = vmatpush.msra.mxu0 0.0
  %278 = vmatpush.msra.mxu0 0.0
  %279 = vmatpush.msra.mxu0 0.0
  %280 = vmatpush.msra.mxu0 0.0
  %281 = vmatpush.msra.mxu0 0.0
  %282 = vmatpush.msra.mxu0 0.0
  %283 = vmatpush.msra.mxu0 0.0
  %284 = vmatpush.msra.mxu0 0.0
  %285 = vmatpush.msra.mxu0 0.0
  %286 = vmatpush.msra.mxu0 0.0
  %287 = vmatpush.msra.mxu0 0.0
  %288 = vmatpush.msra.mxu0 0.0
  %289 = vmatpush.msra.mxu0 0.0
  %290 = vmatpush.msra.mxu0 0.0
  %291 = vmatpush.msra.mxu0 0.0
  %292 = vmatpush.msra.mxu0 %v276
  %293 = vmatmul.f32.gmra.mxu0 %v229
  %v294 = vpop.f32.mrf.mxu0
  %v295 = vadd.f32 0.0, %v294
  %296 = vdwg.mxu0
  %v297 = vadd.f32 %v274, %v295
  %v298 = vld [vmem:[%s0 + $0x38] sm:$0x3]
  %v299 = vadd.f32 %v297, %v298
  %v300 = vtanh.pop %v299
  %v301 = vld [vmem:[%s1 + $0xa0] sm:$0xff]
  %v302 = vld [vmem:[%s1 + $0xa8] sm:$0xff]
  %v303 = vld [vmem:[%s1 + $0xb0] sm:$0xff]
  %v304 = vld [vmem:[%s1 + $0xb8] sm:$0xff]
  %v305 = vld [vmem:[%s1 + $0xc0] sm:$0xff]
  %v306 = vld [vmem:[%s1 + $0xc8] sm:$0xff]
  %v307 = vld [vmem:[%s1 + $0xd0] sm:$0xff]
  %v308 = vld [vmem:[%s1 + $0xd8] sm:$0xff]
  %v309 = vld [vmem:[%s1 + $0xe0] sm:$0xff]
  %v310 = vld [vmem:[%s1 + $0xe8] sm:$0xff]
  %v311 = vld [vmem:[%s1 + $0xf0] sm:$0xff]
  %v312 = vld [vmem:[%s1 + $0xf8] sm:$0xff]
  %v313 = vld [vmem:[%s1 + $0x100] sm:$0xff]
  %v314 = vld [vmem:[%s1 + $0x108] sm:$0xff]
  %v315 = vld [vmem:[%s1 + $0x110] sm:$0xff]
  %v316 = vld [vmem:[%s1 + $0x118] sm:$0xff]
  %v317 = vld [vmem:[%s0 + $0x30] sm:$0x3]
  %318 = vmatpush.msra.mxu0 %v316
  %319 = vmatpush.msra.mxu0 %v315
  %320 = vmatpush.msra.mxu0 %v314
  %321 = vmatpush.msra.mxu0 %v313
  %322 = vmatpush.msra.mxu0 %v312
  %323 = vmatpush.msra.mxu0 %v311
  %324 = vmatpush.msra.mxu0 %v310
  %325 = vmatpush.msra.mxu0 %v309
  %326 = vmatpush.msra.mxu0 %v308
  %327 = vmatpush.msra.mxu0 %v307
  %328 = vmatpush.msra.mxu0 %v306
  %329 = vmatpush.msra.mxu0 %v305
  %330 = vmatpush.msra.mxu0 %v304
  %331 = vmatpush.msra.mxu0 %v303
  %332 = vmatpush.msra.mxu0 %v302
  %333 = vmatpush.msra.mxu0 %v301
  %334 = vmatmul.f32.gmra.mxu0 %v300
  %v335 = vpop.f32.mrf.mxu0
  %v336 = vadd.f32 %v317, %v335
  %337 = vdwg.mxu0
  %vm338 = vcmask 58368
  %v339 = vsel %vm338, %v336, -inf
  %340 = vmax.xlane.f32.xlu0 %v339
  %v341 = vpop.xlane.xlu0 %340
  %v342 = vsub.f32 %v336, %v341
  %v343 = vmul.f32 %v342, 1.442695
  %v344 = vpow.pop %v343
  %v345 = vsel %vm338, %v344, 0.0
  %346 = vadd.xlane.f32.xlu0 %v345
  %v347 = vpop.xlane.xlu0 %346
  %v348 = vrcp.pop %v347
  %v349 = vmul.f32 %v344, %v348
  %351 = vrot.lane.b32.xlu0 %v349, 8
  %v352 = vpop.permute.xlu0 %351
  %v354 = vsel %vm14, %v349, %v352
  %v355 = vld [vmem:[%s1 + $0x120] sm:$0x3]
  %v356 = vmul.f32 %v354, %v355
  %v357 = vld [vmem:[%s0 + $0x40] sm:$0xff]
  %v358 = vld [vmem:[%s0 + $0x48] sm:$0xff]
  %v360 = vsel %vm52, %v356, 0
  %362 = vmatpush.msra.mxu0 0.0
  %363 = vmatpush.msra.mxu0 0.0
  %364 = vmatpush.msra.mxu0 0.0
  %365 = vmatpush.msra.mxu0 0.0
  %366 = vmatpush.msra.mxu0 0.0
  %367 = vmatpush.msra.mxu0 0.0
  %368 = vmatpush.msra.mxu0 0.0
  %369 = vmatpush.msra.mxu0 0.0
  %370 = vmatpush.msra.mxu0 0.0
  %371 = vmatpush.msra.mxu0 0.0
  %372 = vmatpush.msra.mxu0 0.0
  %373 = vmatpush.msra.mxu0 0.0
  %374 = vmatpush.msra.mxu0 0.0
  %375 = vmatpush.msra.mxu0 0.0
  %376 = vmatpush.msra.mxu0 %v358
  %377 = vmatpush.msra.mxu0 %v357
  %378 = vmatmul.f32.gmra.mxu0 %v360
  %v379 = vpop.f32.mrf.mxu0
  %v380 = vadd.f32 0.0, %v379
  %381 = vdwg.mxu0
  %v382 = vadd.f32 %v349, 0.0
  %v383 = vld [vmem:[%s1 + $0x128] sm:$0xff]
  %v384 = vld [vmem:[%s1 + $0x130] sm:$0xff]
  %v385 = vld [vmem:[%s1 + $0x138] sm:$0xff]
  %v386 = vld [vmem:[%s1 + $0x140] sm:$0xff]
  %v387 = vld [vmem:[%s1 + $0x148] sm:$0xff]
  %v388 = vld [vmem:[%s1 + $0x150] sm:$0xff]
  %v389 = vld [vmem:[%s1 + $0x158] sm:$0xff]
  %v390 = vld [vmem:[%s1 + $0x160] sm:$0xff]
  %v392 = vsel %vm137, %v380, 0
  %394 = vmatpush.msra.mxu0 0.0
  %395 = vmatpush.msra.mxu0 0.0
  %396 = vmatpush.msra.mxu0 0.0
  %397 = vmatpush.msra.mxu0 0.0
  %398 = vmatpush.msra.mxu0 0.0
  %399 = vmatpush.msra.mxu0 0.0
  %400 = vmatpush.msra.mxu0 0.0
  %401 = vmatpush.msra.mxu0 0.0
  %402 = vmatpush.msra.mxu0 0.0
  %403 = vmatpush.msra.mxu0 0.0
  %404 = vmatpush.msra.mxu0 0.0
  %405 = vmatpush.msra.mxu0 0.0
  %406 = vmatpush.msra.mxu0 %v390
  %407 = vmatpush.msra.mxu0 %v389
  %408 = vmatpush.msra.mxu0 %v388
  %409 = vmatpush.msra.mxu0 %v387
  %410 = vmatmul.f32.gmra.mxu0 %v392
  %v411 = vpop.f32.mrf.mxu0
  %v412 = vadd.f32 0.0, %v411
  %413 = vdwg.mxu0
  %414 = vmatpush.msra.mxu0 0.0
  %415 = vmatpush.msra.mxu0 0.0
  %416 = vmatpush.msra.mxu0 0.0
  %417 = vmatpush.msra.mxu0 0.0
  %418 = vmatpush.msra.mxu0 0.0
  %419 = vmatpush.msra.mxu0 0.0
  %420 = vmatpush.msra.mxu0 0.0
  %421 = vmatpush.msra.mxu0 0.0
  %422 = vmatpush.msra.mxu0 0.0
  %423 = vmatpush.msra.mxu0 0.0
  %424 = vmatpush.msra.mxu0 0.0
  %425 = vmatpush.msra.mxu0 0.0
  %426 = vmatpush.msra.mxu0 %v386
  %427 = vmatpush.msra.mxu0 %v385
  %428 = vmatpush.msra.mxu0 %v384
  %429 = vmatpush.msra.mxu0 %v383
  %430 = vmatmul.f32.gmra.mxu0 %v254
  %v431 = vpop.f32.mrf.mxu0
  %v432 = vadd.f32 %v412, %v431
  %433 = vdwg.mxu0
  %v434 = vld [vmem:[%s1 + $0x168] sm:$0xff]
  %v435 = vld [vmem:[%s1 + $0x170] sm:$0xff]
  %v436 = vld [vmem:[%s1 + $0x178] sm:$0xff]
  %v437 = vld [vmem:[%s1 + $0x180] sm:$0xff]
  %438 = vmatpush.msra.mxu0 0.0
  %439 = vmatpush.msra.mxu0 0.0
  %440 = vmatpush.msra.mxu0 0.0
  %441 = vmatpush.msra.mxu0 0.0
  %442 = vmatpush.msra.mxu0 0.0
  %443 = vmatpush.msra.mxu0 0.0
  %444 = vmatpush.msra.mxu0 0.0
  %445 = vmatpush.msra.mxu0 0.0
  %446 = vmatpush.msra.mxu0 0.0
  %447 = vmatpush.msra.mxu0 0.0
  %448 = vmatpush.msra.mxu0 0.0
  %449 = vmatpush.msra.mxu0 0.0
  %450 = vmatpush.msra.mxu0 %v437
  %451 = vmatpush.msra.mxu0 %v436
  %452 = vmatpush.msra.mxu0 %v435
  %453 = vmatpush.msra.mxu0 %v434
  %454 = vmatmul.f32.gmra.mxu0 %v139
  %v455 = vpop.f32.mrf.mxu0
  %v456 = vadd.f32 0.0, %v455
  %457 = vdwg.mxu0
  %v458 = vadd.f32 %v432, %v456
  %v459 = vld [vmem:[%s1 + $0x188] sm:$0x1]
  %v460 = vperm.slane %v459, 0
  %v461 = vadd.f32 %v458, %v460
  %v462 = vxor.u32 %v461, 2147483648
  %v463 = vmul.f32 %v462, 1.442695
  %v464 = vpow.pop %v463
  %v465 = vadd.f32 %v464, 1.0
  %v466 = vrcp.pop %v465
  %v467 = vmul.f32 %v465, %v466
  %v468 = vsub.f32 1.0, %v467
  %v469 = vmul.f32 %v466, %v468
  %v470 = vadd.f32 %v466, %v469
  %vm471 = vweird.f32 %v465
  %vm472 = vweird.f32 %v466
  %vm473 = vmor %vm471, %vm472
  %v474 = vsel %vm473, %v466, %v470
  %v475 = vand.u32 2147483647, %v465
  %vm476 = vcmp.eq.f32.partialorder %v475, 8.507059e+37
  %v477 = vand.u32 %v465, 2147483648
  %v478 = vor.u32 1.1754944e-38, %v477
  %v479 = vsel %vm476, %v478, %v474
  %v480 = vmul.f32 1.0, %v479
  %v481 = vtanh.pop %v461
  %v482 = vmul.f32 %v480, 0.0
  %484 = vrot.lane.b32.xlu0 %v481, 64
  %v485 = vpop.permute.xlu0 %484
  %v487 = vmul.f32 %v480, %v485
  %489 = vrot.lane.b32.xlu0 %v487, 32
  %v490 = vpop.permute.xlu0 %489
  %v492 = vadd.f32 %v482, %v490
  %v493 = vtanh.pop %v492
  %495 = vrot.lane.b32.xlu0 %v493, 64
  %v496 = vpop.permute.xlu0 %495
  %v498 = vmul.f32 %v480, %v496
  %v499 = vld [vmem:[%s1 + $0x190] sm:$0xff]
  %v500 = vld [vmem:[%s1 + $0x198] sm:$0xff]
  %v501 = vld [vmem:[%s1 + $0x1a0] sm:$0xff]
  %v502 = vld [vmem:[%s1 + $0x1a8] sm:$0xff]
  %v503 = vld [vmem:[%s1 + $0x1b0] sm:$0xff]
  %v504 = vld [vmem:[%s1 + $0x1b8] sm:$0xff]
  %v505 = vld [vmem:[%s1 + $0x1c0] sm:$0xff]
  %v506 = vld [vmem:[%s1 + $0x1c8] sm:$0xff]
  %507 = vmatpush.msra.mxu0 0.0
  %508 = vmatpush.msra.mxu0 0.0
  %509 = vmatpush.msra.mxu0 0.0
  %510 = vmatpush.msra.mxu0 0.0
  %511 = vmatpush.msra.mxu0 0.0
  %512 = vmatpush.msra.mxu0 0.0
  %513 = vmatpush.msra.mxu0 0.0
  %514 = vmatpush.msra.mxu0 0.0
  %515 = vmatpush.msra.mxu0 0.0
  %516 = vmatpush.msra.mxu0 0.0
  %517 = vmatpush.msra.mxu0 0.0
  %518 = vmatpush.msra.mxu0 0.0
  %519 = vmatpush.msra.mxu0 %v506
  %520 = vmatpush.msra.mxu0 %v505
  %521 = vmatpush.msra.mxu0 %v504
  %522 = vmatpush.msra.mxu0 %v503
  %523 = vmatmul.f32.gmra.mxu0 %v392
  %v524 = vpop.f32.mrf.mxu0
  %v525 = vadd.f32 0.0, %v524
  %526 = vdwg.mxu0
  %528 = vrot.lane.b32.xlu0 %v498, 32
  %v529 = vpop.permute.xlu0 %528
  %v530 = vsel %vm137, %v529, 0
  %532 = vmatpush.msra.mxu0 0.0
  %533 = vmatpush.msra.mxu0 0.0
  %534 = vmatpush.msra.mxu0 0.0
  %535 = vmatpush.msra.mxu0 0.0
  %536 = vmatpush.msra.mxu0 0.0
  %537 = vmatpush.msra.mxu0 0.0
  %538 = vmatpush.msra.mxu0 0.0
  %539 = vmatpush.msra.mxu0 0.0
  %540 = vmatpush.msra.mxu0 0.0
  %541 = vmatpush.msra.mxu0 0.0
  %542 = vmatpush.msra.mxu0 0.0
  %543 = vmatpush.msra.mxu0 0.0
  %544 = vmatpush.msra.mxu0 %v502
  %545 = vmatpush.msra.mxu0 %v501
  %546 = vmatpush.msra.mxu0 %v500
  %547 = vmatpush.msra.mxu0 %v499
  %548 = vmatmul.f32.gmra.mxu0 %v530
  %v549 = vpop.f32.mrf.mxu0
  %v550 = vadd.f32 %v525, %v549
  %551 = vdwg.mxu0
  %v552 = vld [vmem:[%s1 + $0x1d0] sm:$0x1]
  %v553 = vperm.slane %v552, 0
  %v554 = vadd.f32 %v550, %v553
  %v555 = vld [vmem:[%s1 + $0x1d8] sm:$0xff]
  %v556 = vsel %vm14, %v349, 0
  %558 = vmatpush.msra.mxu0 0.0
  %559 = vmatpush.msra.mxu0 0.0
  %560 = vmatpush.msra.mxu0 0.0
  %561 = vmatpush.msra.mxu0 0.0
  %562 = vmatpush.msra.mxu0 0.0
  %563 = vmatpush.msra.mxu0 0.0
  %564 = vmatpush.msra.mxu0 0.0
  %565 = vmatpush.msra.mxu0 0.0
  %566 = vmatpush.msra.mxu0 0.0
  %567 = vmatpush.msra.mxu0 0.0
  %568 = vmatpush.msra.mxu0 0.0
  %569 = vmatpush.msra.mxu0 0.0
  %570 = vmatpush.msra.mxu0 0.0
  %571 = vmatpush.msra.mxu0 0.0
  %572 = vmatpush.msra.mxu0 0.0
  %573 = vmatpush.msra.mxu0 %v555
  %574 = vmatmul.f32.gmra.mxu0 %v556
  %v575 = vpop.f32.mrf.mxu0
  %v576 = vadd.f32 0.0, %v575
  %577 = vdwg.mxu0
  %v578 = vadd.f32 %v554, %v576
  %579 = vst [vmem:[%s2] sm:$0x3] %v578
  %v580 = vld [vmem:[%s122] sm:$0x3]
  %v581 = vld [vmem:[%s1 + $0x28] sm:$0xff]
  %v582 = vld [vmem:[%s1 + $0x30] sm:$0xff]
  %v583 = vld [vmem:[%s1 + $0x38] sm:$0xff]
  %v584 = vld [vmem:[%s1 + $0x40] sm:$0xff]
  %585 = vmatpush.msra.mxu0 0.0
  %586 = vmatpush.msra.mxu0 0.0
  %587 = vmatpush.msra.mxu0 0.0
  %588 = vmatpush.msra.mxu0 0.0
  %589 = vmatpush.msra.mxu0 0.0
  %590 = vmatpush.msra.mxu0 0.0
  %591 = vmatpush.msra.mxu0 0.0
  %592 = vmatpush.msra.mxu0 0.0
  %593 = vmatpush.msra.mxu0 0.0
  %594 = vmatpush.msra.mxu0 0.0
  %595 = vmatpush.msra.mxu0 0.0
  %596 = vmatpush.msra.mxu0 0.0
  %597 = vmatpush.msra.mxu0 %v584
  %598 = vmatpush.msra.mxu0 %v583
  %599 = vmatpush.msra.mxu0 %v582
  %600 = vmatpush.msra.mxu0 %v581
  %601 = vmatmul.f32.gmra.mxu0 %v392
  %v602 = vpop.f32.mrf.mxu0
  %v603 = vadd.f32 0.0, %v602
  %604 = vdwg.mxu0
  %v605 = vadd.f32 %v580, %v603
  %v606 = vld [vmem:[%s1 + $0x48] sm:$0xff]
  %v607 = vld [vmem:[%s1 + $0x50] sm:$0xff]
  %v608 = vld [vmem:[%s1 + $0x58] sm:$0xff]
  %v609 = vld [vmem:[%s1 + $0x60] sm:$0xff]
  %610 = vmatpush.msra.mxu0 0.0
  %611 = vmatpush.msra.mxu0 0.0
  %612 = vmatpush.msra.mxu0 0.0
  %613 = vmatpush.msra.mxu0 0.0
  %614 = vmatpush.msra.mxu0 0.0
  %615 = vmatpush.msra.mxu0 0.0
  %616 = vmatpush.msra.mxu0 0.0
  %617 = vmatpush.msra.mxu0 0.0
  %618 = vmatpush.msra.mxu0 0.0
  %619 = vmatpush.msra.mxu0 0.0
  %620 = vmatpush.msra.mxu0 0.0
  %621 = vmatpush.msra.mxu0 0.0
  %622 = vmatpush.msra.mxu0 %v609
  %623 = vmatpush.msra.mxu0 %v608
  %624 = vmatpush.msra.mxu0 %v607
  %625 = vmatpush.msra.mxu0 %v606
  %626 = vmatmul.f32.gmra.mxu0 %v254
  %v627 = vpop.f32.mrf.mxu0
  %v628 = vadd.f32 0.0, %v627
  %629 = vdwg.mxu0
  %v630 = vadd.f32 %v605, %v628
  %v631 = vxor.u32 %v630, 2147483648
  %v632 = vmul.f32 %v631, 1.442695
  %v633 = vpow.pop %v632
  %v634 = vadd.f32 %v633, 1.0
  %v635 = vrcp.pop %v634
  %v636 = vmul.f32 %v634, %v635
  %v637 = vsub.f32 1.0, %v636
  %v638 = vmul.f32 %v635, %v637
  %v639 = vadd.f32 %v635, %v638
  %vm640 = vweird.f32 %v634
  %vm641 = vweird.f32 %v635
  %vm642 = vmor %vm640, %vm641
  %v643 = vsel %vm642, %v635, %v639
  %v644 = vand.u32 2147483647, %v634
  %vm645 = vcmp.eq.f32.partialorder %v644, 8.507059e+37
  %v646 = vand.u32 %v634, 2147483648
  %v647 = vor.u32 1.1754944e-38, %v646
  %v648 = vsel %vm645, %v647, %v643
  %v649 = vmul.f32 1.0, %v648
  %v650 = vtanh.pop %v630
  %v651 = vmul.f32 %v649, %v217
  %653 = vrot.lane.b32.xlu0 %v650, 64
  %v654 = vpop.permute.xlu0 %653
  %v656 = vmul.f32 %v649, %v654
  %658 = vrot.lane.b32.xlu0 %v656, 32
  %v659 = vpop.permute.xlu0 %658
  %v661 = vadd.f32 %v651, %v659
  %v662 = vtanh.pop %v661
  %664 = vrot.lane.b32.xlu0 %v662, 64
  %v665 = vpop.permute.xlu0 %664
  %v667 = vmul.f32 %v649, %v665
  %v668 = vld [vmem:[%s1 + $0x70] sm:$0xff]
  %v669 = vld [vmem:[%s1 + $0x78] sm:$0xff]
  %v670 = vld [vmem:[%s1 + $0x80] sm:$0xff]
  %v671 = vld [vmem:[%s1 + $0x88] sm:$0xff]
  %v672 = vld [vmem:[%s1 + $0x90] sm:$0xff]
  %673 = vmatpush.msra.mxu0 0.0
  %674 = vmatpush.msra.mxu0 0.0
  %675 = vmatpush.msra.mxu0 0.0
  %676 = vmatpush.msra.mxu0 0.0
  %677 = vmatpush.msra.mxu0 0.0
  %678 = vmatpush.msra.mxu0 0.0
  %679 = vmatpush.msra.mxu0 0.0
  %680 = vmatpush.msra.mxu0 0.0
  %681 = vmatpush.msra.mxu0 0.0
  %682 = vmatpush.msra.mxu0 0.0
  %683 = vmatpush.msra.mxu0 0.0
  %684 = vmatpush.msra.mxu0 0.0
  %685 = vmatpush.msra.mxu0 0.0
  %686 = vmatpush.msra.mxu0 0.0
  %687 = vmatpush.msra.mxu0 0.0
  %688 = vmatpush.msra.mxu0 %v672
  %689 = vmatmul.f32.gmra.mxu0 %v556
  %v690 = vpop.f32.mrf.mxu0
  %v691 = vadd.f32 0.0, %v690
  %692 = vdwg.mxu0
  %694 = vrot.lane.b32.xlu0 %v667, 32
  %v695 = vpop.permute.xlu0 %694
  %v696 = vsel %vm137, %v695, 0
  %698 = vmatpush.msra.mxu0 0.0
  %699 = vmatpush.msra.mxu0 0.0
  %700 = vmatpush.msra.mxu0 0.0
  %701 = vmatpush.msra.mxu0 0.0
  %702 = vmatpush.msra.mxu0 0.0
  %703 = vmatpush.msra.mxu0 0.0
  %704 = vmatpush.msra.mxu0 0.0
  %705 = vmatpush.msra.mxu0 0.0
  %706 = vmatpush.msra.mxu0 0.0
  %707 = vmatpush.msra.mxu0 0.0
  %708 = vmatpush.msra.mxu0 0.0
  %709 = vmatpush.msra.mxu0 0.0
  %710 = vmatpush.msra.mxu0 %v671
  %711 = vmatpush.msra.mxu0 %v670
  %712 = vmatpush.msra.mxu0 %v669
  %713 = vmatpush.msra.mxu0 %v668
  %714 = vmatmul.f32.gmra.mxu0 %v696
  %v715 = vpop.f32.mrf.mxu0
  %v716 = vadd.f32 %v691, %v715
  %717 = vdwg.mxu0
  %v718 = vld [vmem:[%s1 + $0x98] sm:$0xff]
  %v720 = vsel %vm14, %v382, 0
  %722 = vmatpush.msra.mxu0 0.0
  %723 = vmatpush.msra.mxu0 0.0
  %724 = vmatpush.msra.mxu0 0.0
  %725 = vmatpush.msra.mxu0 0.0
  %726 = vmatpush.msra.mxu0 0.0
  %727 = vmatpush.msra.mxu0 0.0
  %728 = vmatpush.msra.mxu0 0.0
  %729 = vmatpush.msra.mxu0 0.0
  %730 = vmatpush.msra.mxu0 0.0
  %731 = vmatpush.msra.mxu0 0.0
  %732 = vmatpush.msra.mxu0 0.0
  %733 = vmatpush.msra.mxu0 0.0
  %734 = vmatpush.msra.mxu0 0.0
  %735 = vmatpush.msra.mxu0 0.0
  %736 = vmatpush.msra.mxu0 0.0
  %737 = vmatpush.msra.mxu0 %v718
  %738 = vmatmul.f32.gmra.mxu0 %v720
  %v739 = vpop.f32.mrf.mxu0
  %v740 = vadd.f32 0.0, %v739
  %741 = vdwg.mxu0
  %v742 = vadd.f32 %v716, %v740
  %v743 = vld [vmem:[%s0 + $0x38] sm:$0x3]
  %v744 = vadd.f32 %v742, %v743
  %v745 = vtanh.pop %v744
  %v746 = vld [vmem:[%s1 + $0xa0] sm:$0xff]
  %v747 = vld [vmem:[%s1 + $0xa8] sm:$0xff]
  %v748 = vld [vmem:[%s1 + $0xb0] sm:$0xff]
  %v749 = vld [vmem:[%s1 + $0xb8] sm:$0xff]
  %v750 = vld [vmem:[%s1 + $0xc0] sm:$0xff]
  %v751 = vld [vmem:[%s1 + $0xc8] sm:$0xff]
  %v752 = vld [vmem:[%s1 + $0xd0] sm:$0xff]
  %v753 = vld [vmem:[%s1 + $0xd8] sm:$0xff]
  %v754 = vld [vmem:[%s1 + $0xe0] sm:$0xff]
  %v755 = vld [vmem:[%s1 + $0xe8] sm:$0xff]
  %v756 = vld [vmem:[%s1 + $0xf0] sm:$0xff]
  %v757 = vld [vmem:[%s1 + $0xf8] sm:$0xff]
  %v758 = vld [vmem:[%s1 + $0x100] sm:$0xff]
  %v759 = vld [vmem:[%s1 + $0x108] sm:$0xff]
  %v760 = vld [vmem:[%s1 + $0x110] sm:$0xff]
  %v761 = vld [vmem:[%s1 + $0x118] sm:$0xff]
  %v762 = vld [vmem:[%s0 + $0x30] sm:$0x3]
  %763 = vmatpush.msra.mxu0 %v761
  %764 = vmatpush.msra.mxu0 %v760
  %765 = vmatpush.msra.mxu0 %v759
  %766 = vmatpush.msra.mxu0 %v758
  %767 = vmatpush.msra.mxu0 %v757
  %768 = vmatpush.msra.mxu0 %v756
  %769 = vmatpush.msra.mxu0 %v755
  %770 = vmatpush.msra.mxu0 %v754
  %771 = vmatpush.msra.mxu0 %v753
  %772 = vmatpush.msra.mxu0 %v752
  %773 = vmatpush.msra.mxu0 %v751
  %774 = vmatpush.msra.mxu0 %v750
  %775 = vmatpush.msra.mxu0 %v749
  %776 = vmatpush.msra.mxu0 %v748
  %777 = vmatpush.msra.mxu0 %v747
  %778 = vmatpush.msra.mxu0 %v746
  %779 = vmatmul.f32.gmra.mxu0 %v745
  %v780 = vpop.f32.mrf.mxu0
  %v781 = vadd.f32 %v762, %v780
  %782 = vdwg.mxu0
  %v783 = vsel %vm338, %v781, -inf
  %784 = vmax.xlane.f32.xlu0 %v783
  %v785 = vpop.xlane.xlu0 %784
  %v786 = vsub.f32 %v781, %v785
  %v787 = vmul.f32 %v786, 1.442695
  %v788 = vpow.pop %v787
  %v789 = vsel %vm338, %v788, 0.0
  %790 = vadd.xlane.f32.xlu0 %v789
  %v791 = vpop.xlane.xlu0 %790
  %v792 = vrcp.pop %v791
  %v793 = vmul.f32 %v788, %v792
  %795 = vrot.lane.b32.xlu0 %v793, 8
  %v796 = vpop.permute.xlu0 %795
  %v798 = vsel %vm14, %v793, %v796
  %v799 = vld [vmem:[%s1 + $0x120] sm:$0x3]
  %v800 = vmul.f32 %v798, %v799
  %v801 = vld [vmem:[%s0 + $0x40] sm:$0xff]
  %v802 = vld [vmem:[%s0 + $0x48] sm:$0xff]
  %v804 = vsel %vm52, %v800, 0
  %806 = vmatpush.msra.mxu0 0.0
  %807 = vmatpush.msra.mxu0 0.0
  %808 = vmatpush.msra.mxu0 0.0
  %809 = vmatpush.msra.mxu0 0.0
  %810 = vmatpush.msra.mxu0 0.0
  %811 = vmatpush.msra.mxu0 0.0
  %812 = vmatpush.msra.mxu0 0.0
  %813 = vmatpush.msra.mxu0 0.0
  %814 = vmatpush.msra.mxu0 0.0
  %815 = vmatpush.msra.mxu0 0.0
  %816 = vmatpush.msra.mxu0 0.0
  %817 = vmatpush.msra.mxu0 0.0
  %818 = vmatpush.msra.mxu0 0.0
  %819 = vmatpush.msra.mxu0 0.0
  %820 = vmatpush.msra.mxu0 %v802
  %821 = vmatpush.msra.mxu0 %v801
  %822 = vmatmul.f32.gmra.mxu0 %v804
  %v823 = vpop.f32.mrf.mxu0
  %v824 = vadd.f32 0.0, %v823
  %825 = vdwg.mxu0
  %v826 = vadd.f32 %v382, %v793
  %v827 = vld [vmem:[%s1 + $0x128] sm:$0xff]
  %v828 = vld [vmem:[%s1 + $0x130] sm:$0xff]
  %v829 = vld [vmem:[%s1 + $0x138] sm:$0xff]
  %v830 = vld [vmem:[%s1 + $0x140] sm:$0xff]
  %v831 = vld [vmem:[%s1 + $0x148] sm:$0xff]
  %v832 = vld [vmem:[%s1 + $0x150] sm:$0xff]
  %v833 = vld [vmem:[%s1 + $0x158] sm:$0xff]
  %v834 = vld [vmem:[%s1 + $0x160] sm:$0xff]
  %v836 = vsel %vm137, %v824, 0
  %838 = vmatpush.msra.mxu0 0.0
  %839 = vmatpush.msra.mxu0 0.0
  %840 = vmatpush.msra.mxu0 0.0
  %841 = vmatpush.msra.mxu0 0.0
  %842 = vmatpush.msra.mxu0 0.0
  %843 = vmatpush.msra.mxu0 0.0
  %844 = vmatpush.msra.mxu0 0.0
  %845 = vmatpush.msra.mxu0 0.0
  %846 = vmatpush.msra.mxu0 0.0
  %847 = vmatpush.msra.mxu0 0.0
  %848 = vmatpush.msra.mxu0 0.0
  %849 = vmatpush.msra.mxu0 0.0
  %850 = vmatpush.msra.mxu0 %v834
  %851 = vmatpush.msra.mxu0 %v833
  %852 = vmatpush.msra.mxu0 %v832
  %853 = vmatpush.msra.mxu0 %v831
  %854 = vmatmul.f32.gmra.mxu0 %v836
  %v855 = vpop.f32.mrf.mxu0
  %v856 = vadd.f32 0.0, %v855
  %857 = vdwg.mxu0
  %858 = vmatpush.msra.mxu0 0.0
  %859 = vmatpush.msra.mxu0 0.0
  %860 = vmatpush.msra.mxu0 0.0
  %861 = vmatpush.msra.mxu0 0.0
  %862 = vmatpush.msra.mxu0 0.0
  %863 = vmatpush.msra.mxu0 0.0
  %864 = vmatpush.msra.mxu0 0.0
  %865 = vmatpush.msra.mxu0 0.0
  %866 = vmatpush.msra.mxu0 0.0
  %867 = vmatpush.msra.mxu0 0.0
  %868 = vmatpush.msra.mxu0 0.0
  %869 = vmatpush.msra.mxu0 0.0
  %870 = vmatpush.msra.mxu0 %v830
  %871 = vmatpush.msra.mxu0 %v829
  %872 = vmatpush.msra.mxu0 %v828
  %873 = vmatpush.msra.mxu0 %v827
  %874 = vmatmul.f32.gmra.mxu0 %v696
  %v875 = vpop.f32.mrf.mxu0
  %v876 = vadd.f32 %v856, %v875
  %877 = vdwg.mxu0
  %v878 = vld [vmem:[%s1 + $0x168] sm:$0xff]
  %v879 = vld [vmem:[%s1 + $0x170] sm:$0xff]
  %v880 = vld [vmem:[%s1 + $0x178] sm:$0xff]
  %v881 = vld [vmem:[%s1 + $0x180] sm:$0xff]
  %882 = vmatpush.msra.mxu0 0.0
  %883 = vmatpush.msra.mxu0 0.0
  %884 = vmatpush.msra.mxu0 0.0
  %885 = vmatpush.msra.mxu0 0.0
  %886 = vmatpush.msra.mxu0 0.0
  %887 = vmatpush.msra.mxu0 0.0
  %888 = vmatpush.msra.mxu0 0.0
  %889 = vmatpush.msra.mxu0 0.0
  %890 = vmatpush.msra.mxu0 0.0
  %891 = vmatpush.msra.mxu0 0.0
  %892 = vmatpush.msra.mxu0 0.0
  %893 = vmatpush.msra.mxu0 0.0
  %894 = vmatpush.msra.mxu0 %v881
  %895 = vmatpush.msra.mxu0 %v880
  %896 = vmatpush.msra.mxu0 %v879
  %897 = vmatpush.msra.mxu0 %v878
  %898 = vmatmul.f32.gmra.mxu0 %v530
  %v899 = vpop.f32.mrf.mxu0
  %v900 = vadd.f32 0.0, %v899
  %901 = vdwg.mxu0
  %v902 = vadd.f32 %v876, %v900
  %v903 = vld [vmem:[%s1 + $0x188] sm:$0x1]
  %v904 = vperm.slane %v903, 0
  %v905 = vadd.f32 %v902, %v904
  %v906 = vxor.u32 %v905, 2147483648
  %v907 = vmul.f32 %v906, 1.442695
  %v908 = vpow.pop %v907
  %v909 = vadd.f32 %v908, 1.0
  %v910 = vrcp.pop %v909
  %v911 = vmul.f32 %v909, %v910
  %v912 = vsub.f32 1.0, %v911
  %v913 = vmul.f32 %v910, %v912
  %v914 = vadd.f32 %v910, %v913
  %vm915 = vweird.f32 %v909
  %vm916 = vweird.f32 %v910
  %vm917 = vmor %vm915, %vm916
  %v918 = vsel %vm917, %v910, %v914
  %v919 = vand.u32 2147483647, %v909
  %vm920 = vcmp.eq.f32.partialorder %v919, 8.507059e+37
  %v921 = vand.u32 %v909, 2147483648
  %v922 = vor.u32 1.1754944e-38, %v921
  %v923 = vsel %vm920, %v922, %v918
  %v924 = vmul.f32 1.0, %v923
  %v925 = vtanh.pop %v905
  %v926 = vmul.f32 %v924, %v492
  %928 = vrot.lane.b32.xlu0 %v925, 64
  %v929 = vpop.permute.xlu0 %928
  %v931 = vmul.f32 %v924, %v929
  %933 = vrot.lane.b32.xlu0 %v931, 32
  %v934 = vpop.permute.xlu0 %933
  %v936 = vadd.f32 %v926, %v934
  %v937 = vtanh.pop %v936
  %939 = vrot.lane.b32.xlu0 %v937, 64
  %v940 = vpop.permute.xlu0 %939
  %v942 = vmul.f32 %v924, %v940
  %v943 = vld [vmem:[%s1 + $0x190] sm:$0xff]
  %v944 = vld [vmem:[%s1 + $0x198] sm:$0xff]
  %v945 = vld [vmem:[%s1 + $0x1a0] sm:$0xff]
  %v946 = vld [vmem:[%s1 + $0x1a8] sm:$0xff]
  %v947 = vld [vmem:[%s1 + $0x1b0] sm:$0xff]
  %v948 = vld [vmem:[%s1 + $0x1b8] sm:$0xff]
  %v949 = vld [vmem:[%s1 + $0x1c0] sm:$0xff]
  %v950 = vld [vmem:[%s1 + $0x1c8] sm:$0xff]
  %951 = vmatpush.msra.mxu0 0.0
  %952 = vmatpush.msra.mxu0 0.0
  %953 = vmatpush.msra.mxu0 0.0
  %954 = vmatpush.msra.mxu0 0.0
  %955 = vmatpush.msra.mxu0 0.0
  %956 = vmatpush.msra.mxu0 0.0
  %957 = vmatpush.msra.mxu0 0.0
  %958 = vmatpush.msra.mxu0 0.0
  %959 = vmatpush.msra.mxu0 0.0
  %960 = vmatpush.msra.mxu0 0.0
  %961 = vmatpush.msra.mxu0 0.0
  %962 = vmatpush.msra.mxu0 0.0
  %963 = vmatpush.msra.mxu0 %v950
  %964 = vmatpush.msra.mxu0 %v949
  %965 = vmatpush.msra.mxu0 %v948
  %966 = vmatpush.msra.mxu0 %v947
  %967 = vmatmul.f32.gmra.mxu0 %v836
  %v968 = vpop.f32.mrf.mxu0
  %v969 = vadd.f32 0.0, %v968
  %970 = vdwg.mxu0
  %972 = vrot.lane.b32.xlu0 %v942, 32
  %v973 = vpop.permute.xlu0 %972
  %v974 = vsel %vm137, %v973, 0
  %976 = vmatpush.msra.mxu0 0.0
  %977 = vmatpush.msra.mxu0 0.0
  %978 = vmatpush.msra.mxu0 0.0
  %979 = vmatpush.msra.mxu0 0.0
  %980 = vmatpush.msra.mxu0 0.0
  %981 = vmatpush.msra.mxu0 0.0
  %982 = vmatpush.msra.mxu0 0.0
  %983 = vmatpush.msra.mxu0 0.0
  %984 = vmatpush.msra.mxu0 0.0
  %985 = vmatpush.msra.mxu0 0.0
  %986 = vmatpush.msra.mxu0 0.0
  %987 = vmatpush.msra.mxu0 0.0
  %988 = vmatpush.msra.mxu0 %v946
  %989 = vmatpush.msra.mxu0 %v945
  %990 = vmatpush.msra.mxu0 %v944
  %991 = vmatpush.msra.mxu0 %v943
  %992 = vmatmul.f32.gmra.mxu0 %v974
  %v993 = vpop.f32.mrf.mxu0
  %v994 = vadd.f32 %v969, %v993
  %995 = vdwg.mxu0
  %v996 = vld [vmem:[%s1 + $0x1d0] sm:$0x1]
  %v997 = vperm.slane %v996, 0
  %v998 = vadd.f32 %v994, %v997
  %v999 = vld [vmem:[%s1 + $0x1d8] sm:$0xff]
  %v1000 = vsel %vm14, %v793, 0
  %1002 = vmatpush.msra.mxu0 0.0
  %1003 = vmatpush.msra.mxu0 0.0
  %1004 = vmatpush.msra.mxu0 0.0
  %1005 = vmatpush.msra.mxu0 0.0
  %1006 = vmatpush.msra.mxu0 0.0
  %1007 = vmatpush.msra.mxu0 0.0
  %1008 = vmatpush.msra.mxu0 0.0
  %1009 = vmatpush.msra.mxu0 0.0
  %1010 = vmatpush.msra.mxu0 0.0
  %1011 = vmatpush.msra.mxu0 0.0
  %1012 = vmatpush.msra.mxu0 0.0
  %1013 = vmatpush.msra.mxu0 0.0
  %1014 = vmatpush.msra.mxu0 0.0
  %1015 = vmatpush.msra.mxu0 0.0
  %1016 = vmatpush.msra.mxu0 0.0
  %1017 = vmatpush.msra.mxu0 %v999
  %1018 = vmatmul.f32.gmra.mxu0 %v1000
  %v1019 = vpop.f32.mrf.mxu0
  %v1020 = vadd.f32 0.0, %v1019
  %1021 = vdwg.mxu0
  %v1022 = vadd.f32 %v998, %v1020
  %s1023 = scalar_lea.vmem %s2, 2
  %1024 = vst [vmem:[%s1023] sm:$0x3] %v1022
  %v1025 = vld [vmem:[%s124] sm:$0x3]
  %v1026 = vld [vmem:[%s1 + $0x28] sm:$0xff]
  %v1027 = vld [vmem:[%s1 + $0x30] sm:$0xff]
  %v1028 = vld [vmem:[%s1 + $0x38] sm:$0xff]
  %v1029 = vld [vmem:[%s1 + $0x40] sm:$0xff]
  %1030 = vmatpush.msra.mxu0 0.0
  %1031 = vmatpush.msra.mxu0 0.0
  %1032 = vmatpush.msra.mxu0 0.0
  %1033 = vmatpush.msra.mxu0 0.0
  %1034 = vmatpush.msra.mxu0 0.0
  %1035 = vmatpush.msra.mxu0 0.0
  %1036 = vmatpush.msra.mxu0 0.0
  %1037 = vmatpush.msra.mxu0 0.0
  %1038 = vmatpush.msra.mxu0 0.0
  %1039 = vmatpush.msra.mxu0 0.0
  %1040 = vmatpush.msra.mxu0 0.0
  %1041 = vmatpush.msra.mxu0 0.0
  %1042 = vmatpush.msra.mxu0 %v1029
  %1043 = vmatpush.msra.mxu0 %v1028
  %1044 = vmatpush.msra.mxu0 %v1027
  %1045 = vmatpush.msra.mxu0 %v1026
  %1046 = vmatmul.f32.gmra.mxu0 %v836
  %v1047 = vpop.f32.mrf.mxu0
  %v1048 = vadd.f32 0.0, %v1047
  %1049 = vdwg.mxu0
  %v1050 = vadd.f32 %v1025, %v1048
  %v1051 = vld [vmem:[%s1 + $0x48] sm:$0xff]
  %v1052 = vld [vmem:[%s1 + $0x50] sm:$0xff]
  %v1053 = vld [vmem:[%s1 + $0x58] sm:$0xff]
  %v1054 = vld [vmem:[%s1 + $0x60] sm:$0xff]
  %1055 = vmatpush.msra.mxu0 0.0
  %1056 = vmatpush.msra.mxu0 0.0
  %1057 = vmatpush.msra.mxu0 0.0
  %1058 = vmatpush.msra.mxu0 0.0
  %1059 = vmatpush.msra.mxu0 0.0
  %1060 = vmatpush.msra.mxu0 0.0
  %1061 = vmatpush.msra.mxu0 0.0
  %1062 = vmatpush.msra.mxu0 0.0
  %1063 = vmatpush.msra.mxu0 0.0
  %1064 = vmatpush.msra.mxu0 0.0
  %1065 = vmatpush.msra.mxu0 0.0
  %1066 = vmatpush.msra.mxu0 0.0
  %1067 = vmatpush.msra.mxu0 %v1054
  %1068 = vmatpush.msra.mxu0 %v1053
  %1069 = vmatpush.msra.mxu0 %v1052
  %1070 = vmatpush.msra.mxu0 %v1051
  %1071 = vmatmul.f32.gmra.mxu0 %v696
  %v1072 = vpop.f32.mrf.mxu0
  %v1073 = vadd.f32 0.0, %v1072
  %1074 = vdwg.mxu0
  %v1075 = vadd.f32 %v1050, %v1073
  %v1076 = vxor.u32 %v1075, 2147483648
  %v1077 = vmul.f32 %v1076, 1.442695
  %v1078 = vpow.pop %v1077
  %v1079 = vadd.f32 %v1078, 1.0
  %v1080 = vrcp.pop %v1079
  %v1081 = vmul.f32 %v1079, %v1080
  %v1082 = vsub.f32 1.0, %v1081
  %v1083 = vmul.f32 %v1080, %v1082
  %v1084 = vadd.f32 %v1080, %v1083
  %vm1085 = vweird.f32 %v1079
  %vm1086 = vweird.f32 %v1080
  %vm1087 = vmor %vm1085, %vm1086
  %v1088 = vsel %vm1087, %v1080, %v1084
  %v1089 = vand.u32 2147483647, %v1079
  %vm1090 = vcmp.eq.f32.partialorder %v1089, 8.507059e+37
  %v1091 = vand.u32 %v1079, 2147483648
  %v1092 = vor.u32 1.1754944e-38, %v1091
  %v1093 = vsel %vm1090, %v1092, %v1088
  %v1094 = vmul.f32 1.0, %v1093
  %v1095 = vtanh.pop %v1075
  %v1096 = vmul.f32 %v1094, %v661
  %1098 = vrot.lane.b32.xlu0 %v1095, 64
  %v1099 = vpop.permute.xlu0 %1098
  %v1101 = vmul.f32 %v1094, %v1099
  %1103 = vrot.lane.b32.xlu0 %v1101, 32
  %v1104 = vpop.permute.xlu0 %1103
  %v1106 = vadd.f32 %v1096, %v1104
  %v1107 = vtanh.pop %v1106
  %1109 = vrot.lane.b32.xlu0 %v1107, 64
  %v1110 = vpop.permute.xlu0 %1109
  %v1112 = vmul.f32 %v1094, %v1110
  %v1113 = vld [vmem:[%s1 + $0x70] sm:$0xff]
  %v1114 = vld [vmem:[%s1 + $0x78] sm:$0xff]
  %v1115 = vld [vmem:[%s1 + $0x80] sm:$0xff]
  %v1116 = vld [vmem:[%s1 + $0x88] sm:$0xff]
  %v1117 = vld [vmem:[%s1 + $0x90] sm:$0xff]
  %1118 = vmatpush.msra.mxu0 0.0
  %1119 = vmatpush.msra.mxu0 0.0
  %1120 = vmatpush.msra.mxu0 0.0
  %1121 = vmatpush.msra.mxu0 0.0
  %1122 = vmatpush.msra.mxu0 0.0
  %1123 = vmatpush.msra.mxu0 0.0
  %1124 = vmatpush.msra.mxu0 0.0
  %1125 = vmatpush.msra.mxu0 0.0
  %1126 = vmatpush.msra.mxu0 0.0
  %1127 = vmatpush.msra.mxu0 0.0
  %1128 = vmatpush.msra.mxu0 0.0
  %1129 = vmatpush.msra.mxu0 0.0
  %1130 = vmatpush.msra.mxu0 0.0
  %1131 = vmatpush.msra.mxu0 0.0
  %1132 = vmatpush.msra.mxu0 0.0
  %1133 = vmatpush.msra.mxu0 %v1117
  %1134 = vmatmul.f32.gmra.mxu0 %v1000
  %v1135 = vpop.f32.mrf.mxu0
  %v1136 = vadd.f32 0.0, %v1135
  %1137 = vdwg.mxu0
  %1139 = vrot.lane.b32.xlu0 %v1112, 32
  %v1140 = vpop.permute.xlu0 %1139
  %v1141 = vsel %vm137, %v1140, 0
  %1143 = vmatpush.msra.mxu0 0.0
  %1144 = vmatpush.msra.mxu0 0.0
  %1145 = vmatpush.msra.mxu0 0.0
  %1146 = vmatpush.msra.mxu0 0.0
  %1147 = vmatpush.msra.mxu0 0.0
  %1148 = vmatpush.msra.mxu0 0.0
  %1149 = vmatpush.msra.mxu0 0.0
  %1150 = vmatpush.msra.mxu0 0.0
  %1151 = vmatpush.msra.mxu0 0.0
  %1152 = vmatpush.msra.mxu0 0.0
  %1153 = vmatpush.msra.mxu0 0.0
  %1154 = vmatpush.msra.mxu0 0.0
  %1155 = vmatpush.msra.mxu0 %v1116
  %1156 = vmatpush.msra.mxu0 %v1115
  %1157 = vmatpush.msra.mxu0 %v1114
  %1158 = vmatpush.msra.mxu0 %v1113
  %1159 = vmatmul.f32.gmra.mxu0 %v1141
  %v1160 = vpop.f32.mrf.mxu0
  %v1161 = vadd.f32 %v1136, %v1160
  %1162 = vdwg.mxu0
  %v1163 = vld [vmem:[%s1 + $0x98] sm:$0xff]
  %v1165 = vsel %vm14, %v826, 0
  %1167 = vmatpush.msra.mxu0 0.0
  %1168 = vmatpush.msra.mxu0 0.0
  %1169 = vmatpush.msra.mxu0 0.0
  %1170 = vmatpush.msra.mxu0 0.0
  %1171 = vmatpush.msra.mxu0 0.0
  %1172 = vmatpush.msra.mxu0 0.0
  %1173 = vmatpush.msra.mxu0 0.0
  %1174 = vmatpush.msra.mxu0 0.0
  %1175 = vmatpush.msra.mxu0 0.0
  %1176 = vmatpush.msra.mxu0 0.0
  %1177 = vmatpush.msra.mxu0 0.0
  %1178 = vmatpush.msra.mxu0 0.0
  %1179 = vmatpush.msra.mxu0 0.0
  %1180 = vmatpush.msra.mxu0 0.0
  %1181 = vmatpush.msra.mxu0 0.0
  %1182 = vmatpush.msra.mxu0 %v1163
  %1183 = vmatmul.f32.gmra.mxu0 %v1165
  %v1184 = vpop.f32.mrf.mxu0
  %v1185 = vadd.f32 0.0, %v1184
  %1186 = vdwg.mxu0
  %v1187 = vadd.f32 %v1161, %v1185
  %v1188 = vld [vmem:[%s0 + $0x38] sm:$0x3]
  %v1189 = vadd.f32 %v1187, %v1188
  %v1190 = vtanh.pop %v1189
  %v1191 = vld [vmem:[%s1 + $0xa0] sm:$0xff]
  %v1192 = vld [vmem:[%s1 + $0xa8] sm:$0xff]
  %v1193 = vld [vmem:[%s1 + $0xb0] sm:$0xff]
  %v1194 = vld [vmem:[%s1 + $0xb8] sm:$0xff]
  %v1195 = vld [vmem:[%s1 + $0xc0] sm:$0xff]
  %v1196 = vld [vmem:[%s1 + $0xc8] sm:$0xff]
  %v1197 = vld [vmem:[%s1 + $0xd0] sm:$0xff]
  %v1198 = vld [vmem:[%s1 + $0xd8] sm:$0xff]
  %v1199 = vld [vmem:[%s1 + $0xe0] sm:$0xff]
  %v1200 = vld [vmem:[%s1 + $0xe8] sm:$0xff]
  %v1201 = vld [vmem:[%s1 + $0xf0] sm:$0xff]
  %v1202 = vld [vmem:[%s1 + $0xf8] sm:$0xff]
  %v1203 = vld [vmem:[%s1 + $0x100] sm:$0xff]
  %v1204 = vld [vmem:[%s1 + $0x108] sm:$0xff]
  %v1205 = vld [vmem:[%s1 + $0x110] sm:$0xff]
  %v1206 = vld [vmem:[%s1 + $0x118] sm:$0xff]
  %v1207 = vld [vmem:[%s0 + $0x30] sm:$0x3]
  %1208 = vmatpush.msra.mxu0 %v1206
  %1209 = vmatpush.msra.mxu0 %v1205
  %1210 = vmatpush.msra.mxu0 %v1204
  %1211 = vmatpush.msra.mxu0 %v1203
  %1212 = vmatpush.msra.mxu0 %v1202
  %1213 = vmatpush.msra.mxu0 %v1201
  %1214 = vmatpush.msra.mxu0 %v1200
  %1215 = vmatpush.msra.mxu0 %v1199
  %1216 = vmatpush.msra.mxu0 %v1198
  %1217 = vmatpush.msra.mxu0 %v1197
  %1218 = vmatpush.msra.mxu0 %v1196
  %1219 = vmatpush.msra.mxu0 %v1195
  %1220 = vmatpush.msra.mxu0 %v1194
  %1221 = vmatpush.msra.mxu0 %v1193
  %1222 = vmatpush.msra.mxu0 %v1192
  %1223 = vmatpush.msra.mxu0 %v1191
  %1224 = vmatmul.f32.gmra.mxu0 %v1190
  %v1225 = vpop.f32.mrf.mxu0
  %v1226 = vadd.f32 %v1207, %v1225
  %1227 = vdwg.mxu0
  %v1228 = vsel %vm338, %v1226, -inf
  %1229 = vmax.xlane.f32.xlu0 %v1228
  %v1230 = vpop.xlane.xlu0 %1229
  %v1231 = vsub.f32 %v1226, %v1230
  %v1232 = vmul.f32 %v1231, 1.442695
  %v1233 = vpow.pop %v1232
  %v1234 = vsel %vm338, %v1233, 0.0
  %1235 = vadd.xlane.f32.xlu0 %v1234
  %v1236 = vpop.xlane.xlu0 %1235
  %v1237 = vrcp.pop %v1236
  %v1238 = vmul.f32 %v1233, %v1237
  %1240 = vrot.lane.b32.xlu0 %v1238, 8
  %v1241 = vpop.permute.xlu0 %1240
  %v1243 = vsel %vm14, %v1238, %v1241
  %v1244 = vld [vmem:[%s1 + $0x120] sm:$0x3]
  %v1245 = vmul.f32 %v1243, %v1244
  %v1246 = vld [vmem:[%s0 + $0x40] sm:$0xff]
  %v1247 = vld [vmem:[%s0 + $0x48] sm:$0xff]
  %v1249 = vsel %vm52, %v1245, 0
  %1251 = vmatpush.msra.mxu0 0.0
  %1252 = vmatpush.msra.mxu0 0.0
  %1253 = vmatpush.msra.mxu0 0.0
  %1254 = vmatpush.msra.mxu0 0.0
  %1255 = vmatpush.msra.mxu0 0.0
  %1256 = vmatpush.msra.mxu0 0.0
  %1257 = vmatpush.msra.mxu0 0.0
  %1258 = vmatpush.msra.mxu0 0.0
  %1259 = vmatpush.msra.mxu0 0.0
  %1260 = vmatpush.msra.mxu0 0.0
  %1261 = vmatpush.msra.mxu0 0.0
  %1262 = vmatpush.msra.mxu0 0.0
  %1263 = vmatpush.msra.mxu0 0.0
  %1264 = vmatpush.msra.mxu0 0.0
  %1265 = vmatpush.msra.mxu0 %v1247
  %1266 = vmatpush.msra.mxu0 %v1246
  %1267 = vmatmul.f32.gmra.mxu0 %v1249
  %v1268 = vpop.f32.mrf.mxu0
  %v1269 = vadd.f32 0.0, %v1268
  %1270 = vdwg.mxu0
  %v1271 = vadd.f32 %v826, %v1238
  %v1272 = vld [vmem:[%s1 + $0x128] sm:$0xff]
  %v1273 = vld [vmem:[%s1 + $0x130] sm:$0xff]
  %v1274 = vld [vmem:[%s1 + $0x138] sm:$0xff]
  %v1275 = vld [vmem:[%s1 + $0x140] sm:$0xff]
  %v1276 = vld [vmem:[%s1 + $0x148] sm:$0xff]
  %v1277 = vld [vmem:[%s1 + $0x150] sm:$0xff]
  %v1278 = vld [vmem:[%s1 + $0x158] sm:$0xff]
  %v1279 = vld [vmem:[%s1 + $0x160] sm:$0xff]
  %v1281 = vsel %vm137, %v1269, 0
  %1283 = vmatpush.msra.mxu0 0.0
  %1284 = vmatpush.msra.mxu0 0.0
  %1285 = vmatpush.msra.mxu0 0.0
  %1286 = vmatpush.msra.mxu0 0.0
  %1287 = vmatpush.msra.mxu0 0.0
  %1288 = vmatpush.msra.mxu0 0.0
  %1289 = vmatpush.msra.mxu0 0.0
  %1290 = vmatpush.msra.mxu0 0.0
  %1291 = vmatpush.msra.mxu0 0.0
  %1292 = vmatpush.msra.mxu0 0.0
  %1293 = vmatpush.msra.mxu0 0.0
  %1294 = vmatpush.msra.mxu0 0.0
  %1295 = vmatpush.msra.mxu0 %v1279
  %1296 = vmatpush.msra.mxu0 %v1278
  %1297 = vmatpush.msra.mxu0 %v1277
  %1298 = vmatpush.msra.mxu0 %v1276
  %1299 = vmatmul.f32.gmra.mxu0 %v1281
  %v1300 = vpop.f32.mrf.mxu0
  %v1301 = vadd.f32 0.0, %v1300
  %1302 = vdwg.mxu0
  %1303 = vmatpush.msra.mxu0 0.0
  %1304 = vmatpush.msra.mxu0 0.0
  %1305 = vmatpush.msra.mxu0 0.0
  %1306 = vmatpush.msra.mxu0 0.0
  %1307 = vmatpush.msra.mxu0 0.0
  %1308 = vmatpush.msra.mxu0 0.0
  %1309 = vmatpush.msra.mxu0 0.0
  %1310 = vmatpush.msra.mxu0 0.0
  %1311 = vmatpush.msra.mxu0 0.0
  %1312 = vmatpush.msra.mxu0 0.0
  %1313 = vmatpush.msra.mxu0 0.0
  %1314 = vmatpush.msra.mxu0 0.0
  %1315 = vmatpush.msra.mxu0 %v1275
  %1316 = vmatpush.msra.mxu0 %v1274
  %1317 = vmatpush.msra.mxu0 %v1273
  %1318 = vmatpush.msra.mxu0 %v1272
  %1319 = vmatmul.f32.gmra.mxu0 %v1141
  %v1320 = vpop.f32.mrf.mxu0
  %v1321 = vadd.f32 %v1301, %v1320
  %1322 = vdwg.mxu0
  %v1323 = vld [vmem:[%s1 + $0x168] sm:$0xff]
  %v1324 = vld [vmem:[%s1 + $0x170] sm:$0xff]
  %v1325 = vld [vmem:[%s1 + $0x178] sm:$0xff]
  %v1326 = vld [vmem:[%s1 + $0x180] sm:$0xff]
  %1327 = vmatpush.msra.mxu0 0.0
  %1328 = vmatpush.msra.mxu0 0.0
  %1329 = vmatpush.msra.mxu0 0.0
  %1330 = vmatpush.msra.mxu0 0.0
  %1331 = vmatpush.msra.mxu0 0.0
  %1332 = vmatpush.msra.mxu0 0.0
  %1333 = vmatpush.msra.mxu0 0.0
  %1334 = vmatpush.msra.mxu0 0.0
  %1335 = vmatpush.msra.mxu0 0.0
  %1336 = vmatpush.msra.mxu0 0.0
  %1337 = vmatpush.msra.mxu0 0.0
  %1338 = vmatpush.msra.mxu0 0.0
  %1339 = vmatpush.msra.mxu0 %v1326
  %1340 = vmatpush.msra.mxu0 %v1325
  %1341 = vmatpush.msra.mxu0 %v1324
  %1342 = vmatpush.msra.mxu0 %v1323
  %1343 = vmatmul.f32.gmra.mxu0 %v974
  %v1344 = vpop.f32.mrf.mxu0
  %v1345 = vadd.f32 0.0, %v1344
  %1346 = vdwg.mxu0
  %v1347 = vadd.f32 %v1321, %v1345
  %v1348 = vld [vmem:[%s1 + $0x188] sm:$0x1]
  %v1349 = vperm.slane %v1348, 0
  %v1350 = vadd.f32 %v1347, %v1349
  %v1351 = vxor.u32 %v1350, 2147483648
  %v1352 = vmul.f32 %v1351, 1.442695
  %v1353 = vpow.pop %v1352
  %v1354 = vadd.f32 %v1353, 1.0
  %v1355 = vrcp.pop %v1354
  %v1356 = vmul.f32 %v1354, %v1355
  %v1357 = vsub.f32 1.0, %v1356
  %v1358 = vmul.f32 %v1355, %v1357
  %v1359 = vadd.f32 %v1355, %v1358
  %vm1360 = vweird.f32 %v1354
  %vm1361 = vweird.f32 %v1355
  %vm1362 = vmor %vm1360, %vm1361
  %v1363 = vsel %vm1362, %v1355, %v1359
  %v1364 = vand.u32 2147483647, %v1354
  %vm1365 = vcmp.eq.f32.partialorder %v1364, 8.507059e+37
  %v1366 = vand.u32 %v1354, 2147483648
  %v1367 = vor.u32 1.1754944e-38, %v1366
  %v1368 = vsel %vm1365, %v1367, %v1363
  %v1369 = vmul.f32 1.0, %v1368
  %v1370 = vtanh.pop %v1350
  %v1371 = vmul.f32 %v1369, %v936
  %1373 = vrot.lane.b32.xlu0 %v1370, 64
  %v1374 = vpop.permute.xlu0 %1373
  %v1376 = vmul.f32 %v1369, %v1374
  %1378 = vrot.lane.b32.xlu0 %v1376, 32
  %v1379 = vpop.permute.xlu0 %1378
  %v1381 = vadd.f32 %v1371, %v1379
  %v1382 = vtanh.pop %v1381
  %1384 = vrot.lane.b32.xlu0 %v1382, 64
  %v1385 = vpop.permute.xlu0 %1384
  %v1387 = vmul.f32 %v1369, %v1385
  %v1388 = vld [vmem:[%s1 + $0x190] sm:$0xff]
  %v1389 = vld [vmem:[%s1 + $0x198] sm:$0xff]
  %v1390 = vld [vmem:[%s1 + $0x1a0] sm:$0xff]
  %v1391 = vld [vmem:[%s1 + $0x1a8] sm:$0xff]
  %v1392 = vld [vmem:[%s1 + $0x1b0] sm:$0xff]
  %v1393 = vld [vmem:[%s1 + $0x1b8] sm:$0xff]
  %v1394 = vld [vmem:[%s1 + $0x1c0] sm:$0xff]
  %v1395 = vld [vmem:[%s1 + $0x1c8] sm:$0xff]
  %1396 = vmatpush.msra.mxu0 0.0
  %1397 = vmatpush.msra.mxu0 0.0
  %1398 = vmatpush.msra.mxu0 0.0
  %1399 = vmatpush.msra.mxu0 0.0
  %1400 = vmatpush.msra.mxu0 0.0
  %1401 = vmatpush.msra.mxu0 0.0
  %1402 = vmatpush.msra.mxu0 0.0
  %1403 = vmatpush.msra.mxu0 0.0
  %1404 = vmatpush.msra.mxu0 0.0
  %1405 = vmatpush.msra.mxu0 0.0
  %1406 = vmatpush.msra.mxu0 0.0
  %1407 = vmatpush.msra.mxu0 0.0
  %1408 = vmatpush.msra.mxu0 %v1395
  %1409 = vmatpush.msra.mxu0 %v1394
  %1410 = vmatpush.msra.mxu0 %v1393
  %1411 = vmatpush.msra.mxu0 %v1392
  %1412 = vmatmul.f32.gmra.mxu0 %v1281
  %v1413 = vpop.f32.mrf.mxu0
  %v1414 = vadd.f32 0.0, %v1413
  %1415 = vdwg.mxu0
  %1417 = vrot.lane.b32.xlu0 %v1387, 32
  %v1418 = vpop.permute.xlu0 %1417
  %v1419 = vsel %vm137, %v1418, 0
  %1421 = vmatpush.msra.mxu0 0.0
  %1422 = vmatpush.msra.mxu0 0.0
  %1423 = vmatpush.msra.mxu0 0.0
  %1424 = vmatpush.msra.mxu0 0.0
  %1425 = vmatpush.msra.mxu0 0.0
  %1426 = vmatpush.msra.mxu0 0.0
  %1427 = vmatpush.msra.mxu0 0.0
  %1428 = vmatpush.msra.mxu0 0.0
  %1429 = vmatpush.msra.mxu0 0.0
  %1430 = vmatpush.msra.mxu0 0.0
  %1431 = vmatpush.msra.mxu0 0.0
  %1432 = vmatpush.msra.mxu0 0.0
  %1433 = vmatpush.msra.mxu0 %v1391
  %1434 = vmatpush.msra.mxu0 %v1390
  %1435 = vmatpush.msra.mxu0 %v1389
  %1436 = vmatpush.msra.mxu0 %v1388
  %1437 = vmatmul.f32.gmra.mxu0 %v1419
  %v1438 = vpop.f32.mrf.mxu0
  %v1439 = vadd.f32 %v1414, %v1438
  %1440 = vdwg.mxu0
  %v1441 = vld [vmem:[%s1 + $0x1d0] sm:$0x1]
  %v1442 = vperm.slane %v1441, 0
  %v1443 = vadd.f32 %v1439, %v1442
  %v1444 = vld [vmem:[%s1 + $0x1d8] sm:$0xff]
  %v1445 = vsel %vm14, %v1238, 0
  %1447 = vmatpush.msra.mxu0 0.0
  %1448 = vmatpush.msra.mxu0 0.0
  %1449 = vmatpush.msra.mxu0 0.0
  %1450 = vmatpush.msra.mxu0 0.0
  %1451 = vmatpush.msra.mxu0 0.0
  %1452 = vmatpush.msra.mxu0 0.0
  %1453 = vmatpush.msra.mxu0 0.0
  %1454 = vmatpush.msra.mxu0 0.0
  %1455 = vmatpush.msra.mxu0 0.0
  %1456 = vmatpush.msra.mxu0 0.0
  %1457 = vmatpush.msra.mxu0 0.0
  %1458 = vmatpush.msra.mxu0 0.0
  %1459 = vmatpush.msra.mxu0 0.0
  %1460 = vmatpush.msra.mxu0 0.0
  %1461 = vmatpush.msra.mxu0 0.0
  %1462 = vmatpush.msra.mxu0 %v1444
  %1463 = vmatmul.f32.gmra.mxu0 %v1445
  %v1464 = vpop.f32.mrf.mxu0
  %v1465 = vadd.f32 0.0, %v1464
  %1466 = vdwg.mxu0
  %v1467 = vadd.f32 %v1443, %v1465
  %s1468 = scalar_lea.vmem %s2, 4
  %1469 = vst [vmem:[%s1468] sm:$0x3] %v1467
  %v1470 = vld [vmem:[%s126] sm:$0x3]
  %v1471 = vld [vmem:[%s1 + $0x28] sm:$0xff]
  %v1472 = vld [vmem:[%s1 + $0x30] sm:$0xff]
  %v1473 = vld [vmem:[%s1 + $0x38] sm:$0xff]
  %v1474 = vld [vmem:[%s1 + $0x40] sm:$0xff]
  %1475 = vmatpush.msra.mxu0 0.0
  %1476 = vmatpush.msra.mxu0 0.0
  %1477 = vmatpush.msra.mxu0 0.0
  %1478 = vmatpush.msra.mxu0 0.0
  %1479 = vmatpush.msra.mxu0 0.0
  %1480 = vmatpush.msra.mxu0 0.0
  %1481 = vmatpush.msra.mxu0 0.0
  %1482 = vmatpush.msra.mxu0 0.0
  %1483 = vmatpush.msra.mxu0 0.0
  %1484 = vmatpush.msra.mxu0 0.0
  %1485 = vmatpush.msra.mxu0 0.0
  %1486 = vmatpush.msra.mxu0 0.0
  %1487 = vmatpush.msra.mxu0 %v1474
  %1488 = vmatpush.msra.mxu0 %v1473
  %1489 = vmatpush.msra.mxu0 %v1472
  %1490 = vmatpush.msra.mxu0 %v1471
  %1491 = vmatmul.f32.gmra.mxu0 %v1281
  %v1492 = vpop.f32.mrf.mxu0
  %v1493 = vadd.f32 0.0, %v1492
  %1494 = vdwg.mxu0
  %v1495 = vadd.f32 %v1470, %v1493
  %v1496 = vld [vmem:[%s1 + $0x48] sm:$0xff]
  %v1497 = vld [vmem:[%s1 + $0x50] sm:$0xff]
  %v1498 = vld [vmem:[%s1 + $0x58] sm:$0xff]
  %v1499 = vld [vmem:[%s1 + $0x60] sm:$0xff]
  %1500 = vmatpush.msra.mxu0 0.0
  %1501 = vmatpush.msra.mxu0 0.0
  %1502 = vmatpush.msra.mxu0 0.0
  %1503 = vmatpush.msra.mxu0 0.0
  %1504 = vmatpush.msra.mxu0 0.0
  %1505 = vmatpush.msra.mxu0 0.0
  %1506 = vmatpush.msra.mxu0 0.0
  %1507 = vmatpush.msra.mxu0 0.0
  %1508 = vmatpush.msra.mxu0 0.0
  %1509 = vmatpush.msra.mxu0 0.0
  %1510 = vmatpush.msra.mxu0 0.0
  %1511 = vmatpush.msra.mxu0 0.0
  %1512 = vmatpush.msra.mxu0 %v1499
  %1513 = vmatpush.msra.mxu0 %v1498
  %1514 = vmatpush.msra.mxu0 %v1497
  %1515 = vmatpush.msra.mxu0 %v1496
  %1516 = vmatmul.f32.gmra.mxu0 %v1141
  %v1517 = vpop.f32.mrf.mxu0
  %v1518 = vadd.f32 0.0, %v1517
  %1519 = vdwg.mxu0
  %v1520 = vadd.f32 %v1495, %v1518
  %v1521 = vxor.u32 %v1520, 2147483648
  %v1522 = vmul.f32 %v1521, 1.442695
  %v1523 = vpow.pop %v1522
  %v1524 = vadd.f32 %v1523, 1.0
  %v1525 = vrcp.pop %v1524
  %v1526 = vmul.f32 %v1524, %v1525
  %v1527 = vsub.f32 1.0, %v1526
  %v1528 = vmul.f32 %v1525, %v1527
  %v1529 = vadd.f32 %v1525, %v1528
  %vm1530 = vweird.f32 %v1524
  %vm1531 = vweird.f32 %v1525
  %vm1532 = vmor %vm1530, %vm1531
  %v1533 = vsel %vm1532, %v1525, %v1529
  %v1534 = vand.u32 2147483647, %v1524
  %vm1535 = vcmp.eq.f32.partialorder %v1534, 8.507059e+37
  %v1536 = vand.u32 %v1524, 2147483648
  %v1537 = vor.u32 1.1754944e-38, %v1536
  %v1538 = vsel %vm1535, %v1537, %v1533
  %v1539 = vmul.f32 1.0, %v1538
  %v1540 = vtanh.pop %v1520
  %v1541 = vmul.f32 %v1539, %v1106
  %1543 = vrot.lane.b32.xlu0 %v1540, 64
  %v1544 = vpop.permute.xlu0 %1543
  %v1546 = vmul.f32 %v1539, %v1544
  %1548 = vrot.lane.b32.xlu0 %v1546, 32
  %v1549 = vpop.permute.xlu0 %1548
  %v1551 = vadd.f32 %v1541, %v1549
  %v1552 = vtanh.pop %v1551
  %1554 = vrot.lane.b32.xlu0 %v1552, 64
  %v1555 = vpop.permute.xlu0 %1554
  %v1557 = vmul.f32 %v1539, %v1555
  %v1558 = vld [vmem:[%s1 + $0x70] sm:$0xff]
  %v1559 = vld [vmem:[%s1 + $0x78] sm:$0xff]
  %v1560 = vld [vmem:[%s1 + $0x80] sm:$0xff]
  %v1561 = vld [vmem:[%s1 + $0x88] sm:$0xff]
  %v1562 = vld [vmem:[%s1 + $0x90] sm:$0xff]
  %1563 = vmatpush.msra.mxu0 0.0
  %1564 = vmatpush.msra.mxu0 0.0
  %1565 = vmatpush.msra.mxu0 0.0
  %1566 = vmatpush.msra.mxu0 0.0
  %1567 = vmatpush.msra.mxu0 0.0
  %1568 = vmatpush.msra.mxu0 0.0
  %1569 = vmatpush.msra.mxu0 0.0
  %1570 = vmatpush.msra.mxu0 0.0
  %1571 = vmatpush.msra.mxu0 0.0
  %1572 = vmatpush.msra.mxu0 0.0
  %1573 = vmatpush.msra.mxu0 0.0
  %1574 = vmatpush.msra.mxu0 0.0
  %1575 = vmatpush.msra.mxu0 0.0
  %1576 = vmatpush.msra.mxu0 0.0
  %1577 = vmatpush.msra.mxu0 0.0
  %1578 = vmatpush.msra.mxu0 %v1562
  %1579 = vmatmul.f32.gmra.mxu0 %v1445
  %v1580 = vpop.f32.mrf.mxu0
  %v1581 = vadd.f32 0.0, %v1580
  %1582 = vdwg.mxu0
  %1584 = vrot.lane.b32.xlu0 %v1557, 32
  %v1585 = vpop.permute.xlu0 %1584
  %v1586 = vsel %vm137, %v1585, 0
  %1588 = vmatpush.msra.mxu0 0.0
  %1589 = vmatpush.msra.mxu0 0.0
  %1590 = vmatpush.msra.mxu0 0.0
  %1591 = vmatpush.msra.mxu0 0.0
  %1592 = vmatpush.msra.mxu0 0.0
  %1593 = vmatpush.msra.mxu0 0.0
  %1594 = vmatpush.msra.mxu0 0.0
  %1595 = vmatpush.msra.mxu0 0.0
  %1596 = vmatpush.msra.mxu0 0.0
  %1597 = vmatpush.msra.mxu0 0.0
  %1598 = vmatpush.msra.mxu0 0.0
  %1599 = vmatpush.msra.mxu0 0.0
  %1600 = vmatpush.msra.mxu0 %v1561
  %1601 = vmatpush.msra.mxu0 %v1560
  %1602 = vmatpush.msra.mxu0 %v1559
  %1603 = vmatpush.msra.mxu0 %v1558
  %1604 = vmatmul.f32.gmra.mxu0 %v1586
  %v1605 = vpop.f32.mrf.mxu0
  %v1606 = vadd.f32 %v1581, %v1605
  %1607 = vdwg.mxu0
  %v1608 = vld [vmem:[%s1 + $0x98] sm:$0xff]
  %v1610 = vsel %vm14, %v1271, 0
  %1612 = vmatpush.msra.mxu0 0.0
  %1613 = vmatpush.msra.mxu0 0.0
  %1614 = vmatpush.msra.mxu0 0.0
  %1615 = vmatpush.msra.mxu0 0.0
  %1616 = vmatpush.msra.mxu0 0.0
  %1617 = vmatpush.msra.mxu0 0.0
  %1618 = vmatpush.msra.mxu0 0.0
  %1619 = vmatpush.msra.mxu0 0.0
  %1620 = vmatpush.msra.mxu0 0.0
  %1621 = vmatpush.msra.mxu0 0.0
  %1622 = vmatpush.msra.mxu0 0.0
  %1623 = vmatpush.msra.mxu0 0.0
  %1624 = vmatpush.msra.mxu0 0.0
  %1625 = vmatpush.msra.mxu0 0.0
  %1626 = vmatpush.msra.mxu0 0.0
  %1627 = vmatpush.msra.mxu0 %v1608
  %1628 = vmatmul.f32.gmra.mxu0 %v1610
  %v1629 = vpop.f32.mrf.mxu0
  %v1630 = vadd.f32 0.0, %v1629
  %1631 = vdwg.mxu0
  %v1632 = vadd.f32 %v1606, %v1630
  %v1633 = vld [vmem:[%s0 + $0x38] sm:$0x3]
  %v1634 = vadd.f32 %v1632, %v1633
  %v1635 = vtanh.pop %v1634
  %v1636 = vld [vmem:[%s1 + $0xa0] sm:$0xff]
  %v1637 = vld [vmem:[%s1 + $0xa8] sm:$0xff]
  %v1638 = vld [vmem:[%s1 + $0xb0] sm:$0xff]
  %v1639 = vld [vmem:[%s1 + $0xb8] sm:$0xff]
  %v1640 = vld [vmem:[%s1 + $0xc0] sm:$0xff]
  %v1641 = vld [vmem:[%s1 + $0xc8] sm:$0xff]
  %v1642 = vld [vmem:[%s1 + $0xd0] sm:$0xff]
  %v1643 = vld [vmem:[%s1 + $0xd8] sm:$0xff]
  %v1644 = vld [vmem:[%s1 + $0xe0] sm:$0xff]
  %v1645 = vld [vmem:[%s1 + $0xe8] sm:$0xff]
  %v1646 = vld [vmem:[%s1 + $0xf0] sm:$0xff]
  %v1647 = vld [vmem:[%s1 + $0xf8] sm:$0xff]
  %v1648 = vld [vmem:[%s1 + $0x100] sm:$0xff]
  %v1649 = vld [vmem:[%s1 + $0x108] sm:$0xff]
  %v1650 = vld [vmem:[%s1 + $0x110] sm:$0xff]
  %v1651 = vld [vmem:[%s1 + $0x118] sm:$0xff]
  %v1652 = vld [vmem:[%s0 + $0x30] sm:$0x3]
  %1653 = vmatpush.msra.mxu0 %v1651
  %1654 = vmatpush.msra.mxu0 %v1650
  %1655 = vmatpush.msra.mxu0 %v1649
  %1656 = vmatpush.msra.mxu0 %v1648
  %1657 = vmatpush.msra.mxu0 %v1647
  %1658 = vmatpush.msra.mxu0 %v1646
  %1659 = vmatpush.msra.mxu0 %v1645
  %1660 = vmatpush.msra.mxu0 %v1644
  %1661 = vmatpush.msra.mxu0 %v1643
  %1662 = vmatpush.msra.mxu0 %v1642
  %1663 = vmatpush.msra.mxu0 %v1641
  %1664 = vmatpush.msra.mxu0 %v1640
  %1665 = vmatpush.msra.mxu0 %v1639
  %1666 = vmatpush.msra.mxu0 %v1638
  %1667 = vmatpush.msra.mxu0 %v1637
  %1668 = vmatpush.msra.mxu0 %v1636
  %1669 = vmatmul.f32.gmra.mxu0 %v1635
  %v1670 = vpop.f32.mrf.mxu0
  %v1671 = vadd.f32 %v1652, %v1670
  %1672 = vdwg.mxu0
  %v1673 = vsel %vm338, %v1671, -inf
  %1674 = vmax.xlane.f32.xlu0 %v1673
  %v1675 = vpop.xlane.xlu0 %1674
  %v1676 = vsub.f32 %v1671, %v1675
  %v1677 = vmul.f32 %v1676, 1.442695
  %v1678 = vpow.pop %v1677
  %v1679 = vsel %vm338, %v1678, 0.0
  %1680 = vadd.xlane.f32.xlu0 %v1679
  %v1681 = vpop.xlane.xlu0 %1680
  %v1682 = vrcp.pop %v1681
  %v1683 = vmul.f32 %v1678, %v1682
  %1685 = vrot.lane.b32.xlu0 %v1683, 8
  %v1686 = vpop.permute.xlu0 %1685
  %v1688 = vsel %vm14, %v1683, %v1686
  %v1689 = vld [vmem:[%s1 + $0x120] sm:$0x3]
  %v1690 = vmul.f32 %v1688, %v1689
  %v1691 = vld [vmem:[%s0 + $0x40] sm:$0xff]
  %v1692 = vld [vmem:[%s0 + $0x48] sm:$0xff]
  %v1694 = vsel %vm52, %v1690, 0
  %1696 = vmatpush.msra.mxu0 0.0
  %1697 = vmatpush.msra.mxu0 0.0
  %1698 = vmatpush.msra.mxu0 0.0
  %1699 = vmatpush.msra.mxu0 0.0
  %1700 = vmatpush.msra.mxu0 0.0
  %1701 = vmatpush.msra.mxu0 0.0
  %1702 = vmatpush.msra.mxu0 0.0
  %1703 = vmatpush.msra.mxu0 0.0
  %1704 = vmatpush.msra.mxu0 0.0
  %1705 = vmatpush.msra.mxu0 0.0
  %1706 = vmatpush.msra.mxu0 0.0
  %1707 = vmatpush.msra.mxu0 0.0
  %1708 = vmatpush.msra.mxu0 0.0
  %1709 = vmatpush.msra.mxu0 0.0
  %1710 = vmatpush.msra.mxu0 %v1692
  %1711 = vmatpush.msra.mxu0 %v1691
  %1712 = vmatmul.f32.gmra.mxu0 %v1694
  %v1713 = vpop.f32.mrf.mxu0
  %v1714 = vadd.f32 0.0, %v1713
  %1715 = vdwg.mxu0
  %v1716 = vadd.f32 %v1271, %v1683
  %v1717 = vld [vmem:[%s1 + $0x128] sm:$0xff]
  %v1718 = vld [vmem:[%s1 + $0x130] sm:$0xff]
  %v1719 = vld [vmem:[%s1 + $0x138] sm:$0xff]
  %v1720 = vld [vmem:[%s1 + $0x140] sm:$0xff]
  %v1721 = vld [vmem:[%s1 + $0x148] sm:$0xff]
  %v1722 = vld [vmem:[%s1 + $0x150] sm:$0xff]
  %v1723 = vld [vmem:[%s1 + $0x158] sm:$0xff]
  %v1724 = vld [vmem:[%s1 + $0x160] sm:$0xff]
  %v1726 = vsel %vm137, %v1714, 0
  %1728 = vmatpush.msra.mxu0 0.0
  %1729 = vmatpush.msra.mxu0 0.0
  %1730 = vmatpush.msra.mxu0 0.0
  %1731 = vmatpush.msra.mxu0 0.0
  %1732 = vmatpush.msra.mxu0 0.0
  %1733 = vmatpush.msra.mxu0 0.0
  %1734 = vmatpush.msra.mxu0 0.0
  %1735 = vmatpush.msra.mxu0 0.0
  %1736 = vmatpush.msra.mxu0 0.0
  %1737 = vmatpush.msra.mxu0 0.0
  %1738 = vmatpush.msra.mxu0 0.0
  %1739 = vmatpush.msra.mxu0 0.0
  %1740 = vmatpush.msra.mxu0 %v1724
  %1741 = vmatpush.msra.mxu0 %v1723
  %1742 = vmatpush.msra.mxu0 %v1722
  %1743 = vmatpush.msra.mxu0 %v1721
  %1744 = vmatmul.f32.gmra.mxu0 %v1726
  %v1745 = vpop.f32.mrf.mxu0
  %v1746 = vadd.f32 0.0, %v1745
  %1747 = vdwg.mxu0
  %1748 = vmatpush.msra.mxu0 0.0
  %1749 = vmatpush.msra.mxu0 0.0
  %1750 = vmatpush.msra.mxu0 0.0
  %1751 = vmatpush.msra.mxu0 0.0
  %1752 = vmatpush.msra.mxu0 0.0
  %1753 = vmatpush.msra.mxu0 0.0
  %1754 = vmatpush.msra.mxu0 0.0
  %1755 = vmatpush.msra.mxu0 0.0
  %1756 = vmatpush.msra.mxu0 0.0
  %1757 = vmatpush.msra.mxu0 0.0
  %1758 = vmatpush.msra.mxu0 0.0
  %1759 = vmatpush.msra.mxu0 0.0
  %1760 = vmatpush.msra.mxu0 %v1720
  %1761 = vmatpush.msra.mxu0 %v1719
  %1762 = vmatpush.msra.mxu0 %v1718
  %1763 = vmatpush.msra.mxu0 %v1717
  %1764 = vmatmul.f32.gmra.mxu0 %v1586
  %v1765 = vpop.f32.mrf.mxu0
  %v1766 = vadd.f32 %v1746, %v1765
  %1767 = vdwg.mxu0
  %v1768 = vld [vmem:[%s1 + $0x168] sm:$0xff]
  %v1769 = vld [vmem:[%s1 + $0x170] sm:$0xff]
  %v1770 = vld [vmem:[%s1 + $0x178] sm:$0xff]
  %v1771 = vld [vmem:[%s1 + $0x180] sm:$0xff]
  %1772 = vmatpush.msra.mxu0 0.0
  %1773 = vmatpush.msra.mxu0 0.0
  %1774 = vmatpush.msra.mxu0 0.0
  %1775 = vmatpush.msra.mxu0 0.0
  %1776 = vmatpush.msra.mxu0 0.0
  %1777 = vmatpush.msra.mxu0 0.0
  %1778 = vmatpush.msra.mxu0 0.0
  %1779 = vmatpush.msra.mxu0 0.0
  %1780 = vmatpush.msra.mxu0 0.0
  %1781 = vmatpush.msra.mxu0 0.0
  %1782 = vmatpush.msra.mxu0 0.0
  %1783 = vmatpush.msra.mxu0 0.0
  %1784 = vmatpush.msra.mxu0 %v1771
  %1785 = vmatpush.msra.mxu0 %v1770
  %1786 = vmatpush.msra.mxu0 %v1769
  %1787 = vmatpush.msra.mxu0 %v1768
  %1788 = vmatmul.f32.gmra.mxu0 %v1419
  %v1789 = vpop.f32.mrf.mxu0
  %v1790 = vadd.f32 0.0, %v1789
  %1791 = vdwg.mxu0
  %v1792 = vadd.f32 %v1766, %v1790
  %v1793 = vld [vmem:[%s1 + $0x188] sm:$0x1]
  %v1794 = vperm.slane %v1793, 0
  %v1795 = vadd.f32 %v1792, %v1794
  %v1796 = vxor.u32 %v1795, 2147483648
  %v1797 = vmul.f32 %v1796, 1.442695
  %v1798 = vpow.pop %v1797
  %v1799 = vadd.f32 %v1798, 1.0
  %v1800 = vrcp.pop %v1799
  %v1801 = vmul.f32 %v1799, %v1800
  %v1802 = vsub.f32 1.0, %v1801
  %v1803 = vmul.f32 %v1800, %v1802
  %v1804 = vadd.f32 %v1800, %v1803
  %vm1805 = vweird.f32 %v1799
  %vm1806 = vweird.f32 %v1800
  %vm1807 = vmor %vm1805, %vm1806
  %v1808 = vsel %vm1807, %v1800, %v1804
  %v1809 = vand.u32 2147483647, %v1799
  %vm1810 = vcmp.eq.f32.partialorder %v1809, 8.507059e+37
  %v1811 = vand.u32 %v1799, 2147483648
  %v1812 = vor.u32 1.1754944e-38, %v1811
  %v1813 = vsel %vm1810, %v1812, %v1808
  %v1814 = vmul.f32 1.0, %v1813
  %v1815 = vtanh.pop %v1795
  %v1816 = vmul.f32 %v1814, %v1381
  %1818 = vrot.lane.b32.xlu0 %v1815, 64
  %v1819 = vpop.permute.xlu0 %1818
  %v1821 = vmul.f32 %v1814, %v1819
  %1823 = vrot.lane.b32.xlu0 %v1821, 32
  %v1824 = vpop.permute.xlu0 %1823
  %v1826 = vadd.f32 %v1816, %v1824
  %v1827 = vtanh.pop %v1826
  %1829 = vrot.lane.b32.xlu0 %v1827, 64
  %v1830 = vpop.permute.xlu0 %1829
  %v1832 = vmul.f32 %v1814, %v1830
  %v1833 = vld [vmem:[%s1 + $0x190] sm:$0xff]
  %v1834 = vld [vmem:[%s1 + $0x198] sm:$0xff]
  %v1835 = vld [vmem:[%s1 + $0x1a0] sm:$0xff]
  %v1836 = vld [vmem:[%s1 + $0x1a8] sm:$0xff]
  %v1837 = vld [vmem:[%s1 + $0x1b0] sm:$0xff]
  %v1838 = vld [vmem:[%s1 + $0x1b8] sm:$0xff]
  %v1839 = vld [vmem:[%s1 + $0x1c0] sm:$0xff]
  %v1840 = vld [vmem:[%s1 + $0x1c8] sm:$0xff]
  %1841 = vmatpush.msra.mxu0 0.0
  %1842 = vmatpush.msra.mxu0 0.0
  %1843 = vmatpush.msra.mxu0 0.0
  %1844 = vmatpush.msra.mxu0 0.0
  %1845 = vmatpush.msra.mxu0 0.0
  %1846 = vmatpush.msra.mxu0 0.0
  %1847 = vmatpush.msra.mxu0 0.0
  %1848 = vmatpush.msra.mxu0 0.0
  %1849 = vmatpush.msra.mxu0 0.0
  %1850 = vmatpush.msra.mxu0 0.0
  %1851 = vmatpush.msra.mxu0 0.0
  %1852 = vmatpush.msra.mxu0 0.0
  %1853 = vmatpush.msra.mxu0 %v1840
  %1854 = vmatpush.msra.mxu0 %v1839
  %1855 = vmatpush.msra.mxu0 %v1838
  %1856 = vmatpush.msra.mxu0 %v1837
  %1857 = vmatmul.f32.gmra.mxu0 %v1726
  %v1858 = vpop.f32.mrf.mxu0
  %v1859 = vadd.f32 0.0, %v1858
  %1860 = vdwg.mxu0
  %1862 = vrot.lane.b32.xlu0 %v1832, 32
  %v1863 = vpop.permute.xlu0 %1862
  %v1864 = vsel %vm137, %v1863, 0
  %1866 = vmatpush.msra.mxu0 0.0
  %1867 = vmatpush.msra.mxu0 0.0
  %1868 = vmatpush.msra.mxu0 0.0
  %1869 = vmatpush.msra.mxu0 0.0
  %1870 = vmatpush.msra.mxu0 0.0
  %1871 = vmatpush.msra.mxu0 0.0
  %1872 = vmatpush.msra.mxu0 0.0
  %1873 = vmatpush.msra.mxu0 0.0
  %1874 = vmatpush.msra.mxu0 0.0
  %1875 = vmatpush.msra.mxu0 0.0
  %1876 = vmatpush.msra.mxu0 0.0
  %1877 = vmatpush.msra.mxu0 0.0
  %1878 = vmatpush.msra.mxu0 %v1836
  %1879 = vmatpush.msra.mxu0 %v1835
  %1880 = vmatpush.msra.mxu0 %v1834
  %1881 = vmatpush.msra.mxu0 %v1833
  %1882 = vmatmul.f32.gmra.mxu0 %v1864
  %v1883 = vpop.f32.mrf.mxu0
  %v1884 = vadd.f32 %v1859, %v1883
  %1885 = vdwg.mxu0
  %v1886 = vld [vmem:[%s1 + $0x1d0] sm:$0x1]
  %v1887 = vperm.slane %v1886, 0
  %v1888 = vadd.f32 %v1884, %v1887
  %v1889 = vld [vmem:[%s1 + $0x1d8] sm:$0xff]
  %v1890 = vsel %vm14, %v1683, 0
  %1892 = vmatpush.msra.mxu0 0.0
  %1893 = vmatpush.msra.mxu0 0.0
  %1894 = vmatpush.msra.mxu0 0.0
  %1895 = vmatpush.msra.mxu0 0.0
  %1896 = vmatpush.msra.mxu0 0.0
  %1897 = vmatpush.msra.mxu0 0.0
  %1898 = vmatpush.msra.mxu0 0.0
  %1899 = vmatpush.msra.mxu0 0.0
  %1900 = vmatpush.msra.mxu0 0.0
  %1901 = vmatpush.msra.mxu0 0.0
  %1902 = vmatpush.msra.mxu0 0.0
  %1903 = vmatpush.msra.mxu0 0.0
  %1904 = vmatpush.msra.mxu0 0.0
  %1905 = vmatpush.msra.mxu0 0.0
  %1906 = vmatpush.msra.mxu0 0.0
  %1907 = vmatpush.msra.mxu0 %v1889
  %1908 = vmatmul.f32.gmra.mxu0 %v1890
  %v1909 = vpop.f32.mrf.mxu0
  %v1910 = vadd.f32 0.0, %v1909
  %1911 = vdwg.mxu0
  %v1912 = vadd.f32 %v1888, %v1910
  %s1913 = scalar_lea.vmem %s2, 6
  %1914 = vst [vmem:[%s1913] sm:$0x3] %v1912
  %v1915 = vld [vmem:[%s128] sm:$0x3]
  %v1916 = vld [vmem:[%s1 + $0x28] sm:$0xff]
  %v1917 = vld [vmem:[%s1 + $0x30] sm:$0xff]
  %v1918 = vld [vmem:[%s1 + $0x38] sm:$0xff]
  %v1919 = vld [vmem:[%s1 + $0x40] sm:$0xff]
  %1920 = vmatpush.msra.mxu0 0.0
  %1921 = vmatpush.msra.mxu0 0.0
  %1922 = vmatpush.msra.mxu0 0.0
  %1923 = vmatpush.msra.mxu0 0.0
  %1924 = vmatpush.msra.mxu0 0.0
  %1925 = vmatpush.msra.mxu0 0.0
  %1926 = vmatpush.msra.mxu0 0.0
  %1927 = vmatpush.msra.mxu0 0.0
  %1928 = vmatpush.msra.mxu0 0.0
  %1929 = vmatpush.msra.mxu0 0.0
  %1930 = vmatpush.msra.mxu0 0.0
  %1931 = vmatpush.msra.mxu0 0.0
  %1932 = vmatpush.msra.mxu0 %v1919
  %1933 = vmatpush.msra.mxu0 %v1918
  %1934 = vmatpush.msra.mxu0 %v1917
  %1935 = vmatpush.msra.mxu0 %v1916
  %1936 = vmatmul.f32.gmra.mxu0 %v1726
  %v1937 = vpop.f32.mrf.mxu0
  %v1938 = vadd.f32 0.0, %v1937
  %1939 = vdwg.mxu0
  %v1940 = vadd.f32 %v1915, %v1938
  %v1941 = vld [vmem:[%s1 + $0x48] sm:$0xff]
  %v1942 = vld [vmem:[%s1 + $0x50] sm:$0xff]
  %v1943 = vld [vmem:[%s1 + $0x58] sm:$0xff]
  %v1944 = vld [vmem:[%s1 + $0x60] sm:$0xff]
  %1945 = vmatpush.msra.mxu0 0.0
  %1946 = vmatpush.msra.mxu0 0.0
  %1947 = vmatpush.msra.mxu0 0.0
  %1948 = vmatpush.msra.mxu0 0.0
  %1949 = vmatpush.msra.mxu0 0.0
  %1950 = vmatpush.msra.mxu0 0.0
  %1951 = vmatpush.msra.mxu0 0.0
  %1952 = vmatpush.msra.mxu0 0.0
  %1953 = vmatpush.msra.mxu0 0.0
  %1954 = vmatpush.msra.mxu0 0.0
  %1955 = vmatpush.msra.mxu0 0.0
  %1956 = vmatpush.msra.mxu0 0.0
  %1957 = vmatpush.msra.mxu0 %v1944
  %1958 = vmatpush.msra.mxu0 %v1943
  %1959 = vmatpush.msra.mxu0 %v1942
  %1960 = vmatpush.msra.mxu0 %v1941
  %1961 = vmatmul.f32.gmra.mxu0 %v1586
  %v1962 = vpop.f32.mrf.mxu0
  %v1963 = vadd.f32 0.0, %v1962
  %1964 = vdwg.mxu0
  %v1965 = vadd.f32 %v1940, %v1963
  %v1966 = vxor.u32 %v1965, 2147483648
  %v1967 = vmul.f32 %v1966, 1.442695
  %v1968 = vpow.pop %v1967
  %v1969 = vadd.f32 %v1968, 1.0
  %v1970 = vrcp.pop %v1969
  %v1971 = vmul.f32 %v1969, %v1970
  %v1972 = vsub.f32 1.0, %v1971
  %v1973 = vmul.f32 %v1970, %v1972
  %v1974 = vadd.f32 %v1970, %v1973
  %vm1975 = vweird.f32 %v1969
  %vm1976 = vweird.f32 %v1970
  %vm1977 = vmor %vm1975, %vm1976
  %v1978 = vsel %vm1977, %v1970, %v1974
  %v1979 = vand.u32 2147483647, %v1969
  %vm1980 = vcmp.eq.f32.partialorder %v1979, 8.507059e+37
  %v1981 = vand.u32 %v1969, 2147483648
  %v1982 = vor.u32 1.1754944e-38, %v1981
  %v1983 = vsel %vm1980, %v1982, %v1978
  %v1984 = vmul.f32 1.0, %v1983
  %v1985 = vtanh.pop %v1965
  %v1986 = vmul.f32 %v1984, %v1551
  %1988 = vrot.lane.b32.xlu0 %v1985, 64
  %v1989 = vpop.permute.xlu0 %1988
  %v1991 = vmul.f32 %v1984, %v1989
  %1993 = vrot.lane.b32.xlu0 %v1991, 32
  %v1994 = vpop.permute.xlu0 %1993
  %v1996 = vadd.f32 %v1986, %v1994
  %v1997 = vtanh.pop %v1996
  %1999 = vrot.lane.b32.xlu0 %v1997, 64
  %v2000 = vpop.permute.xlu0 %1999
  %v2002 = vmul.f32 %v1984, %v2000
  %v2003 = vld [vmem:[%s1 + $0x70] sm:$0xff]
  %v2004 = vld [vmem:[%s1 + $0x78] sm:$0xff]
  %v2005 = vld [vmem:[%s1 + $0x80] sm:$0xff]
  %v2006 = vld [vmem:[%s1 + $0x88] sm:$0xff]
  %v2007 = vld [vmem:[%s1 + $0x90] sm:$0xff]
  %2008 = vmatpush.msra.mxu0 0.0
  %2009 = vmatpush.msra.mxu0 0.0
  %2010 = vmatpush.msra.mxu0 0.0
  %2011 = vmatpush.msra.mxu0 0.0
  %2012 = vmatpush.msra.mxu0 0.0
  %2013 = vmatpush.msra.mxu0 0.0
  %2014 = vmatpush.msra.mxu0 0.0
  %2015 = vmatpush.msra.mxu0 0.0
  %2016 = vmatpush.msra.mxu0 0.0
  %2017 = vmatpush.msra.mxu0 0.0
  %2018 = vmatpush.msra.mxu0 0.0
  %2019 = vmatpush.msra.mxu0 0.0
  %2020 = vmatpush.msra.mxu0 0.0
  %2021 = vmatpush.msra.mxu0 0.0
  %2022 = vmatpush.msra.mxu0 0.0
  %2023 = vmatpush.msra.mxu0 %v2007
  %2024 = vmatmul.f32.gmra.mxu0 %v1890
  %v2025 = vpop.f32.mrf.mxu0
  %v2026 = vadd.f32 0.0, %v2025
  %2027 = vdwg.mxu0
  %2029 = vrot.lane.b32.xlu0 %v2002, 32
  %v2030 = vpop.permute.xlu0 %2029
  %v2031 = vsel %vm137, %v2030, 0
  %2033 = vmatpush.msra.mxu0 0.0
  %2034 = vmatpush.msra.mxu0 0.0
  %2035 = vmatpush.msra.mxu0 0.0
  %2036 = vmatpush.msra.mxu0 0.0
  %2037 = vmatpush.msra.mxu0 0.0
  %2038 = vmatpush.msra.mxu0 0.0
  %2039 = vmatpush.msra.mxu0 0.0
  %2040 = vmatpush.msra.mxu0 0.0
  %2041 = vmatpush.msra.mxu0 0.0
  %2042 = vmatpush.msra.mxu0 0.0
  %2043 = vmatpush.msra.mxu0 0.0
  %2044 = vmatpush.msra.mxu0 0.0
  %2045 = vmatpush.msra.mxu0 %v2006
  %2046 = vmatpush.msra.mxu0 %v2005
  %2047 = vmatpush.msra.mxu0 %v2004
  %2048 = vmatpush.msra.mxu0 %v2003
  %2049 = vmatmul.f32.gmra.mxu0 %v2031
  %v2050 = vpop.f32.mrf.mxu0
  %v2051 = vadd.f32 %v2026, %v2050
  %2052 = vdwg.mxu0
  %v2053 = vld [vmem:[%s1 + $0x98] sm:$0xff]
  %v2055 = vsel %vm14, %v1716, 0
  %2057 = vmatpush.msra.mxu0 0.0
  %2058 = vmatpush.msra.mxu0 0.0
  %2059 = vmatpush.msra.mxu0 0.0
  %2060 = vmatpush.msra.mxu0 0.0
  %2061 = vmatpush.msra.mxu0 0.0
  %2062 = vmatpush.msra.mxu0 0.0
  %2063 = vmatpush.msra.mxu0 0.0
  %2064 = vmatpush.msra.mxu0 0.0
  %2065 = vmatpush.msra.mxu0 0.0
  %2066 = vmatpush.msra.mxu0 0.0
  %2067 = vmatpush.msra.mxu0 0.0
  %2068 = vmatpush.msra.mxu0 0.0
  %2069 = vmatpush.msra.mxu0 0.0
  %2070 = vmatpush.msra.mxu0 0.0
  %2071 = vmatpush.msra.mxu0 0.0
  %2072 = vmatpush.msra.mxu0 %v2053
  %2073 = vmatmul.f32.gmra.mxu0 %v2055
  %v2074 = vpop.f32.mrf.mxu0
  %v2075 = vadd.f32 0.0, %v2074
  %2076 = vdwg.mxu0
  %v2077 = vadd.f32 %v2051, %v2075
  %v2078 = vld [vmem:[%s0 + $0x38] sm:$0x3]
  %v2079 = vadd.f32 %v2077, %v2078
  %v2080 = vtanh.pop %v2079
  %v2081 = vld [vmem:[%s1 + $0xa0] sm:$0xff]
  %v2082 = vld [vmem:[%s1 + $0xa8] sm:$0xff]
  %v2083 = vld [vmem:[%s1 + $0xb0] sm:$0xff]
  %v2084 = vld [vmem:[%s1 + $0xb8] sm:$0xff]
  %v2085 = vld [vmem:[%s1 + $0xc0] sm:$0xff]
  %v2086 = vld [vmem:[%s1 + $0xc8] sm:$0xff]
  %v2087 = vld [vmem:[%s1 + $0xd0] sm:$0xff]
  %v2088 = vld [vmem:[%s1 + $0xd8] sm:$0xff]
  %v2089 = vld [vmem:[%s1 + $0xe0] sm:$0xff]
  %v2090 = vld [vmem:[%s1 + $0xe8] sm:$0xff]
  %v2091 = vld [vmem:[%s1 + $0xf0] sm:$0xff]
  %v2092 = vld [vmem:[%s1 + $0xf8] sm:$0xff]
  %v2093 = vld [vmem:[%s1 + $0x100] sm:$0xff]
  %v2094 = vld [vmem:[%s1 + $0x108] sm:$0xff]
  %v2095 = vld [vmem:[%s1 + $0x110] sm:$0xff]
  %v2096 = vld [vmem:[%s1 + $0x118] sm:$0xff]
  %v2097 = vld [vmem:[%s0 + $0x30] sm:$0x3]
  %2098 = vmatpush.msra.mxu0 %v2096
  %2099 = vmatpush.msra.mxu0 %v2095
  %2100 = vmatpush.msra.mxu0 %v2094
  %2101 = vmatpush.msra.mxu0 %v2093
  %2102 = vmatpush.msra.mxu0 %v2092
  %2103 = vmatpush.msra.mxu0 %v2091
  %2104 = vmatpush.msra.mxu0 %v2090
  %2105 = vmatpush.msra.mxu0 %v2089
  %2106 = vmatpush.msra.mxu0 %v2088
  %2107 = vmatpush.msra.mxu0 %v2087
  %2108 = vmatpush.msra.mxu0 %v2086
  %2109 = vmatpush.msra.mxu0 %v2085
  %2110 = vmatpush.msra.mxu0 %v2084
  %2111 = vmatpush.msra.mxu0 %v2083
  %2112 = vmatpush.msra.mxu0 %v2082
  %2113 = vmatpush.msra.mxu0 %v2081
  %2114 = vmatmul.f32.gmra.mxu0 %v2080
  %v2115 = vpop.f32.mrf.mxu0
  %v2116 = vadd.f32 %v2097, %v2115
  %2117 = vdwg.mxu0
  %v2118 = vsel %vm338, %v2116, -inf
  %2119 = vmax.xlane.f32.xlu0 %v2118
  %v2120 = vpop.xlane.xlu0 %2119
  %v2121 = vsub.f32 %v2116, %v2120
  %v2122 = vmul.f32 %v2121, 1.442695
  %v2123 = vpow.pop %v2122
  %v2124 = vsel %vm338, %v2123, 0.0
  %2125 = vadd.xlane.f32.xlu0 %v2124
  %v2126 = vpop.xlane.xlu0 %2125
  %v2127 = vrcp.pop %v2126
  %v2128 = vmul.f32 %v2123, %v2127
  %2130 = vrot.lane.b32.xlu0 %v2128, 8
  %v2131 = vpop.permute.xlu0 %2130
  %v2133 = vsel %vm14, %v2128, %v2131
  %v2134 = vld [vmem:[%s1 + $0x120] sm:$0x3]
  %v2135 = vmul.f32 %v2133, %v2134
  %v2136 = vld [vmem:[%s0 + $0x40] sm:$0xff]
  %v2137 = vld [vmem:[%s0 + $0x48] sm:$0xff]
  %v2139 = vsel %vm52, %v2135, 0
  %2141 = vmatpush.msra.mxu0 0.0
  %2142 = vmatpush.msra.mxu0 0.0
  %2143 = vmatpush.msra.mxu0 0.0
  %2144 = vmatpush.msra.mxu0 0.0
  %2145 = vmatpush.msra.mxu0 0.0
  %2146 = vmatpush.msra.mxu0 0.0
  %2147 = vmatpush.msra.mxu0 0.0
  %2148 = vmatpush.msra.mxu0 0.0
  %2149 = vmatpush.msra.mxu0 0.0
  %2150 = vmatpush.msra.mxu0 0.0
  %2151 = vmatpush.msra.mxu0 0.0
  %2152 = vmatpush.msra.mxu0 0.0
  %2153 = vmatpush.msra.mxu0 0.0
  %2154 = vmatpush.msra.mxu0 0.0
  %2155 = vmatpush.msra.mxu0 %v2137
  %2156 = vmatpush.msra.mxu0 %v2136
  %2157 = vmatmul.f32.gmra.mxu0 %v2139
  %v2158 = vpop.f32.mrf.mxu0
  %v2159 = vadd.f32 0.0, %v2158
  %2160 = vdwg.mxu0
  %v2161 = vadd.f32 %v1716, %v2128
  %v2162 = vld [vmem:[%s1 + $0x128] sm:$0xff]
  %v2163 = vld [vmem:[%s1 + $0x130] sm:$0xff]
  %v2164 = vld [vmem:[%s1 + $0x138] sm:$0xff]
  %v2165 = vld [vmem:[%s1 + $0x140] sm:$0xff]
  %v2166 = vld [vmem:[%s1 + $0x148] sm:$0xff]
  %v2167 = vld [vmem:[%s1 + $0x150] sm:$0xff]
  %v2168 = vld [vmem:[%s1 + $0x158] sm:$0xff]
  %v2169 = vld [vmem:[%s1 + $0x160] sm:$0xff]
  %v2171 = vsel %vm137, %v2159, 0
  %2173 = vmatpush.msra.mxu0 0.0
  %2174 = vmatpush.msra.mxu0 0.0
  %2175 = vmatpush.msra.mxu0 0.0
  %2176 = vmatpush.msra.mxu0 0.0
  %2177 = vmatpush.msra.mxu0 0.0
  %2178 = vmatpush.msra.mxu0 0.0
  %2179 = vmatpush.msra.mxu0 0.0
  %2180 = vmatpush.msra.mxu0 0.0
  %2181 = vmatpush.msra.mxu0 0.0
  %2182 = vmatpush.msra.mxu0 0.0
  %2183 = vmatpush.msra.mxu0 0.0
  %2184 = vmatpush.msra.mxu0 0.0
  %2185 = vmatpush.msra.mxu0 %v2169
  %2186 = vmatpush.msra.mxu0 %v2168
  %2187 = vmatpush.msra.mxu0 %v2167
  %2188 = vmatpush.msra.mxu0 %v2166
  %2189 = vmatmul.f32.gmra.mxu0 %v2171
  %v2190 = vpop.f32.mrf.mxu0
  %v2191 = vadd.f32 0.0, %v2190
  %2192 = vdwg.mxu0
  %2193 = vmatpush.msra.mxu0 0.0
  %2194 = vmatpush.msra.mxu0 0.0
  %2195 = vmatpush.msra.mxu0 0.0
  %2196 = vmatpush.msra.mxu0 0.0
  %2197 = vmatpush.msra.mxu0 0.0
  %2198 = vmatpush.msra.mxu0 0.0
  %2199 = vmatpush.msra.mxu0 0.0
  %2200 = vmatpush.msra.mxu0 0.0
  %2201 = vmatpush.msra.mxu0 0.0
  %2202 = vmatpush.msra.mxu0 0.0
  %2203 = vmatpush.msra.mxu0 0.0
  %2204 = vmatpush.msra.mxu0 0.0
  %2205 = vmatpush.msra.mxu0 %v2165
  %2206 = vmatpush.msra.mxu0 %v2164
  %2207 = vmatpush.msra.mxu0 %v2163
  %2208 = vmatpush.msra.mxu0 %v2162
  %2209 = vmatmul.f32.gmra.mxu0 %v2031
  %v2210 = vpop.f32.mrf.mxu0
  %v2211 = vadd.f32 %v2191, %v2210
  %2212 = vdwg.mxu0
  %v2213 = vld [vmem:[%s1 + $0x168] sm:$0xff]
  %v2214 = vld [vmem:[%s1 + $0x170] sm:$0xff]
  %v2215 = vld [vmem:[%s1 + $0x178] sm:$0xff]
  %v2216 = vld [vmem:[%s1 + $0x180] sm:$0xff]
  %2217 = vmatpush.msra.mxu0 0.0
  %2218 = vmatpush.msra.mxu0 0.0
  %2219 = vmatpush.msra.mxu0 0.0
  %2220 = vmatpush.msra.mxu0 0.0
  %2221 = vmatpush.msra.mxu0 0.0
  %2222 = vmatpush.msra.mxu0 0.0
  %2223 = vmatpush.msra.mxu0 0.0
  %2224 = vmatpush.msra.mxu0 0.0
  %2225 = vmatpush.msra.mxu0 0.0
  %2226 = vmatpush.msra.mxu0 0.0
  %2227 = vmatpush.msra.mxu0 0.0
  %2228 = vmatpush.msra.mxu0 0.0
  %2229 = vmatpush.msra.mxu0 %v2216
  %2230 = vmatpush.msra.mxu0 %v2215
  %2231 = vmatpush.msra.mxu0 %v2214
  %2232 = vmatpush.msra.mxu0 %v2213
  %2233 = vmatmul.f32.gmra.mxu0 %v1864
  %v2234 = vpop.f32.mrf.mxu0
  %v2235 = vadd.f32 0.0, %v2234
  %2236 = vdwg.mxu0
  %v2237 = vadd.f32 %v2211, %v2235
  %v2238 = vld [vmem:[%s1 + $0x188] sm:$0x1]
  %v2239 = vperm.slane %v2238, 0
  %v2240 = vadd.f32 %v2237, %v2239
  %v2241 = vxor.u32 %v2240, 2147483648
  %v2242 = vmul.f32 %v2241, 1.442695
  %v2243 = vpow.pop %v2242
  %v2244 = vadd.f32 %v2243, 1.0
  %v2245 = vrcp.pop %v2244
  %v2246 = vmul.f32 %v2244, %v2245
  %v2247 = vsub.f32 1.0, %v2246
  %v2248 = vmul.f32 %v2245, %v2247
  %v2249 = vadd.f32 %v2245, %v2248
  %vm2250 = vweird.f32 %v2244
  %vm2251 = vweird.f32 %v2245
  %vm2252 = vmor %vm2250, %vm2251
  %v2253 = vsel %vm2252, %v2245, %v2249
  %v2254 = vand.u32 2147483647, %v2244
  %vm2255 = vcmp.eq.f32.partialorder %v2254, 8.507059e+37
  %v2256 = vand.u32 %v2244, 2147483648
  %v2257 = vor.u32 1.1754944e-38, %v2256
  %v2258 = vsel %vm2255, %v2257, %v2253
  %v2259 = vmul.f32 1.0, %v2258
  %v2260 = vtanh.pop %v2240
  %v2261 = vmul.f32 %v2259, %v1826
  %2263 = vrot.lane.b32.xlu0 %v2260, 64
  %v2264 = vpop.permute.xlu0 %2263
  %v2266 = vmul.f32 %v2259, %v2264
  %2268 = vrot.lane.b32.xlu0 %v2266, 32
  %v2269 = vpop.permute.xlu0 %2268
  %v2271 = vadd.f32 %v2261, %v2269
  %v2272 = vtanh.pop %v2271
  %2274 = vrot.lane.b32.xlu0 %v2272, 64
  %v2275 = vpop.permute.xlu0 %2274
  %v2277 = vmul.f32 %v2259, %v2275
  %v2278 = vld [vmem:[%s1 + $0x190] sm:$0xff]
  %v2279 = vld [vmem:[%s1 + $0x198] sm:$0xff]
  %v2280 = vld [vmem:[%s1 + $0x1a0] sm:$0xff]
  %v2281 = vld [vmem:[%s1 + $0x1a8] sm:$0xff]
  %v2282 = vld [vmem:[%s1 + $0x1b0] sm:$0xff]
  %v2283 = vld [vmem:[%s1 + $0x1b8] sm:$0xff]
  %v2284 = vld [vmem:[%s1 + $0x1c0] sm:$0xff]
  %v2285 = vld [vmem:[%s1 + $0x1c8] sm:$0xff]
  %2286 = vmatpush.msra.mxu0 0.0
  %2287 = vmatpush.msra.mxu0 0.0
  %2288 = vmatpush.msra.mxu0 0.0
  %2289 = vmatpush.msra.mxu0 0.0
  %2290 = vmatpush.msra.mxu0 0.0
  %2291 = vmatpush.msra.mxu0 0.0
  %2292 = vmatpush.msra.mxu0 0.0
  %2293 = vmatpush.msra.mxu0 0.0
  %2294 = vmatpush.msra.mxu0 0.0
  %2295 = vmatpush.msra.mxu0 0.0
  %2296 = vmatpush.msra.mxu0 0.0
  %2297 = vmatpush.msra.mxu0 0.0
  %2298 = vmatpush.msra.mxu0 %v2285
  %2299 = vmatpush.msra.mxu0 %v2284
  %2300 = vmatpush.msra.mxu0 %v2283
  %2301 = vmatpush.msra.mxu0 %v2282
  %2302 = vmatmul.f32.gmra.mxu0 %v2171
  %v2303 = vpop.f32.mrf.mxu0
  %v2304 = vadd.f32 0.0, %v2303
  %2305 = vdwg.mxu0
  %2307 = vrot.lane.b32.xlu0 %v2277, 32
  %v2308 = vpop.permute.xlu0 %2307
  %v2309 = vsel %vm137, %v2308, 0
  %2311 = vmatpush.msra.mxu0 0.0
  %2312 = vmatpush.msra.mxu0 0.0
  %2313 = vmatpush.msra.mxu0 0.0
  %2314 = vmatpush.msra.mxu0 0.0
  %2315 = vmatpush.msra.mxu0 0.0
  %2316 = vmatpush.msra.mxu0 0.0
  %2317 = vmatpush.msra.mxu0 0.0
  %2318 = vmatpush.msra.mxu0 0.0
  %2319 = vmatpush.msra.mxu0 0.0
  %2320 = vmatpush.msra.mxu0 0.0
  %2321 = vmatpush.msra.mxu0 0.0
  %2322 = vmatpush.msra.mxu0 0.0
  %2323 = vmatpush.msra.mxu0 %v2281
  %2324 = vmatpush.msra.mxu0 %v2280
  %2325 = vmatpush.msra.mxu0 %v2279
  %2326 = vmatpush.msra.mxu0 %v2278
  %2327 = vmatmul.f32.gmra.mxu0 %v2309
  %v2328 = vpop.f32.mrf.mxu0
  %v2329 = vadd.f32 %v2304, %v2328
  %2330 = vdwg.mxu0
  %v2331 = vld [vmem:[%s1 + $0x1d0] sm:$0x1]
  %v2332 = vperm.slane %v2331, 0
  %v2333 = vadd.f32 %v2329, %v2332
  %v2334 = vld [vmem:[%s1 + $0x1d8] sm:$0xff]
  %v2335 = vsel %vm14, %v2128, 0
  %2337 = vmatpush.msra.mxu0 0.0
  %2338 = vmatpush.msra.mxu0 0.0
  %2339 = vmatpush.msra.mxu0 0.0
  %2340 = vmatpush.msra.mxu0 0.0
  %2341 = vmatpush.msra.mxu0 0.0
  %2342 = vmatpush.msra.mxu0 0.0
  %2343 = vmatpush.msra.mxu0 0.0
  %2344 = vmatpush.msra.mxu0 0.0
  %2345 = vmatpush.msra.mxu0 0.0
  %2346 = vmatpush.msra.mxu0 0.0
  %2347 = vmatpush.msra.mxu0 0.0
  %2348 = vmatpush.msra.mxu0 0.0
  %2349 = vmatpush.msra.mxu0 0.0
  %2350 = vmatpush.msra.mxu0 0.0
  %2351 = vmatpush.msra.mxu0 0.0
  %2352 = vmatpush.msra.mxu0 %v2334
  %2353 = vmatmul.f32.gmra.mxu0 %v2335
  %v2354 = vpop.f32.mrf.mxu0
  %v2355 = vadd.f32 0.0, %v2354
  %2356 = vdwg.mxu0
  %v2357 = vadd.f32 %v2333, %v2355
  %s2358 = scalar_lea.vmem %s2, 8
  %2359 = vst [vmem:[%s2358] sm:$0x3] %v2357
  %v2360 = vld [vmem:[%s130] sm:$0x3]
  %v2361 = vld [vmem:[%s1 + $0x28] sm:$0xff]
  %v2362 = vld [vmem:[%s1 + $0x30] sm:$0xff]
  %v2363 = vld [vmem:[%s1 + $0x38] sm:$0xff]
  %v2364 = vld [vmem:[%s1 + $0x40] sm:$0xff]
  %2365 = vmatpush.msra.mxu0 0.0
  %2366 = vmatpush.msra.mxu0 0.0
  %2367 = vmatpush.msra.mxu0 0.0
  %2368 = vmatpush.msra.mxu0 0.0
  %2369 = vmatpush.msra.mxu0 0.0
  %2370 = vmatpush.msra.mxu0 0.0
  %2371 = vmatpush.msra.mxu0 0.0
  %2372 = vmatpush.msra.mxu0 0.0
  %2373 = vmatpush.msra.mxu0 0.0
  %2374 = vmatpush.msra.mxu0 0.0
  %2375 = vmatpush.msra.mxu0 0.0
  %2376 = vmatpush.msra.mxu0 0.0
  %2377 = vmatpush.msra.mxu0 %v2364
  %2378 = vmatpush.msra.mxu0 %v2363
  %2379 = vmatpush.msra.mxu0 %v2362
  %2380 = vmatpush.msra.mxu0 %v2361
  %2381 = vmatmul.f32.gmra.mxu0 %v2171
  %v2382 = vpop.f32.mrf.mxu0
  %v2383 = vadd.f32 0.0, %v2382
  %2384 = vdwg.mxu0
  %v2385 = vadd.f32 %v2360, %v2383
  %v2386 = vld [vmem:[%s1 + $0x48] sm:$0xff]
  %v2387 = vld [vmem:[%s1 + $0x50] sm:$0xff]
  %v2388 = vld [vmem:[%s1 + $0x58] sm:$0xff]
  %v2389 = vld [vmem:[%s1 + $0x60] sm:$0xff]
  %2390 = vmatpush.msra.mxu0 0.0
  %2391 = vmatpush.msra.mxu0 0.0
  %2392 = vmatpush.msra.mxu0 0.0
  %2393 = vmatpush.msra.mxu0 0.0
  %2394 = vmatpush.msra.mxu0 0.0
  %2395 = vmatpush.msra.mxu0 0.0
  %2396 = vmatpush.msra.mxu0 0.0
  %2397 = vmatpush.msra.mxu0 0.0
  %2398 = vmatpush.msra.mxu0 0.0
  %2399 = vmatpush.msra.mxu0 0.0
  %2400 = vmatpush.msra.mxu0 0.0
  %2401 = vmatpush.msra.mxu0 0.0
  %2402 = vmatpush.msra.mxu0 %v2389
  %2403 = vmatpush.msra.mxu0 %v2388
  %2404 = vmatpush.msra.mxu0 %v2387
  %2405 = vmatpush.msra.mxu0 %v2386
  %2406 = vmatmul.f32.gmra.mxu0 %v2031
  %v2407 = vpop.f32.mrf.mxu0
  %v2408 = vadd.f32 0.0, %v2407
  %2409 = vdwg.mxu0
  %v2410 = vadd.f32 %v2385, %v2408
  %v2411 = vxor.u32 %v2410, 2147483648
  %v2412 = vmul.f32 %v2411, 1.442695
  %v2413 = vpow.pop %v2412
  %v2414 = vadd.f32 %v2413, 1.0
  %v2415 = vrcp.pop %v2414
  %v2416 = vmul.f32 %v2414, %v2415
  %v2417 = vsub.f32 1.0, %v2416
  %v2418 = vmul.f32 %v2415, %v2417
  %v2419 = vadd.f32 %v2415, %v2418
  %vm2420 = vweird.f32 %v2414
  %vm2421 = vweird.f32 %v2415
  %vm2422 = vmor %vm2420, %vm2421
  %v2423 = vsel %vm2422, %v2415, %v2419
  %v2424 = vand.u32 2147483647, %v2414
  %vm2425 = vcmp.eq.f32.partialorder %v2424, 8.507059e+37
  %v2426 = vand.u32 %v2414, 2147483648
  %v2427 = vor.u32 1.1754944e-38, %v2426
  %v2428 = vsel %vm2425, %v2427, %v2423
  %v2429 = vmul.f32 1.0, %v2428
  %v2430 = vtanh.pop %v2410
  %v2431 = vmul.f32 %v2429, %v1996
  %2433 = vrot.lane.b32.xlu0 %v2430, 64
  %v2434 = vpop.permute.xlu0 %2433
  %v2436 = vmul.f32 %v2429, %v2434
  %2438 = vrot.lane.b32.xlu0 %v2436, 32
  %v2439 = vpop.permute.xlu0 %2438
  %v2441 = vadd.f32 %v2431, %v2439
  %v2442 = vtanh.pop %v2441
  %2444 = vrot.lane.b32.xlu0 %v2442, 64
  %v2445 = vpop.permute.xlu0 %2444
  %v2447 = vmul.f32 %v2429, %v2445
  %v2448 = vld [vmem:[%s1 + $0x70] sm:$0xff]
  %v2449 = vld [vmem:[%s1 + $0x78] sm:$0xff]
  %v2450 = vld [vmem:[%s1 + $0x80] sm:$0xff]
  %v2451 = vld [vmem:[%s1 + $0x88] sm:$0xff]
  %v2452 = vld [vmem:[%s1 + $0x90] sm:$0xff]
  %2453 = vmatpush.msra.mxu0 0.0
  %2454 = vmatpush.msra.mxu0 0.0
  %2455 = vmatpush.msra.mxu0 0.0
  %2456 = vmatpush.msra.mxu0 0.0
  %2457 = vmatpush.msra.mxu0 0.0
  %2458 = vmatpush.msra.mxu0 0.0
  %2459 = vmatpush.msra.mxu0 0.0
  %2460 = vmatpush.msra.mxu0 0.0
  %2461 = vmatpush.msra.mxu0 0.0
  %2462 = vmatpush.msra.mxu0 0.0
  %2463 = vmatpush.msra.mxu0 0.0
  %2464 = vmatpush.msra.mxu0 0.0
  %2465 = vmatpush.msra.mxu0 0.0
  %2466 = vmatpush.msra.mxu0 0.0
  %2467 = vmatpush.msra.mxu0 0.0
  %2468 = vmatpush.msra.mxu0 %v2452
  %2469 = vmatmul.f32.gmra.mxu0 %v2335
  %v2470 = vpop.f32.mrf.mxu0
  %v2471 = vadd.f32 0.0, %v2470
  %2472 = vdwg.mxu0
  %2474 = vrot.lane.b32.xlu0 %v2447, 32
  %v2475 = vpop.permute.xlu0 %2474
  %v2476 = vsel %vm137, %v2475, 0
  %2478 = vmatpush.msra.mxu0 0.0
  %2479 = vmatpush.msra.mxu0 0.0
  %2480 = vmatpush.msra.mxu0 0.0
  %2481 = vmatpush.msra.mxu0 0.0
  %2482 = vmatpush.msra.mxu0 0.0
  %2483 = vmatpush.msra.mxu0 0.0
  %2484 = vmatpush.msra.mxu0 0.0
  %2485 = vmatpush.msra.mxu0 0.0
  %2486 = vmatpush.msra.mxu0 0.0
  %2487 = vmatpush.msra.mxu0 0.0
  %2488 = vmatpush.msra.mxu0 0.0
  %2489 = vmatpush.msra.mxu0 0.0
  %2490 = vmatpush.msra.mxu0 %v2451
  %2491 = vmatpush.msra.mxu0 %v2450
  %2492 = vmatpush.msra.mxu0 %v2449
  %2493 = vmatpush.msra.mxu0 %v2448
  %2494 = vmatmul.f32.gmra.mxu0 %v2476
  %v2495 = vpop.f32.mrf.mxu0
  %v2496 = vadd.f32 %v2471, %v2495
  %2497 = vdwg.mxu0
  %v2498 = vld [vmem:[%s1 + $0x98] sm:$0xff]
  %v2500 = vsel %vm14, %v2161, 0
  %2502 = vmatpush.msra.mxu0 0.0
  %2503 = vmatpush.msra.mxu0 0.0
  %2504 = vmatpush.msra.mxu0 0.0
  %2505 = vmatpush.msra.mxu0 0.0
  %2506 = vmatpush.msra.mxu0 0.0
  %2507 = vmatpush.msra.mxu0 0.0
  %2508 = vmatpush.msra.mxu0 0.0
  %2509 = vmatpush.msra.mxu0 0.0
  %2510 = vmatpush.msra.mxu0 0.0
  %2511 = vmatpush.msra.mxu0 0.0
  %2512 = vmatpush.msra.mxu0 0.0
  %2513 = vmatpush.msra.mxu0 0.0
  %2514 = vmatpush.msra.mxu0 0.0
  %2515 = vmatpush.msra.mxu0 0.0
  %2516 = vmatpush.msra.mxu0 0.0
  %2517 = vmatpush.msra.mxu0 %v2498
  %2518 = vmatmul.f32.gmra.mxu0 %v2500
  %v2519 = vpop.f32.mrf.mxu0
  %v2520 = vadd.f32 0.0, %v2519
  %2521 = vdwg.mxu0
  %v2522 = vadd.f32 %v2496, %v2520
  %v2523 = vld [vmem:[%s0 + $0x38] sm:$0x3]
  %v2524 = vadd.f32 %v2522, %v2523
  %v2525 = vtanh.pop %v2524
  %v2526 = vld [vmem:[%s1 + $0xa0] sm:$0xff]
  %v2527 = vld [vmem:[%s1 + $0xa8] sm:$0xff]
  %v2528 = vld [vmem:[%s1 + $0xb0] sm:$0xff]
  %v2529 = vld [vmem:[%s1 + $0xb8] sm:$0xff]
  %v2530 = vld [vmem:[%s1 + $0xc0] sm:$0xff]
  %v2531 = vld [vmem:[%s1 + $0xc8] sm:$0xff]
  %v2532 = vld [vmem:[%s1 + $0xd0] sm:$0xff]
  %v2533 = vld [vmem:[%s1 + $0xd8] sm:$0xff]
  %v2534 = vld [vmem:[%s1 + $0xe0] sm:$0xff]
  %v2535 = vld [vmem:[%s1 + $0xe8] sm:$0xff]
  %v2536 = vld [vmem:[%s1 + $0xf0] sm:$0xff]
  %v2537 = vld [vmem:[%s1 + $0xf8] sm:$0xff]
  %v2538 = vld [vmem:[%s1 + $0x100] sm:$0xff]
  %v2539 = vld [vmem:[%s1 + $0x108] sm:$0xff]
  %v2540 = vld [vmem:[%s1 + $0x110] sm:$0xff]
  %v2541 = vld [vmem:[%s1 + $0x118] sm:$0xff]
  %v2542 = vld [vmem:[%s0 + $0x30] sm:$0x3]
  %2543 = vmatpush.msra.mxu0 %v2541
  %2544 = vmatpush.msra.mxu0 %v2540
  %2545 = vmatpush.msra.mxu0 %v2539
  %2546 = vmatpush.msra.mxu0 %v2538
  %2547 = vmatpush.msra.mxu0 %v2537
  %2548 = vmatpush.msra.mxu0 %v2536
  %2549 = vmatpush.msra.mxu0 %v2535
  %2550 = vmatpush.msra.mxu0 %v2534
  %2551 = vmatpush.msra.mxu0 %v2533
  %2552 = vmatpush.msra.mxu0 %v2532
  %2553 = vmatpush.msra.mxu0 %v2531
  %2554 = vmatpush.msra.mxu0 %v2530
  %2555 = vmatpush.msra.mxu0 %v2529
  %2556 = vmatpush.msra.mxu0 %v2528
  %2557 = vmatpush.msra.mxu0 %v2527
  %2558 = vmatpush.msra.mxu0 %v2526
  %2559 = vmatmul.f32.gmra.mxu0 %v2525
  %v2560 = vpop.f32.mrf.mxu0
  %v2561 = vadd.f32 %v2542, %v2560
  %2562 = vdwg.mxu0
  %v2563 = vsel %vm338, %v2561, -inf
  %2564 = vmax.xlane.f32.xlu0 %v2563
  %v2565 = vpop.xlane.xlu0 %2564
  %v2566 = vsub.f32 %v2561, %v2565
  %v2567 = vmul.f32 %v2566, 1.442695
  %v2568 = vpow.pop %v2567
  %v2569 = vsel %vm338, %v2568, 0.0
  %2570 = vadd.xlane.f32.xlu0 %v2569
  %v2571 = vpop.xlane.xlu0 %2570
  %v2572 = vrcp.pop %v2571
  %v2573 = vmul.f32 %v2568, %v2572
  %2575 = vrot.lane.b32.xlu0 %v2573, 8
  %v2576 = vpop.permute.xlu0 %2575
  %v2578 = vsel %vm14, %v2573, %v2576
  %v2579 = vld [vmem:[%s1 + $0x120] sm:$0x3]
  %v2580 = vmul.f32 %v2578, %v2579
  %v2581 = vld [vmem:[%s0 + $0x40] sm:$0xff]
  %v2582 = vld [vmem:[%s0 + $0x48] sm:$0xff]
  %v2584 = vsel %vm52, %v2580, 0
  %2586 = vmatpush.msra.mxu0 0.0
  %2587 = vmatpush.msra.mxu0 0.0
  %2588 = vmatpush.msra.mxu0 0.0
  %2589 = vmatpush.msra.mxu0 0.0
  %2590 = vmatpush.msra.mxu0 0.0
  %2591 = vmatpush.msra.mxu0 0.0
  %2592 = vmatpush.msra.mxu0 0.0
  %2593 = vmatpush.msra.mxu0 0.0
  %2594 = vmatpush.msra.mxu0 0.0
  %2595 = vmatpush.msra.mxu0 0.0
  %2596 = vmatpush.msra.mxu0 0.0
  %2597 = vmatpush.msra.mxu0 0.0
  %2598 = vmatpush.msra.mxu0 0.0
  %2599 = vmatpush.msra.mxu0 0.0
  %2600 = vmatpush.msra.mxu0 %v2582
  %2601 = vmatpush.msra.mxu0 %v2581
  %2602 = vmatmul.f32.gmra.mxu0 %v2584
  %v2603 = vpop.f32.mrf.mxu0
  %v2604 = vadd.f32 0.0, %v2603
  %2605 = vdwg.mxu0
  %v2606 = vld [vmem:[%s1 + $0x128] sm:$0xff]
  %v2607 = vld [vmem:[%s1 + $0x130] sm:$0xff]
  %v2608 = vld [vmem:[%s1 + $0x138] sm:$0xff]
  %v2609 = vld [vmem:[%s1 + $0x140] sm:$0xff]
  %v2610 = vld [vmem:[%s1 + $0x148] sm:$0xff]
  %v2611 = vld [vmem:[%s1 + $0x150] sm:$0xff]
  %v2612 = vld [vmem:[%s1 + $0x158] sm:$0xff]
  %v2613 = vld [vmem:[%s1 + $0x160] sm:$0xff]
  %v2615 = vsel %vm137, %v2604, 0
  %2617 = vmatpush.msra.mxu0 0.0
  %2618 = vmatpush.msra.mxu0 0.0
  %2619 = vmatpush.msra.mxu0 0.0
  %2620 = vmatpush.msra.mxu0 0.0
  %2621 = vmatpush.msra.mxu0 0.0
  %2622 = vmatpush.msra.mxu0 0.0
  %2623 = vmatpush.msra.mxu0 0.0
  %2624 = vmatpush.msra.mxu0 0.0
  %2625 = vmatpush.msra.mxu0 0.0
  %2626 = vmatpush.msra.mxu0 0.0
  %2627 = vmatpush.msra.mxu0 0.0
  %2628 = vmatpush.msra.mxu0 0.0
  %2629 = vmatpush.msra.mxu0 %v2613
  %2630 = vmatpush.msra.mxu0 %v2612
  %2631 = vmatpush.msra.mxu0 %v2611
  %2632 = vmatpush.msra.mxu0 %v2610
  %2633 = vmatmul.f32.gmra.mxu0 %v2615
  %v2634 = vpop.f32.mrf.mxu0
  %v2635 = vadd.f32 0.0, %v2634
  %2636 = vdwg.mxu0
  %2637 = vmatpush.msra.mxu0 0.0
  %2638 = vmatpush.msra.mxu0 0.0
  %2639 = vmatpush.msra.mxu0 0.0
  %2640 = vmatpush.msra.mxu0 0.0
  %2641 = vmatpush.msra.mxu0 0.0
  %2642 = vmatpush.msra.mxu0 0.0
  %2643 = vmatpush.msra.mxu0 0.0
  %2644 = vmatpush.msra.mxu0 0.0
  %2645 = vmatpush.msra.mxu0 0.0
  %2646 = vmatpush.msra.mxu0 0.0
  %2647 = vmatpush.msra.mxu0 0.0
  %2648 = vmatpush.msra.mxu0 0.0
  %2649 = vmatpush.msra.mxu0 %v2609
  %2650 = vmatpush.msra.mxu0 %v2608
  %2651 = vmatpush.msra.mxu0 %v2607
  %2652 = vmatpush.msra.mxu0 %v2606
  %2653 = vmatmul.f32.gmra.mxu0 %v2476
  %v2654 = vpop.f32.mrf.mxu0
  %v2655 = vadd.f32 %v2635, %v2654
  %2656 = vdwg.mxu0
  %v2657 = vld [vmem:[%s1 + $0x168] sm:$0xff]
  %v2658 = vld [vmem:[%s1 + $0x170] sm:$0xff]
  %v2659 = vld [vmem:[%s1 + $0x178] sm:$0xff]
  %v2660 = vld [vmem:[%s1 + $0x180] sm:$0xff]
  %2661 = vmatpush.msra.mxu0 0.0
  %2662 = vmatpush.msra.mxu0 0.0
  %2663 = vmatpush.msra.mxu0 0.0
  %2664 = vmatpush.msra.mxu0 0.0
  %2665 = vmatpush.msra.mxu0 0.0
  %2666 = vmatpush.msra.mxu0 0.0
  %2667 = vmatpush.msra.mxu0 0.0
  %2668 = vmatpush.msra.mxu0 0.0
  %2669 = vmatpush.msra.mxu0 0.0
  %2670 = vmatpush.msra.mxu0 0.0
  %2671 = vmatpush.msra.mxu0 0.0
  %2672 = vmatpush.msra.mxu0 0.0
  %2673 = vmatpush.msra.mxu0 %v2660
  %2674 = vmatpush.msra.mxu0 %v2659
  %2675 = vmatpush.msra.mxu0 %v2658
  %2676 = vmatpush.msra.mxu0 %v2657
  %2677 = vmatmul.f32.gmra.mxu0 %v2309
  %v2678 = vpop.f32.mrf.mxu0
  %v2679 = vadd.f32 0.0, %v2678
  %2680 = vdwg.mxu0
  %v2681 = vadd.f32 %v2655, %v2679
  %v2682 = vld [vmem:[%s1 + $0x188] sm:$0x1]
  %v2683 = vperm.slane %v2682, 0
  %v2684 = vadd.f32 %v2681, %v2683
  %v2685 = vxor.u32 %v2684, 2147483648
  %v2686 = vmul.f32 %v2685, 1.442695
  %v2687 = vpow.pop %v2686
  %v2688 = vadd.f32 %v2687, 1.0
  %v2689 = vrcp.pop %v2688
  %v2690 = vmul.f32 %v2688, %v2689
  %v2691 = vsub.f32 1.0, %v2690
  %v2692 = vmul.f32 %v2689, %v2691
  %v2693 = vadd.f32 %v2689, %v2692
  %vm2694 = vweird.f32 %v2688
  %vm2695 = vweird.f32 %v2689
  %vm2696 = vmor %vm2694, %vm2695
  %v2697 = vsel %vm2696, %v2689, %v2693
  %v2698 = vand.u32 2147483647, %v2688
  %vm2699 = vcmp.eq.f32.partialorder %v2698, 8.507059e+37
  %v2700 = vand.u32 %v2688, 2147483648
  %v2701 = vor.u32 1.1754944e-38, %v2700
  %v2702 = vsel %vm2699, %v2701, %v2697
  %v2703 = vmul.f32 1.0, %v2702
  %v2704 = vtanh.pop %v2684
  %v2705 = vmul.f32 %v2703, %v2271
  %2707 = vrot.lane.b32.xlu0 %v2704, 64
  %v2708 = vpop.permute.xlu0 %2707
  %v2710 = vmul.f32 %v2703, %v2708
  %2712 = vrot.lane.b32.xlu0 %v2710, 32
  %v2713 = vpop.permute.xlu0 %2712
  %v2715 = vadd.f32 %v2705, %v2713
  %v2716 = vtanh.pop %v2715
  %2718 = vrot.lane.b32.xlu0 %v2716, 64
  %v2719 = vpop.permute.xlu0 %2718
  %v2721 = vmul.f32 %v2703, %v2719
  %v2722 = vld [vmem:[%s1 + $0x190] sm:$0xff]
  %v2723 = vld [vmem:[%s1 + $0x198] sm:$0xff]
  %v2724 = vld [vmem:[%s1 + $0x1a0] sm:$0xff]
  %v2725 = vld [vmem:[%s1 + $0x1a8] sm:$0xff]
  %v2726 = vld [vmem:[%s1 + $0x1b0] sm:$0xff]
  %v2727 = vld [vmem:[%s1 + $0x1b8] sm:$0xff]
  %v2728 = vld [vmem:[%s1 + $0x1c0] sm:$0xff]
  %v2729 = vld [vmem:[%s1 + $0x1c8] sm:$0xff]
  %2730 = vmatpush.msra.mxu0 0.0
  %2731 = vmatpush.msra.mxu0 0.0
  %2732 = vmatpush.msra.mxu0 0.0
  %2733 = vmatpush.msra.mxu0 0.0
  %2734 = vmatpush.msra.mxu0 0.0
  %2735 = vmatpush.msra.mxu0 0.0
  %2736 = vmatpush.msra.mxu0 0.0
  %2737 = vmatpush.msra.mxu0 0.0
  %2738 = vmatpush.msra.mxu0 0.0
  %2739 = vmatpush.msra.mxu0 0.0
  %2740 = vmatpush.msra.mxu0 0.0
  %2741 = vmatpush.msra.mxu0 0.0
  %2742 = vmatpush.msra.mxu0 %v2729
  %2743 = vmatpush.msra.mxu0 %v2728
  %2744 = vmatpush.msra.mxu0 %v2727
  %2745 = vmatpush.msra.mxu0 %v2726
  %2746 = vmatmul.f32.gmra.mxu0 %v2615
  %v2747 = vpop.f32.mrf.mxu0
  %v2748 = vadd.f32 0.0, %v2747
  %2749 = vdwg.mxu0
  %2751 = vrot.lane.b32.xlu0 %v2721, 32
  %v2752 = vpop.permute.xlu0 %2751
  %v2753 = vsel %vm137, %v2752, 0
  %2755 = vmatpush.msra.mxu0 0.0
  %2756 = vmatpush.msra.mxu0 0.0
  %2757 = vmatpush.msra.mxu0 0.0
  %2758 = vmatpush.msra.mxu0 0.0
  %2759 = vmatpush.msra.mxu0 0.0
  %2760 = vmatpush.msra.mxu0 0.0
  %2761 = vmatpush.msra.mxu0 0.0
  %2762 = vmatpush.msra.mxu0 0.0
  %2763 = vmatpush.msra.mxu0 0.0
  %2764 = vmatpush.msra.mxu0 0.0
  %2765 = vmatpush.msra.mxu0 0.0
  %2766 = vmatpush.msra.mxu0 0.0
  %2767 = vmatpush.msra.mxu0 %v2725
  %2768 = vmatpush.msra.mxu0 %v2724
  %2769 = vmatpush.msra.mxu0 %v2723
  %2770 = vmatpush.msra.mxu0 %v2722
  %2771 = vmatmul.f32.gmra.mxu0 %v2753
  %v2772 = vpop.f32.mrf.mxu0
  %v2773 = vadd.f32 %v2748, %v2772
  %2774 = vdwg.mxu0
  %v2775 = vld [vmem:[%s1 + $0x1d0] sm:$0x1]
  %v2776 = vperm.slane %v2775, 0
  %v2777 = vadd.f32 %v2773, %v2776
  %v2778 = vld [vmem:[%s1 + $0x1d8] sm:$0xff]
  %v2779 = vsel %vm14, %v2573, 0
  %2781 = vmatpush.msra.mxu0 0.0
  %2782 = vmatpush.msra.mxu0 0.0
  %2783 = vmatpush.msra.mxu0 0.0
  %2784 = vmatpush.msra.mxu0 0.0
  %2785 = vmatpush.msra.mxu0 0.0
  %2786 = vmatpush.msra.mxu0 0.0
  %2787 = vmatpush.msra.mxu0 0.0
  %2788 = vmatpush.msra.mxu0 0.0
  %2789 = vmatpush.msra.mxu0 0.0
  %2790 = vmatpush.msra.mxu0 0.0
  %2791 = vmatpush.msra.mxu0 0.0
  %2792 = vmatpush.msra.mxu0 0.0
  %2793 = vmatpush.msra.mxu0 0.0
  %2794 = vmatpush.msra.mxu0 0.0
  %2795 = vmatpush.msra.mxu0 0.0
  %2796 = vmatpush.msra.mxu0 %v2778
  %2797 = vmatmul.f32.gmra.mxu0 %v2779
  %v2798 = vpop.f32.mrf.mxu0
  %v2799 = vadd.f32 0.0, %v2798
  %2800 = vdwg.mxu0
  %v2801 = vadd.f32 %v2777, %v2799
  %s2802 = scalar_lea.vmem %s2, 10
  %2803 = vst [vmem:[%s2802] sm:$0x3] %v2801
  // Predicated region
  $region10: #{run_decoder.3} parent=0 // pred_check
    _
  $region11: #{run_decoder.3} parent=0 // pred_check_branch
    %2805 = sbr.rel (0) target = $region13
  $region12: #{run_decoder.3} parent=0 // pred_region
    _
  $region13: #{run_decoder.3} parent=0 // pred_fallthru
    _
  // Predicated region
  $region14: #{run_decoder.3} parent=0 // pred_check
    _
  $region15: #{run_decoder.3} parent=0 // pred_check_branch
    %2807 = sbr.rel (0) target = $region17
  $region16: #{run_decoder.3} parent=0 // pred_region
    _
  $region17: #{run_decoder.3} parent=0 // pred_fallthru
    _

</llo_original>
